<compile_context>
chip_gen: v6e
topology: v6e:2x2x1
jax: 0.10.0
libtpu: 0.0.40
codegen_flags: <defaults>
</compile_context>

<pallas_src>
import functools

import jax
import jax.numpy as jnp
from jax.experimental import pallas as pl
from jax.experimental.pallas import tpu as pltpu


def _layernorm(h, g, b, eps=1e-5):
    mu = jnp.mean(h, axis=-1, keepdims=True)
    var = jnp.mean(jnp.square(h - mu), axis=-1, keepdims=True)
    return (h - mu) * jax.lax.rsqrt(var + eps) * g + b


# -----------------------------------------------------------------------------
# Fused transformer + to_pixel kernel, grid = (batch_blocks, depth)
# -----------------------------------------------------------------------------
def decoder_kernel(x_ref, ln1g_ref, ln1b_ref, wqkv_ref, wout_ref, bout_ref,
                   ln2g_ref, ln2b_ref, w1_ref, b1_ref, w2_ref, b2_ref,
                   lnfg_ref, lnfb_ref, wpix_ref, bpix_ref,
                   o_ref, h_ref, *, bt, n_tok, heads, dim_head):
    l = pl.program_id(1)
    num_layers = pl.num_programs(1)
    rows, dim = h_ref.shape
    inner = heads * dim_head
    pd_pad = wpix_ref.shape[1]

    # Load the input block into the VMEM residual-stream scratch once per
    # batch block (first step of the depth loop).
    @pl.when(l == 0)
    def _():
        h_ref[...] = x_ref[...].reshape(rows, dim).astype(jnp.float32)

    h = h_ref[...]                                        # (rows, dim) f32

    # ---- PreNorm + multi-head self-attention + residual ---------------------
    hn = _layernorm(h, ln1g_ref[0], ln1b_ref[0])
    # One fused, lane-dense QKV projection: (rows, dim) @ (dim, 3*inner).
    # The softmax scale is already folded into the q columns of wqkv.
    qkv = jnp.dot(hn.astype(jnp.bfloat16), wqkv_ref[0],
                  preferred_element_type=jnp.float32)     # (rows, 3*inner)
    qkv = qkv.reshape(bt, n_tok, 3 * inner)

    head_outs = []
    for hh in range(heads):                               # static unroll (heads=4)
        q_h = qkv[:, :, hh * dim_head:(hh + 1) * dim_head]
        k_h = qkv[:, :, inner + hh * dim_head:inner + (hh + 1) * dim_head]
        v_h = qkv[:, :, 2 * inner + hh * dim_head:2 * inner + (hh + 1) * dim_head]
        s = jnp.einsum('bid,bjd->bij',
                       q_h.astype(jnp.bfloat16), k_h.astype(jnp.bfloat16),
                       preferred_element_type=jnp.float32)    # (bt, n, n)
        s = s - jnp.max(s, axis=-1, keepdims=True)            # stable softmax
        p = jnp.exp(s)
        p = p * pl.reciprocal(jnp.sum(p, axis=-1, keepdims=True), approx=True)
        o_h = jnp.einsum('bij,bjd->bid',
                         p.astype(jnp.bfloat16), v_h.astype(jnp.bfloat16),
                         preferred_element_type=jnp.float32)  # (bt, n, dh)
        head_outs.append(o_h)

    attn_cat = jnp.concatenate(head_outs, axis=-1)        # (bt, n, inner)
    attn_cat = attn_cat.reshape(rows, inner)
    # One fused output projection: contraction K = inner = heads*dim_head.
    attn_out = jnp.dot(attn_cat.astype(jnp.bfloat16), wout_ref[0],
                       preferred_element_type=jnp.float32) + bout_ref[0]
    h = h + attn_out

    # ---- PreNorm + tanh MLP + residual ---------------------------------------
    hn2 = _layernorm(h, ln2g_ref[0], ln2b_ref[0])
    f = jnp.dot(hn2.astype(jnp.bfloat16), w1_ref[0],
                preferred_element_type=jnp.float32) + b1_ref[0]
    f = jnp.tanh(f)
    f = jnp.dot(f.astype(jnp.bfloat16), w2_ref[0],
                preferred_element_type=jnp.float32) + b2_ref[0]
    h = h + f
    h_ref[...] = h

    # ---- final LayerNorm + fused to_pixel projection + output store ----------
    @pl.when(l == num_layers - 1)
    def _():
        hf = _layernorm(h, lnfg_ref[...], lnfb_ref[...])
        pix = jnp.dot(hf.astype(jnp.bfloat16), wpix_ref[...],
                      preferred_element_type=jnp.float32) + bpix_ref[...]
        o_ref[...] = pix.reshape(bt, n_tok, pd_pad).astype(o_ref.dtype)


def prepare_params(params, *, heads, dim_head, pd_pad):
    """Host-side one-time weight prep: fold softmax scale into the q columns
    of wqkv and cast/pad the to_pixel weights to a 128-lane-dense output."""
    inner = heads * dim_head
    scale = dim_head ** (-0.5)
    kp = dict(params)
    wqkv = params["wqkv"].astype(jnp.float32)
    wqkv = wqkv.at[:, :, :inner].multiply(scale)
    kp["wqkv"] = wqkv.astype(jnp.bfloat16)
    dim, pd = params["w_pix"].shape
    wpix = jnp.zeros((dim, pd_pad), jnp.bfloat16)
    kp["w_pix"] = wpix.at[:, :pd].set(params["w_pix"].astype(jnp.bfloat16))
    bpix = jnp.zeros((1, pd_pad), jnp.float32)
    kp["b_pix"] = bpix.at[:, :pd].set(params["b_pix"].astype(jnp.float32))
    return kp


def vit_decoder_forward(token, params, *, heads, dim_head, image_size,
                        patch_size, channels, block_batch=None):
    B, N, D = token.shape
    P = patch_size
    pd = channels * P * P
    pd_pad = pl.cdiv(pd, 128) * 128                       # lane-dense output
    depth = params["ln1g"].shape[0]
    bt = B if block_batch is None else block_batch
    assert B % bt == 0, "batch must be divisible by the batch block"

    kp = prepare_params(params, heads=heads, dim_head=dim_head, pd_pad=pd_pad)

    layer_names = ("ln1g", "ln1b", "wqkv", "wout", "bout", "ln2g", "ln2b",
                   "w1", "b1", "w2", "b2")
    layer_ws = [kp[k] for k in layer_names]
    shared_ws = [kp[k] for k in ("lnfg", "lnfb", "w_pix", "b_pix")]

    def layer_spec(a):                 # one layer's slice per depth step
        nd = a.ndim
        return pl.BlockSpec((1,) + a.shape[1:],
                            lambda b, l, _nd=nd: (l,) + (0,) * (_nd - 1))

    def shared_spec(a):                # params with no depth dim
        nd = a.ndim
        return pl.BlockSpec(a.shape, lambda b, l, _nd=nd: (0,) * _nd)

    in_specs = ([pl.BlockSpec((bt, N, D), lambda b, l: (b, 0, 0))]
                + [layer_spec(a) for a in layer_ws]
                + [shared_spec(a) for a in shared_ws])

    kernel = functools.partial(decoder_kernel, bt=bt, n_tok=N,
                               heads=heads, dim_head=dim_head)

    # TODO(synk): at ViT-scale dims (dim>=768, mlp_dim>=3072) pre-budget the
    # double-buffered layer weights against v7x's 64 MiB VMEM and raise
    # vmem_limit_bytes / tile mlp_dim; irrelevant at these demo sizes.
    pix = pl.pallas_call(
        kernel,
        out_shape=jax.ShapeDtypeStruct((B, N, pd_pad), jnp.float32),
        grid=(B // bt, depth),
        in_specs=in_specs,
        out_specs=pl.BlockSpec((bt, N, pd_pad), lambda b, l: (b, 0, 0)),
        scratch_shapes=[pltpu.VMEM((bt * N, D), jnp.float32)],
        compiler_params=pltpu.CompilerParams(
            dimension_semantics=("parallel", "arbitrary")),
    )(token, *layer_ws, *shared_ws)

    # ConvTranspose2d(kernel=stride=patch) layout plumbing (host-side).
    pix = pix[:, :, :pd]
    Hp = Wp = image_size // patch_size
    img = pix.reshape(B, Hp, Wp, channels, P, P).transpose(0, 3, 1, 4, 2, 5)
    return img.reshape(B, channels, Hp * P, Wp * P)


# -----------------------------------------------------------------------------
# Pure-JAX f32 reference (mirrors the PyTorch module)
# -----------------------------------------------------------------------------
def vit_decoder_reference(token, params, *, heads, dim_head, image_size,
                          patch_size, channels):
    depth = params["ln1g"].shape[0]
    inner = heads * dim_head
    scale = dim_head ** (-0.5)
    h = token.astype(jnp.float32)
    B, N, D = h.shape
    for l in range(depth):
        hn = _layernorm(h, params["ln1g"][l], params["ln1b"][l])
        qkv = hn @ params["wqkv"][l].astype(jnp.float32)
        q, k, v = jnp.split(qkv, 3, axis=-1)
        q = q.reshape(B, N, heads, dim_head).transpose(0, 2, 1, 3)
        k = k.reshape(B, N, heads, dim_head).transpose(0, 2, 1, 3)
        v = v.reshape(B, N, heads, dim_head).transpose(0, 2, 1, 3)
        attn = jax.nn.softmax(jnp.einsum("bhnd,bhmd->bhnm", q, k) * scale, axis=-1)
        out = jnp.einsum("bhnm,bhmd->bhnd", attn, v)
        out = out.transpose(0, 2, 1, 3).reshape(B, N, inner)
        h = h + (out @ params["wout"][l].astype(jnp.float32) + params["bout"][l])
        hn2 = _layernorm(h, params["ln2g"][l], params["ln2b"][l])
        f = jnp.tanh(hn2 @ params["w1"][l].astype(jnp.float32) + params["b1"][l])
        f = f @ params["w2"][l].astype(jnp.float32) + params["b2"][l]
        h = h + f
    h = _layernorm(h, params["lnfg"], params["lnfb"])
    pix = h @ params["w_pix"].astype(jnp.float32) + params["b_pix"]
    P = patch_size
    Hp = Wp = image_size // patch_size
    img = pix.reshape(B, Hp, Wp, channels, P, P).transpose(0, 3, 1, 4, 2, 5)
    return img.reshape(B, channels, Hp * P, Wp * P)


def init_params(key, *, dim, depth, heads, dim_head, mlp_dim, channels, patch_size):
    inner = heads * dim_head
    pd = channels * patch_size * patch_size
    ks = jax.random.split(key, 8)
    w = 0.05
    # Matmul weights stored in bf16 (MXU operands); LayerNorm params and biases
    # stay in f32 so all VPU element-wise math is f32 (v5e-friendly).
    return {
        "ln1g": jnp.ones((depth, 1, dim), jnp.float32),
        "ln1b": jnp.zeros((depth, 1, dim), jnp.float32),
        "wqkv": (w * jax.random.normal(ks[0], (depth, dim, 3 * inner))).astype(jnp.bfloat16),
        "wout": (w * jax.random.normal(ks[1], (depth, inner, dim))).astype(jnp.bfloat16),
        "bout": 0.01 * jax.random.normal(ks[2], (depth, 1, dim)),
        "ln2g": jnp.ones((depth, 1, dim), jnp.float32),
        "ln2b": jnp.zeros((depth, 1, dim), jnp.float32),
        "w1": (w * jax.random.normal(ks[3], (depth, dim, mlp_dim))).astype(jnp.bfloat16),
        "b1": 0.01 * jax.random.normal(ks[4], (depth, 1, mlp_dim)),
        "w2": (w * jax.random.normal(ks[5], (depth, mlp_dim, dim))).astype(jnp.bfloat16),
        "b2": jnp.zeros((depth, 1, dim), jnp.float32),
        "lnfg": jnp.ones((1, dim), jnp.float32),
        "lnfb": jnp.zeros((1, dim), jnp.float32),
        # flattened ConvTranspose2d(dim, channels, kernel=stride=patch) weights
        "w_pix": (w * jax.random.normal(ks[6], (dim, pd))).astype(jnp.bfloat16),
        "b_pix": (0.01 * jax.random.normal(ks[7], (1, pd))).astype(jnp.float32),
    }


if __name__ == "__main__":
    # Small shapes consistent with ViTDecoder(image_size, patch_size, dim, depth,
    # heads, mlp_dim, channels, dim_head); dims chosen lane-friendly (128-wide).
    image_size, patch_size, channels = 16, 4, 3
    dim, depth, heads, dim_head, mlp_dim = 128, 2, 4, 32, 256
    B = 2
    num_patches = (image_size // patch_size) ** 2          # 16 tokens

    key = jax.random.PRNGKey(0)
    kx, kp = jax.random.split(key)
    token = jax.random.normal(kx, (B, num_patches, dim), jnp.float32)
    params = init_params(kp, dim=dim, depth=depth, heads=heads, dim_head=dim_head,
                         mlp_dim=mlp_dim, channels=channels, patch_size=patch_size)

    out = vit_decoder_forward(token, params, heads=heads, dim_head=dim_head,
                              image_size=image_size, patch_size=patch_size,
                              channels=channels)
    out = jax.block_until_ready(out)

    ref = vit_decoder_reference(token, params, heads=heads, dim_head=dim_head,
                                image_size=image_size, patch_size=patch_size,
                                channels=channels)
    assert out.shape == (B, channels, image_size, image_size)
    # bf16 matmul operands + approx softmax reciprocal vs f32 reference.
    max_err = float(jnp.max(jnp.abs(out - ref)))
    assert max_err < 5e-2, f"mismatch vs pure-JAX reference, max abs err {max_err}"

    print("KERNEL_OK")
</pallas_src>

<mosaic_0001>
module attributes {stable_mosaic.version = 11 : i64} {
  func.func @decoder_kernel(%arg0: i32, %arg1: i32, %arg2: memref<2x16x128xf32, #tpu.memory_space<vmem>>, %arg3: memref<1x1x128xf32, #tpu.memory_space<vmem>>, %arg4: memref<1x1x128xf32, #tpu.memory_space<vmem>>, %arg5: memref<1x128x384xbf16, #tpu.memory_space<vmem>>, %arg6: memref<1x128x128xbf16, #tpu.memory_space<vmem>>, %arg7: memref<1x1x128xf32, #tpu.memory_space<vmem>>, %arg8: memref<1x1x128xf32, #tpu.memory_space<vmem>>, %arg9: memref<1x1x128xf32, #tpu.memory_space<vmem>>, %arg10: memref<1x128x256xbf16, #tpu.memory_space<vmem>>, %arg11: memref<1x1x256xf32, #tpu.memory_space<vmem>>, %arg12: memref<1x256x128xbf16, #tpu.memory_space<vmem>>, %arg13: memref<1x1x128xf32, #tpu.memory_space<vmem>>, %arg14: memref<1x128xf32, #tpu.memory_space<vmem>>, %arg15: memref<1x128xf32, #tpu.memory_space<vmem>>, %arg16: memref<128x128xbf16, #tpu.memory_space<vmem>>, %arg17: memref<1x128xf32, #tpu.memory_space<vmem>>, %arg18: memref<2x16x128xf32, #tpu.memory_space<vmem>>, %arg19: memref<32x128xf32, #tpu.memory_space<vmem>>) attributes {dimension_semantics = [#tpu.dimension_semantics<parallel>, #tpu.dimension_semantics<arbitrary>], iteration_bounds = array<i64: 1, 2>, scalar_prefetch = 0 : i64, scratch_operands = 1 : i64, tpu.core_type = #tpu.core_type<tc>, window_params = [{transform_indices = @transform_0, window_bounds = array<i64: 2, 16, 128>}, {transform_indices = @transform_1, window_bounds = array<i64: 1, 1, 128>}, {transform_indices = @transform_2, window_bounds = array<i64: 1, 1, 128>}, {transform_indices = @transform_3, window_bounds = array<i64: 1, 128, 384>}, {transform_indices = @transform_4, window_bounds = array<i64: 1, 128, 128>}, {transform_indices = @transform_5, window_bounds = array<i64: 1, 1, 128>}, {transform_indices = @transform_6, window_bounds = array<i64: 1, 1, 128>}, {transform_indices = @transform_7, window_bounds = array<i64: 1, 1, 128>}, {transform_indices = @transform_8, window_bounds = array<i64: 1, 128, 256>}, {transform_indices = @transform_9, window_bounds = array<i64: 1, 1, 256>}, {transform_indices = @transform_10, window_bounds = array<i64: 1, 256, 128>}, {transform_indices = @transform_11, window_bounds = array<i64: 1, 1, 128>}, {pipeline_mode = #tpu.pipeline_mode<synchronous>, transform_indices = @transform_12, window_bounds = array<i64: 1, 128>}, {pipeline_mode = #tpu.pipeline_mode<synchronous>, transform_indices = @transform_13, window_bounds = array<i64: 1, 128>}, {pipeline_mode = #tpu.pipeline_mode<synchronous>, transform_indices = @transform_14, window_bounds = array<i64: 128, 128>}, {pipeline_mode = #tpu.pipeline_mode<synchronous>, transform_indices = @transform_15, window_bounds = array<i64: 1, 128>}, {transform_indices = @transform_16, window_bounds = array<i64: 2, 16, 128>}]} {
    %c0_i32 = arith.constant 0 : i32
    %0 = arith.cmpi eq, %arg1, %c0_i32 : i32
    %1 = arith.extui %0 : i1 to i32
    %c0_i32_0 = arith.constant 0 : i32
    %2 = arith.cmpi ne, %1, %c0_i32_0 : i32
    scf.if %2 {
      %c0_67 = arith.constant 0 : index
      %c0_68 = arith.constant 0 : index
      %c0_69 = arith.constant 0 : index
      %170 = vector.load %arg2[%c0_67, %c0_68, %c0_69] : memref<2x16x128xf32, #tpu.memory_space<vmem>>, vector<2x16x128xf32>
      %171 = vector.shape_cast %170 : vector<2x16x128xf32> to vector<32x128xf32>
      %c0_70 = arith.constant 0 : index
      %c0_71 = arith.constant 0 : index
      %172 = vector.load %arg19[%c0_70, %c0_71] : memref<32x128xf32, #tpu.memory_space<vmem>>, vector<32x128xf32>
      tpu.vector_store %arg19[%c0_70, %c0_71], %171 {strides = array<i32>} : memref<32x128xf32, #tpu.memory_space<vmem>>, vector<32x128xf32>,
    } else {
    }
    %c0 = arith.constant 0 : index
    %c0_1 = arith.constant 0 : index
    %3 = vector.load %arg19[%c0, %c0_1] : memref<32x128xf32, #tpu.memory_space<vmem>>, vector<32x128xf32>
    %c0_2 = arith.constant 0 : index
    %c0_3 = arith.constant 0 : index
    %c0_4 = arith.constant 0 : index
    %4 = vector.load %arg3[%c0_2, %c0_3, %c0_4] : memref<1x1x128xf32, #tpu.memory_space<vmem>>, vector<1x1x128xf32>
    %5 = vector.shape_cast %4 : vector<1x1x128xf32> to vector<1x128xf32>
    %c0_5 = arith.constant 0 : index
    %c0_6 = arith.constant 0 : index
    %c0_7 = arith.constant 0 : index
    %6 = vector.load %arg4[%c0_5, %c0_6, %c0_7] : memref<1x1x128xf32, #tpu.memory_space<vmem>>, vector<1x1x128xf32>
    %7 = vector.shape_cast %6 : vector<1x1x128xf32> to vector<1x128xf32>
    %cst = arith.constant dense<0.000000e+00> : vector<32xf32>
    %8 = vector.multi_reduction <add>, %3, %cst [1] : vector<32x128xf32> to vector<32xf32>
    %9 = vector.shape_cast %8 : vector<32xf32> to vector<32x1xf32>
    %cst_8 = arith.constant 1.280000e+02 : f32
    %10 = vector.broadcast %cst_8 : f32 to vector<32x1xf32>
    %11 = arith.divf %9, %10 : vector<32x1xf32>
    %12 = vector.broadcast %11 : vector<32x1xf32> to vector<32x128xf32>
    %13 = arith.subf %3, %12 : vector<32x128xf32>
    %14 = arith.mulf %13, %13 : vector<32x128xf32>
    %cst_9 = arith.constant dense<0.000000e+00> : vector<32xf32>
    %15 = vector.multi_reduction <add>, %14, %cst_9 [1] : vector<32x128xf32> to vector<32xf32>
    %16 = vector.shape_cast %15 : vector<32xf32> to vector<32x1xf32>
    %cst_10 = arith.constant 1.280000e+02 : f32
    %17 = vector.broadcast %cst_10 : f32 to vector<32x1xf32>
    %18 = arith.divf %16, %17 : vector<32x1xf32>
    %19 = vector.broadcast %11 : vector<32x1xf32> to vector<32x128xf32>
    %20 = arith.subf %3, %19 : vector<32x128xf32>
    %cst_11 = arith.constant 9.99999974E-6 : f32
    %21 = vector.broadcast %cst_11 : f32 to vector<32x1xf32>
    %22 = arith.addf %18, %21 : vector<32x1xf32>
    %23 = math.rsqrt %22 : vector<32x1xf32>
    %24 = vector.broadcast %23 : vector<32x1xf32> to vector<32x128xf32>
    %25 = arith.mulf %20, %24 : vector<32x128xf32>
    %26 = vector.broadcast %5 : vector<1x128xf32> to vector<32x128xf32>
    %27 = arith.mulf %25, %26 : vector<32x128xf32>
    %28 = vector.broadcast %7 : vector<1x128xf32> to vector<32x128xf32>
    %29 = arith.addf %27, %28 : vector<32x128xf32>
    %30 = arith.truncf %29 : vector<32x128xf32> to vector<32x128xbf16>
    %c0_12 = arith.constant 0 : index
    %c0_13 = arith.constant 0 : index
    %c0_14 = arith.constant 0 : index
    %31 = vector.load %arg5[%c0_12, %c0_13, %c0_14] : memref<1x128x384xbf16, #tpu.memory_space<vmem>>, vector<1x128x384xbf16>
    %32 = vector.shape_cast %31 : vector<1x128x384xbf16> to vector<128x384xbf16>
    %cst_15 = arith.constant dense<0.000000e+00> : vector<32x384xf32>
    %33 = tpu.matmul %30, %32, %cst_15 {dimension_numbers = #tpu.dot_dimension_numbers<[1], [0], [0], [1], [0, 0, 1, 1], [], []>} : vector<32x128xbf16>, vector<128x384xbf16>, vector<32x384xf32> -> vector<32x384xf32>
    %34 = vector.shape_cast %33 : vector<32x384xf32> to vector<2x16x384xf32>
    %35 = vector.extract_strided_slice %34 {offsets = [0, 0, 0], sizes = [2, 16, 32], strides = [1, 1, 1]} : vector<2x16x384xf32> to vector<2x16x32xf32>
    %36 = vector.extract_strided_slice %34 {offsets = [0, 0, 128], sizes = [2, 16, 32], strides = [1, 1, 1]} : vector<2x16x384xf32> to vector<2x16x32xf32>
    %37 = vector.extract_strided_slice %34 {offsets = [0, 0, 256], sizes = [2, 16, 32], strides = [1, 1, 1]} : vector<2x16x384xf32> to vector<2x16x32xf32>
    %38 = arith.truncf %35 : vector<2x16x32xf32> to vector<2x16x32xbf16>
    %39 = arith.truncf %36 : vector<2x16x32xf32> to vector<2x16x32xbf16>
    "tpu.trace_start"() <{level = 10 : i32, message = "bid,bjd->bij"}> : () -> ()
    %cst_16 = arith.constant dense<0.000000e+00> : vector<2x16x16xf32>
    %40 = tpu.matmul %38, %39, %cst_16 {dimension_numbers = #tpu.dot_dimension_numbers<[2], [2], [1], [1], [0, 0, 0, 1, 1, 1], [0], [0]>} : vector<2x16x32xbf16>, vector<2x16x32xbf16>, vector<2x16x16xf32> -> vector<2x16x16xf32>
    "tpu.trace_stop"() : () -> ()
    %cst_17 = arith.constant dense<0xFF800000> : vector<2x16xf32>
    %41 = vector.multi_reduction <maximumf>, %40, %cst_17 [2] : vector<2x16x16xf32> to vector<2x16xf32>
    %42 = vector.shape_cast %41 : vector<2x16xf32> to vector<2x16x1xf32>
    %43 = vector.broadcast %42 : vector<2x16x1xf32> to vector<2x16x16xf32>
    %44 = arith.subf %40, %43 : vector<2x16x16xf32>
    %45 = math.exp %44 : vector<2x16x16xf32>
    %cst_18 = arith.constant dense<0.000000e+00> : vector<2x16xf32>
    %46 = vector.multi_reduction <add>, %45, %cst_18 [2] : vector<2x16x16xf32> to vector<2x16xf32>
    %47 = vector.shape_cast %46 : vector<2x16xf32> to vector<2x16x1xf32>
    %48 = tpu.reciprocal %47 {approx = true} : vector<2x16x1xf32> -> vector<2x16x1xf32>
    %49 = vector.broadcast %48 : vector<2x16x1xf32> to vector<2x16x16xf32>
    %50 = arith.mulf %45, %49 : vector<2x16x16xf32>
    %51 = arith.truncf %50 : vector<2x16x16xf32> to vector<2x16x16xbf16>
    %52 = arith.truncf %37 : vector<2x16x32xf32> to vector<2x16x32xbf16>
    "tpu.trace_start"() <{level = 10 : i32, message = "bij,bjd->bid"}> : () -> ()
    %cst_19 = arith.constant dense<0.000000e+00> : vector<2x16x32xf32>
    %53 = tpu.matmul %51, %52, %cst_19 {dimension_numbers = #tpu.dot_dimension_numbers<[2], [1], [1], [2], [0, 0, 0, 1, 1, 2], [0], [0]>} : vector<2x16x16xbf16>, vector<2x16x32xbf16>, vector<2x16x32xf32> -> vector<2x16x32xf32>
    "tpu.trace_stop"() : () -> ()
    %54 = vector.extract_strided_slice %34 {offsets = [0, 0, 32], sizes = [2, 16, 32], strides = [1, 1, 1]} : vector<2x16x384xf32> to vector<2x16x32xf32>
    %55 = vector.extract_strided_slice %34 {offsets = [0, 0, 160], sizes = [2, 16, 32], strides = [1, 1, 1]} : vector<2x16x384xf32> to vector<2x16x32xf32>
    %56 = vector.extract_strided_slice %34 {offsets = [0, 0, 288], sizes = [2, 16, 32], strides = [1, 1, 1]} : vector<2x16x384xf32> to vector<2x16x32xf32>
    %57 = arith.truncf %54 : vector<2x16x32xf32> to vector<2x16x32xbf16>
    %58 = arith.truncf %55 : vector<2x16x32xf32> to vector<2x16x32xbf16>
    "tpu.trace_start"() <{level = 10 : i32, message = "bid,bjd->bij"}> : () -> ()
    %cst_20 = arith.constant dense<0.000000e+00> : vector<2x16x16xf32>
    %59 = tpu.matmul %57, %58, %cst_20 {dimension_numbers = #tpu.dot_dimension_numbers<[2], [2], [1], [1], [0, 0, 0, 1, 1, 1], [0], [0]>} : vector<2x16x32xbf16>, vector<2x16x32xbf16>, vector<2x16x16xf32> -> vector<2x16x16xf32>
    "tpu.trace_stop"() : () -> ()
    %cst_21 = arith.constant dense<0xFF800000> : vector<2x16xf32>
    %60 = vector.multi_reduction <maximumf>, %59, %cst_21 [2] : vector<2x16x16xf32> to vector<2x16xf32>
    %61 = vector.shape_cast %60 : vector<2x16xf32> to vector<2x16x1xf32>
    %62 = vector.broadcast %61 : vector<2x16x1xf32> to vector<2x16x16xf32>
    %63 = arith.subf %59, %62 : vector<2x16x16xf32>
    %64 = math.exp %63 : vector<2x16x16xf32>
    %cst_22 = arith.constant dense<0.000000e+00> : vector<2x16xf32>
    %65 = vector.multi_reduction <add>, %64, %cst_22 [2] : vector<2x16x16xf32> to vector<2x16xf32>
    %66 = vector.shape_cast %65 : vector<2x16xf32> to vector<2x16x1xf32>
    %67 = tpu.reciprocal %66 {approx = true} : vector<2x16x1xf32> -> vector<2x16x1xf32>
    %68 = vector.broadcast %67 : vector<2x16x1xf32> to vector<2x16x16xf32>
    %69 = arith.mulf %64, %68 : vector<2x16x16xf32>
    %70 = arith.truncf %69 : vector<2x16x16xf32> to vector<2x16x16xbf16>
    %71 = arith.truncf %56 : vector<2x16x32xf32> to vector<2x16x32xbf16>
    "tpu.trace_start"() <{level = 10 : i32, message = "bij,bjd->bid"}> : () -> ()
    %cst_23 = arith.constant dense<0.000000e+00> : vector<2x16x32xf32>
    %72 = tpu.matmul %70, %71, %cst_23 {dimension_numbers = #tpu.dot_dimension_numbers<[2], [1], [1], [2], [0, 0, 0, 1, 1, 2], [0], [0]>} : vector<2x16x16xbf16>, vector<2x16x32xbf16>, vector<2x16x32xf32> -> vector<2x16x32xf32>
    "tpu.trace_stop"() : () -> ()
    %73 = vector.extract_strided_slice %34 {offsets = [0, 0, 64], sizes = [2, 16, 32], strides = [1, 1, 1]} : vector<2x16x384xf32> to vector<2x16x32xf32>
    %74 = vector.extract_strided_slice %34 {offsets = [0, 0, 192], sizes = [2, 16, 32], strides = [1, 1, 1]} : vector<2x16x384xf32> to vector<2x16x32xf32>
    %75 = vector.extract_strided_slice %34 {offsets = [0, 0, 320], sizes = [2, 16, 32], strides = [1, 1, 1]} : vector<2x16x384xf32> to vector<2x16x32xf32>
    %76 = arith.truncf %73 : vector<2x16x32xf32> to vector<2x16x32xbf16>
    %77 = arith.truncf %74 : vector<2x16x32xf32> to vector<2x16x32xbf16>
    "tpu.trace_start"() <{level = 10 : i32, message = "bid,bjd->bij"}> : () -> ()
    %cst_24 = arith.constant dense<0.000000e+00> : vector<2x16x16xf32>
    %78 = tpu.matmul %76, %77, %cst_24 {dimension_numbers = #tpu.dot_dimension_numbers<[2], [2], [1], [1], [0, 0, 0, 1, 1, 1], [0], [0]>} : vector<2x16x32xbf16>, vector<2x16x32xbf16>, vector<2x16x16xf32> -> vector<2x16x16xf32>
    "tpu.trace_stop"() : () -> ()
    %cst_25 = arith.constant dense<0xFF800000> : vector<2x16xf32>
    %79 = vector.multi_reduction <maximumf>, %78, %cst_25 [2] : vector<2x16x16xf32> to vector<2x16xf32>
    %80 = vector.shape_cast %79 : vector<2x16xf32> to vector<2x16x1xf32>
    %81 = vector.broadcast %80 : vector<2x16x1xf32> to vector<2x16x16xf32>
    %82 = arith.subf %78, %81 : vector<2x16x16xf32>
    %83 = math.exp %82 : vector<2x16x16xf32>
    %cst_26 = arith.constant dense<0.000000e+00> : vector<2x16xf32>
    %84 = vector.multi_reduction <add>, %83, %cst_26 [2] : vector<2x16x16xf32> to vector<2x16xf32>
    %85 = vector.shape_cast %84 : vector<2x16xf32> to vector<2x16x1xf32>
    %86 = tpu.reciprocal %85 {approx = true} : vector<2x16x1xf32> -> vector<2x16x1xf32>
    %87 = vector.broadcast %86 : vector<2x16x1xf32> to vector<2x16x16xf32>
    %88 = arith.mulf %83, %87 : vector<2x16x16xf32>
    %89 = arith.truncf %88 : vector<2x16x16xf32> to vector<2x16x16xbf16>
    %90 = arith.truncf %75 : vector<2x16x32xf32> to vector<2x16x32xbf16>
    "tpu.trace_start"() <{level = 10 : i32, message = "bij,bjd->bid"}> : () -> ()
    %cst_27 = arith.constant dense<0.000000e+00> : vector<2x16x32xf32>
    %91 = tpu.matmul %89, %90, %cst_27 {dimension_numbers = #tpu.dot_dimension_numbers<[2], [1], [1], [2], [0, 0, 0, 1, 1, 2], [0], [0]>} : vector<2x16x16xbf16>, vector<2x16x32xbf16>, vector<2x16x32xf32> -> vector<2x16x32xf32>
    "tpu.trace_stop"() : () -> ()
    %92 = vector.extract_strided_slice %34 {offsets = [0, 0, 96], sizes = [2, 16, 32], strides = [1, 1, 1]} : vector<2x16x384xf32> to vector<2x16x32xf32>
    %93 = vector.extract_strided_slice %34 {offsets = [0, 0, 224], sizes = [2, 16, 32], strides = [1, 1, 1]} : vector<2x16x384xf32> to vector<2x16x32xf32>
    %94 = vector.extract_strided_slice %34 {offsets = [0, 0, 352], sizes = [2, 16, 32], strides = [1, 1, 1]} : vector<2x16x384xf32> to vector<2x16x32xf32>
    %95 = arith.truncf %92 : vector<2x16x32xf32> to vector<2x16x32xbf16>
    %96 = arith.truncf %93 : vector<2x16x32xf32> to vector<2x16x32xbf16>
    "tpu.trace_start"() <{level = 10 : i32, message = "bid,bjd->bij"}> : () -> ()
    %cst_28 = arith.constant dense<0.000000e+00> : vector<2x16x16xf32>
    %97 = tpu.matmul %95, %96, %cst_28 {dimension_numbers = #tpu.dot_dimension_numbers<[2], [2], [1], [1], [0, 0, 0, 1, 1, 1], [0], [0]>} : vector<2x16x32xbf16>, vector<2x16x32xbf16>, vector<2x16x16xf32> -> vector<2x16x16xf32>
    "tpu.trace_stop"() : () -> ()
    %cst_29 = arith.constant dense<0xFF800000> : vector<2x16xf32>
    %98 = vector.multi_reduction <maximumf>, %97, %cst_29 [2] : vector<2x16x16xf32> to vector<2x16xf32>
    %99 = vector.shape_cast %98 : vector<2x16xf32> to vector<2x16x1xf32>
    %100 = vector.broadcast %99 : vector<2x16x1xf32> to vector<2x16x16xf32>
    %101 = arith.subf %97, %100 : vector<2x16x16xf32>
    %102 = math.exp %101 : vector<2x16x16xf32>
    %cst_30 = arith.constant dense<0.000000e+00> : vector<2x16xf32>
    %103 = vector.multi_reduction <add>, %102, %cst_30 [2] : vector<2x16x16xf32> to vector<2x16xf32>
    %104 = vector.shape_cast %103 : vector<2x16xf32> to vector<2x16x1xf32>
    %105 = tpu.reciprocal %104 {approx = true} : vector<2x16x1xf32> -> vector<2x16x1xf32>
    %106 = vector.broadcast %105 : vector<2x16x1xf32> to vector<2x16x16xf32>
    %107 = arith.mulf %102, %106 : vector<2x16x16xf32>
    %108 = arith.truncf %107 : vector<2x16x16xf32> to vector<2x16x16xbf16>
    %109 = arith.truncf %94 : vector<2x16x32xf32> to vector<2x16x32xbf16>
    "tpu.trace_start"() <{level = 10 : i32, message = "bij,bjd->bid"}> : () -> ()
    %cst_31 = arith.constant dense<0.000000e+00> : vector<2x16x32xf32>
    %110 = tpu.matmul %108, %109, %cst_31 {dimension_numbers = #tpu.dot_dimension_numbers<[2], [1], [1], [2], [0, 0, 0, 1, 1, 2], [0], [0]>} : vector<2x16x16xbf16>, vector<2x16x32xbf16>, vector<2x16x32xf32> -> vector<2x16x32xf32>
    "tpu.trace_stop"() : () -> ()
    %111 = tpu.concatenate %53, %72, %91, %110 in 2 : vector<2x16x32xf32>, vector<2x16x32xf32>, vector<2x16x32xf32>, vector<2x16x32xf32> -> vector<2x16x128xf32>
    %112 = vector.shape_cast %111 : vector<2x16x128xf32> to vector<32x128xf32>
    %113 = arith.truncf %112 : vector<32x128xf32> to vector<32x128xbf16>
    %c0_32 = arith.constant 0 : index
    %c0_33 = arith.constant 0 : index
    %c0_34 = arith.constant 0 : index
    %114 = vector.load %arg6[%c0_32, %c0_33, %c0_34] : memref<1x128x128xbf16, #tpu.memory_space<vmem>>, vector<1x128x128xbf16>
    %115 = vector.shape_cast %114 : vector<1x128x128xbf16> to vector<128x128xbf16>
    %cst_35 = arith.constant dense<0.000000e+00> : vector<32x128xf32>
    %116 = tpu.matmul %113, %115, %cst_35 {dimension_numbers = #tpu.dot_dimension_numbers<[1], [0], [0], [1], [0, 0, 1, 1], [], []>} : vector<32x128xbf16>, vector<128x128xbf16>, vector<32x128xf32> -> vector<32x128xf32>
    %c0_36 = arith.constant 0 : index
    %c0_37 = arith.constant 0 : index
    %c0_38 = arith.constant 0 : index
    %117 = vector.load %arg7[%c0_36, %c0_37, %c0_38] : memref<1x1x128xf32, #tpu.memory_space<vmem>>, vector<1x1x128xf32>
    %118 = vector.shape_cast %117 : vector<1x1x128xf32> to vector<1x128xf32>
    %119 = vector.broadcast %118 : vector<1x128xf32> to vector<32x128xf32>
    %120 = arith.addf %116, %119 : vector<32x128xf32>
    %121 = arith.addf %3, %120 : vector<32x128xf32>
    %c0_39 = arith.constant 0 : index
    %c0_40 = arith.constant 0 : index
    %c0_41 = arith.constant 0 : index
    %122 = vector.load %arg8[%c0_39, %c0_40, %c0_41] : memref<1x1x128xf32, #tpu.memory_space<vmem>>, vector<1x1x128xf32>
    %123 = vector.shape_cast %122 : vector<1x1x128xf32> to vector<1x128xf32>
    %c0_42 = arith.constant 0 : index
    %c0_43 = arith.constant 0 : index
    %c0_44 = arith.constant 0 : index
    %124 = vector.load %arg9[%c0_42, %c0_43, %c0_44] : memref<1x1x128xf32, #tpu.memory_space<vmem>>, vector<1x1x128xf32>
    %125 = vector.shape_cast %124 : vector<1x1x128xf32> to vector<1x128xf32>
    %cst_45 = arith.constant dense<0.000000e+00> : vector<32xf32>
    %126 = vector.multi_reduction <add>, %121, %cst_45 [1] : vector<32x128xf32> to vector<32xf32>
    %127 = vector.shape_cast %126 : vector<32xf32> to vector<32x1xf32>
    %cst_46 = arith.constant 1.280000e+02 : f32
    %128 = vector.broadcast %cst_46 : f32 to vector<32x1xf32>
    %129 = arith.divf %127, %128 : vector<32x1xf32>
    %130 = vector.broadcast %129 : vector<32x1xf32> to vector<32x128xf32>
    %131 = arith.subf %121, %130 : vector<32x128xf32>
    %132 = arith.mulf %131, %131 : vector<32x128xf32>
    %cst_47 = arith.constant dense<0.000000e+00> : vector<32xf32>
    %133 = vector.multi_reduction <add>, %132, %cst_47 [1] : vector<32x128xf32> to vector<32xf32>
    %134 = vector.shape_cast %133 : vector<32xf32> to vector<32x1xf32>
    %cst_48 = arith.constant 1.280000e+02 : f32
    %135 = vector.broadcast %cst_48 : f32 to vector<32x1xf32>
    %136 = arith.divf %134, %135 : vector<32x1xf32>
    %137 = vector.broadcast %129 : vector<32x1xf32> to vector<32x128xf32>
    %138 = arith.subf %121, %137 : vector<32x128xf32>
    %cst_49 = arith.constant 9.99999974E-6 : f32
    %139 = vector.broadcast %cst_49 : f32 to vector<32x1xf32>
    %140 = arith.addf %136, %139 : vector<32x1xf32>
    %141 = math.rsqrt %140 : vector<32x1xf32>
    %142 = vector.broadcast %141 : vector<32x1xf32> to vector<32x128xf32>
    %143 = arith.mulf %138, %142 : vector<32x128xf32>
    %144 = vector.broadcast %123 : vector<1x128xf32> to vector<32x128xf32>
    %145 = arith.mulf %143, %144 : vector<32x128xf32>
    %146 = vector.broadcast %125 : vector<1x128xf32> to vector<32x128xf32>
    %147 = arith.addf %145, %146 : vector<32x128xf32>
    %148 = arith.truncf %147 : vector<32x128xf32> to vector<32x128xbf16>
    %c0_50 = arith.constant 0 : index
    %c0_51 = arith.constant 0 : index
    %c0_52 = arith.constant 0 : index
    %149 = vector.load %arg10[%c0_50, %c0_51, %c0_52] : memref<1x128x256xbf16, #tpu.memory_space<vmem>>, vector<1x128x256xbf16>
    %150 = vector.shape_cast %149 : vector<1x128x256xbf16> to vector<128x256xbf16>
    %cst_53 = arith.constant dense<0.000000e+00> : vector<32x256xf32>
    %151 = tpu.matmul %148, %150, %cst_53 {dimension_numbers = #tpu.dot_dimension_numbers<[1], [0], [0], [1], [0, 0, 1, 1], [], []>} : vector<32x128xbf16>, vector<128x256xbf16>, vector<32x256xf32> -> vector<32x256xf32>
    %c0_54 = arith.constant 0 : index
    %c0_55 = arith.constant 0 : index
    %c0_56 = arith.constant 0 : index
    %152 = vector.load %arg11[%c0_54, %c0_55, %c0_56] : memref<1x1x256xf32, #tpu.memory_space<vmem>>, vector<1x1x256xf32>
    %153 = vector.shape_cast %152 : vector<1x1x256xf32> to vector<1x256xf32>
    %154 = vector.broadcast %153 : vector<1x256xf32> to vector<32x256xf32>
    %155 = arith.addf %151, %154 : vector<32x256xf32>
    %156 = math.tanh %155 : vector<32x256xf32>
    %157 = arith.truncf %156 : vector<32x256xf32> to vector<32x256xbf16>
    %c0_57 = arith.constant 0 : index
    %c0_58 = arith.constant 0 : index
    %c0_59 = arith.constant 0 : index
    %158 = vector.load %arg12[%c0_57, %c0_58, %c0_59] : memref<1x256x128xbf16, #tpu.memory_space<vmem>>, vector<1x256x128xbf16>
    %159 = vector.shape_cast %158 : vector<1x256x128xbf16> to vector<256x128xbf16>
    %cst_60 = arith.constant dense<0.000000e+00> : vector<32x128xf32>
    %160 = tpu.matmul %157, %159, %cst_60 {dimension_numbers = #tpu.dot_dimension_numbers<[1], [0], [0], [1], [0, 0, 1, 1], [], []>} : vector<32x256xbf16>, vector<256x128xbf16>, vector<32x128xf32> -> vector<32x128xf32>
    %c0_61 = arith.constant 0 : index
    %c0_62 = arith.constant 0 : index
    %c0_63 = arith.constant 0 : index
    %161 = vector.load %arg13[%c0_61, %c0_62, %c0_63] : memref<1x1x128xf32, #tpu.memory_space<vmem>>, vector<1x1x128xf32>
    %162 = vector.shape_cast %161 : vector<1x1x128xf32> to vector<1x128xf32>
    %163 = vector.broadcast %162 : vector<1x128xf32> to vector<32x128xf32>
    %164 = arith.addf %160, %163 : vector<32x128xf32>
    %165 = arith.addf %121, %164 : vector<32x128xf32>
    %c0_64 = arith.constant 0 : index
    %c0_65 = arith.constant 0 : index
    %166 = vector.load %arg19[%c0_64, %c0_65] : memref<32x128xf32, #tpu.memory_space<vmem>>, vector<32x128xf32>
    tpu.vector_store %arg19[%c0_64, %c0_65], %165 {strides = array<i32>} : memref<32x128xf32, #tpu.memory_space<vmem>>, vector<32x128xf32>,
    %c1_i32 = arith.constant 1 : i32
    %167 = arith.cmpi eq, %arg1, %c1_i32 : i32
    %168 = arith.extui %167 : i1 to i32
    %c0_i32_66 = arith.constant 0 : i32
    %169 = arith.cmpi ne, %168, %c0_i32_66 : i32
    scf.if %169 {
      %c0_67 = arith.constant 0 : index
      %c0_68 = arith.constant 0 : index
      %170 = vector.load %arg14[%c0_67, %c0_68] : memref<1x128xf32, #tpu.memory_space<vmem>>, vector<1x128xf32>
      %c0_69 = arith.constant 0 : index
      %c0_70 = arith.constant 0 : index
      %171 = vector.load %arg15[%c0_69, %c0_70] : memref<1x128xf32, #tpu.memory_space<vmem>>, vector<1x128xf32>
      %cst_71 = arith.constant dense<0.000000e+00> : vector<32xf32>
      %172 = vector.multi_reduction <add>, %165, %cst_71 [1] : vector<32x128xf32> to vector<32xf32>
      %173 = vector.shape_cast %172 : vector<32xf32> to vector<32x1xf32>
      %cst_72 = arith.constant 1.280000e+02 : f32
      %174 = vector.broadcast %cst_72 : f32 to vector<32x1xf32>
      %175 = arith.divf %173, %174 : vector<32x1xf32>
      %176 = vector.broadcast %175 : vector<32x1xf32> to vector<32x128xf32>
      %177 = arith.subf %165, %176 : vector<32x128xf32>
      %178 = arith.mulf %177, %177 : vector<32x128xf32>
      %cst_73 = arith.constant dense<0.000000e+00> : vector<32xf32>
      %179 = vector.multi_reduction <add>, %178, %cst_73 [1] : vector<32x128xf32> to vector<32xf32>
      %180 = vector.shape_cast %179 : vector<32xf32> to vector<32x1xf32>
      %cst_74 = arith.constant 1.280000e+02 : f32
      %181 = vector.broadcast %cst_74 : f32 to vector<32x1xf32>
      %182 = arith.divf %180, %181 : vector<32x1xf32>
      %183 = vector.broadcast %175 : vector<32x1xf32> to vector<32x128xf32>
      %184 = arith.subf %165, %183 : vector<32x128xf32>
      %cst_75 = arith.constant 9.99999974E-6 : f32
      %185 = vector.broadcast %cst_75 : f32 to vector<32x1xf32>
      %186 = arith.addf %182, %185 : vector<32x1xf32>
      %187 = math.rsqrt %186 : vector<32x1xf32>
      %188 = vector.broadcast %187 : vector<32x1xf32> to vector<32x128xf32>
      %189 = arith.mulf %184, %188 : vector<32x128xf32>
      %190 = vector.broadcast %170 : vector<1x128xf32> to vector<32x128xf32>
      %191 = arith.mulf %189, %190 : vector<32x128xf32>
      %192 = vector.broadcast %171 : vector<1x128xf32> to vector<32x128xf32>
      %193 = arith.addf %191, %192 : vector<32x128xf32>
      %194 = arith.truncf %193 : vector<32x128xf32> to vector<32x128xbf16>
      %c0_76 = arith.constant 0 : index
      %c0_77 = arith.constant 0 : index
      %195 = vector.load %arg16[%c0_76, %c0_77] : memref<128x128xbf16, #tpu.memory_space<vmem>>, vector<128x128xbf16>
      %cst_78 = arith.constant dense<0.000000e+00> : vector<32x128xf32>
      %196 = tpu.matmul %194, %195, %cst_78 {dimension_numbers = #tpu.dot_dimension_numbers<[1], [0], [0], [1], [0, 0, 1, 1], [], []>} : vector<32x128xbf16>, vector<128x128xbf16>, vector<32x128xf32> -> vector<32x128xf32>
      %c0_79 = arith.constant 0 : index
      %c0_80 = arith.constant 0 : index
      %197 = vector.load %arg17[%c0_79, %c0_80] : memref<1x128xf32, #tpu.memory_space<vmem>>, vector<1x128xf32>
      %198 = vector.broadcast %197 : vector<1x128xf32> to vector<32x128xf32>
      %199 = arith.addf %196, %198 : vector<32x128xf32>
      %200 = vector.shape_cast %199 : vector<32x128xf32> to vector<2x16x128xf32>
      %c0_81 = arith.constant 0 : index
      %c0_82 = arith.constant 0 : index
      %c0_83 = arith.constant 0 : index
      %201 = vector.load %arg18[%c0_81, %c0_82, %c0_83] : memref<2x16x128xf32, #tpu.memory_space<vmem>>, vector<2x16x128xf32>
      tpu.vector_store %arg18[%c0_81, %c0_82, %c0_83], %200 {strides = array<i32>} : memref<2x16x128xf32, #tpu.memory_space<vmem>>, vector<2x16x128xf32>,
    } else {
    }
    return
  }
  func.func @transform_0(%arg0: i32, %arg1: i32) -> (i32, i32, i32) {
    %c0_i32 = arith.constant 0 : i32
    %c0_i32_0 = arith.constant 0 : i32
    %c0_i32_1 = arith.constant 0 : i32
    return %arg0, %c0_i32, %c0_i32_0 : i32, i32, i32
  }
  func.func @transform_1(%arg0: i32, %arg1: i32) -> (i32, i32, i32) {
    %c0_i32 = arith.constant 0 : i32
    %c0_i32_0 = arith.constant 0 : i32
    %c0_i32_1 = arith.constant 0 : i32
    return %arg1, %c0_i32, %c0_i32_0 : i32, i32, i32
  }
  func.func @transform_2(%arg0: i32, %arg1: i32) -> (i32, i32, i32) {
    %c0_i32 = arith.constant 0 : i32
    %c0_i32_0 = arith.constant 0 : i32
    %c0_i32_1 = arith.constant 0 : i32
    return %arg1, %c0_i32, %c0_i32_0 : i32, i32, i32
  }
  func.func @transform_3(%arg0: i32, %arg1: i32) -> (i32, i32, i32) {
    %c0_i32 = arith.constant 0 : i32
    %c0_i32_0 = arith.constant 0 : i32
    %c0_i32_1 = arith.constant 0 : i32
    return %arg1, %c0_i32, %c0_i32_0 : i32, i32, i32
  }
  func.func @transform_4(%arg0: i32, %arg1: i32) -> (i32, i32, i32) {
    %c0_i32 = arith.constant 0 : i32
    %c0_i32_0 = arith.constant 0 : i32
    %c0_i32_1 = arith.constant 0 : i32
    return %arg1, %c0_i32, %c0_i32_0 : i32, i32, i32
  }
  func.func @transform_5(%arg0: i32, %arg1: i32) -> (i32, i32, i32) {
    %c0_i32 = arith.constant 0 : i32
    %c0_i32_0 = arith.constant 0 : i32
    %c0_i32_1 = arith.constant 0 : i32
    return %arg1, %c0_i32, %c0_i32_0 : i32, i32, i32
  }
  func.func @transform_6(%arg0: i32, %arg1: i32) -> (i32, i32, i32) {
    %c0_i32 = arith.constant 0 : i32
    %c0_i32_0 = arith.constant 0 : i32
    %c0_i32_1 = arith.constant 0 : i32
    return %arg1, %c0_i32, %c0_i32_0 : i32, i32, i32
  }
  func.func @transform_7(%arg0: i32, %arg1: i32) -> (i32, i32, i32) {
    %c0_i32 = arith.constant 0 : i32
    %c0_i32_0 = arith.constant 0 : i32
    %c0_i32_1 = arith.constant 0 : i32
    return %arg1, %c0_i32, %c0_i32_0 : i32, i32, i32
  }
  func.func @transform_8(%arg0: i32, %arg1: i32) -> (i32, i32, i32) {
    %c0_i32 = arith.constant 0 : i32
    %c0_i32_0 = arith.constant 0 : i32
    %c0_i32_1 = arith.constant 0 : i32
    return %arg1, %c0_i32, %c0_i32_0 : i32, i32, i32
  }
  func.func @transform_9(%arg0: i32, %arg1: i32) -> (i32, i32, i32) {
    %c0_i32 = arith.constant 0 : i32
    %c0_i32_0 = arith.constant 0 : i32
    %c0_i32_1 = arith.constant 0 : i32
    return %arg1, %c0_i32, %c0_i32_0 : i32, i32, i32
  }
  func.func @transform_10(%arg0: i32, %arg1: i32) -> (i32, i32, i32) {
    %c0_i32 = arith.constant 0 : i32
    %c0_i32_0 = arith.constant 0 : i32
    %c0_i32_1 = arith.constant 0 : i32
    return %arg1, %c0_i32, %c0_i32_0 : i32, i32, i32
  }
  func.func @transform_11(%arg0: i32, %arg1: i32) -> (i32, i32, i32) {
    %c0_i32 = arith.constant 0 : i32
    %c0_i32_0 = arith.constant 0 : i32
    %c0_i32_1 = arith.constant 0 : i32
    return %arg1, %c0_i32, %c0_i32_0 : i32, i32, i32
  }
  func.func @transform_12(%arg0: i32, %arg1: i32) -> (i32, i32) {
    %c0_i32 = arith.constant 0 : i32
    %c0_i32_0 = arith.constant 0 : i32
    %c0_i32_1 = arith.constant 0 : i32
    return %c0_i32, %c0_i32_0 : i32, i32
  }
  func.func @transform_13(%arg0: i32, %arg1: i32) -> (i32, i32) {
    %c0_i32 = arith.constant 0 : i32
    %c0_i32_0 = arith.constant 0 : i32
    %c0_i32_1 = arith.constant 0 : i32
    return %c0_i32, %c0_i32_0 : i32, i32
  }
  func.func @transform_14(%arg0: i32, %arg1: i32) -> (i32, i32) {
    %c0_i32 = arith.constant 0 : i32
    %c0_i32_0 = arith.constant 0 : i32
    %c0_i32_1 = arith.constant 0 : i32
    return %c0_i32, %c0_i32_0 : i32, i32
  }
  func.func @transform_15(%arg0: i32, %arg1: i32) -> (i32, i32) {
    %c0_i32 = arith.constant 0 : i32
    %c0_i32_0 = arith.constant 0 : i32
    %c0_i32_1 = arith.constant 0 : i32
    return %c0_i32, %c0_i32_0 : i32, i32
  }
  func.func @transform_16(%arg0: i32, %arg1: i32) -> (i32, i32, i32) {
    %c0_i32 = arith.constant 0 : i32
    %c0_i32_0 = arith.constant 0 : i32
    %c0_i32_1 = arith.constant 0 : i32
    return %arg0, %c0_i32, %c0_i32_0 : i32, i32, i32
  }
}

</mosaic_0001>

<llo_original>
// kernel: tpu_custom_call.1
$region0: #{tpu_custom_call.1}
  #allocation0 [shape = 'u32[]', space=smem, size = 0x4, offset = 0x4, fixed_abs, tag = 'smem constant byte address 0x4 - core index']
  #allocation1 [shape = 'u32[144,128]{1,0:T(1,128)}', space=vmem, size = 0x12000, scoped, tag = 'internal scratch']
  #allocation2 [shape = 'f32[32,128]{1,0:T(8,128)}', space=vmem, size = 0x4000, scoped, tag = 'scratch operand']
  %s0 = inlined_call_operand.hbm [shape: f32[2,16,128], index: 0, kind: input, shape index: {}]
  %s1 = inlined_call_operand.hbm [shape: f32[2,1,128], index: 1, kind: input, shape index: {}]
  %s2 = inlined_call_operand.vmem [shape: f32[2,1,128], index: 2, kind: input, shape index: {}]
  %s3 = inlined_call_operand.hbm [shape: bf16[2,128,384], index: 3, kind: input, shape index: {}]
  %s4 = inlined_call_operand.hbm [shape: bf16[2,128,128], index: 4, kind: input, shape index: {}]
  %s5 = inlined_call_operand.vmem [shape: f32[2,1,128], index: 5, kind: input, shape index: {}]
  %s6 = inlined_call_operand.vmem [shape: f32[2,1,128], index: 6, kind: input, shape index: {}]
  %s7 = inlined_call_operand.vmem [shape: f32[2,1,128], index: 7, kind: input, shape index: {}]
  %s8 = inlined_call_operand.hbm [shape: bf16[2,128,256], index: 8, kind: input, shape index: {}]
  %s9 = inlined_call_operand.vmem [shape: f32[2,1,256], index: 9, kind: input, shape index: {}]
  %s10 = inlined_call_operand.hbm [shape: bf16[2,256,128], index: 10, kind: input, shape index: {}]
  %s11 = inlined_call_operand.vmem [shape: f32[2,1,128], index: 11, kind: input, shape index: {}]
  %s12 = inlined_call_operand.vmem [shape: f32[1,128], index: 12, kind: input, shape index: {}]
  %s13 = inlined_call_operand.vmem [shape: f32[1,128], index: 13, kind: input, shape index: {}]
  %s14 = inlined_call_operand.hbm [shape: bf16[128,128], index: 14, kind: input, shape index: {}]
  %s15 = inlined_call_operand.vmem [shape: f32[1,128], index: 15, kind: input, shape index: {}]
  %s16 = inlined_call_operand.hbm [shape: f32[2,16,128], index: 16, kind: output, shape index: {}]
  %s17 = sld [smem:[#allocation0]]
  $region133: #{tpu_custom_call.1} parent=0
    _
  %s19 = ssub.s32 1, %s17
  %s20 = scalar_select 0, %s19, %s17
  $region1: #{tpu_custom_call.1} parent=0
    #allocation3 [shape = 'u8[16384]{0}', space=vmem, size = 0x4000, scoped, tag = 'input window, operand 0, single buffered']
    #allocation4 [shape = 's32[2]{0}', space=sflag, size = 0x8, scoped, tag = 'scoped memory for tpu_custom_call.1']
    #allocation5 [shape = 's32[2]{0}', space=sflag, size = 0x8, scoped, tag = 'scoped memory for tpu_custom_call.1']
    #allocation6 [shape = 'u8[1024]{0}', space=vmem, size = 0x400, scoped, tag = 'input window, operand 1']
    #allocation7 [shape = 's32[2]{0}', space=sflag, size = 0x8, scoped, tag = 'scoped memory for tpu_custom_call.1']
    #allocation8 [shape = 'u8[196608]{0}', space=vmem, size = 0x30000, scoped, tag = 'input window, operand 3']
    #allocation9 [shape = 'u8[65536]{0}', space=vmem, size = 0x10000, scoped, tag = 'input window, operand 4']
    #allocation10 [shape = 's32[2]{0}', space=sflag, size = 0x8, scoped, tag = 'scoped memory for tpu_custom_call.1']
    #allocation11 [shape = 'u8[131072]{0}', space=vmem, size = 0x20000, scoped, tag = 'input window, operand 8']
    #allocation12 [shape = 'u8[131072]{0}', space=vmem, size = 0x20000, scoped, tag = 'input window, operand 10']
    #allocation13 [shape = 's32[2]{0}', space=sflag, size = 0x8, scoped, tag = 'scoped memory for tpu_custom_call.1']
    #allocation14 [shape = 'u8[32768]{0}', space=vmem, size = 0x8000, scoped, tag = 'input window, operand 14, single buffered']
    #allocation15 [shape = 'u8[16384]{0}', space=vmem, size = 0x4000, scoped, tag = 'output window, operand 0, single buffered']
    %21 = vsyncpa [#allocation4], 0
    %22 = vsyncpa [#allocation7], 0
    %s23 = scalar_lea.sflag [#allocation7], 1
    %24 = vsyncpa %s23, 0
    %25 = vsyncpa [#allocation10], 0
    %s26 = scalar_lea.sflag [#allocation10], 1
    %27 = vsyncpa %s26, 0
    %28 = vsyncpa [#allocation13], 0
    %s29 = scalar_lea.sflag [#allocation13], 1
    %30 = vsyncpa %s29, 0
    %31 = vsyncpa [#allocation5], 0
    loop: start=0, step=1, limit=4
    $region2: #{tpu_custom_call.1} parent=1 // loop_pre_header
      _
    $region3: #{tpu_custom_call.1} parent=1 // loop_header
      %s33 = sphi 0, %s37
      %p34 = scmp.ge.s32.totalorder %s33, 4
      %s40 = sphi 0, %s52
      %s41 = sphi 0, %s48
      %s42 = sphi 0, %s40
      %s43 = sphi 0, %s41
      %s44 = sphi 0, %s42
      %s45 = sphi 0, %s43
      %s55 = sphi 0, %s57
      %s58 = sphi 0, %s55
      %s59 = sphi 0, %s58
      %s75 = sphi 0, %s59
      %s81 = sphi 0, %s83
      %s84 = sphi 0, %s81
      %s85 = sphi 0, %s84
      %s101 = sphi 0, %s85
      %s107 = sphi 0, %s109
      %s110 = sphi 0, %s107
      %s111 = sphi 0, %s110
      %s127 = sphi 0, %s111
      %s133 = sphi 0, %s135
      %s136 = sphi 0, %s133
      %s137 = sphi 0, %s136
      %s153 = sphi 0, %s137
      %s159 = sphi 0, %s161
      %s162 = sphi 0, %s159
      %s163 = sphi 0, %s162
      %s179 = sphi 0, %s163
      %s185 = sphi 0, %s187
      %s188 = sphi 0, %s185
      %s189 = sphi 0, %s188
      %s205 = sphi 0, %s189
      %s211 = sphi 0, %s213
      %s214 = sphi 0, %s211
      %s215 = sphi 0, %s214
      %s231 = sphi 0, %s215
      %s237 = sphi 0, %s239
      %s240 = sphi 0, %s237
      %s241 = sphi 0, %s240
      %s257 = sphi 0, %s241
      %s263 = sphi 0, %s265
      %s266 = sphi 0, %s263
      %s267 = sphi 0, %s266
      %s283 = sphi 0, %s267
      %s289 = sphi 0, %s291
      %s292 = sphi 0, %s289
      %s293 = sphi 0, %s292
      %s309 = sphi 0, %s293
      %s315 = sphi 0, %s317
      %s318 = sphi 0, %s315
      %s319 = sphi 0, %s318
      %s335 = sphi 0, %s319
      %s341 = sphi 0, %s343
      %s344 = sphi 0, %s341
      %s345 = sphi 0, %s344
      %s361 = sphi 0, %s345
      %s365 = sphi 0, %s365
      %s367 = sphi 0, %s365
      %s368 = sphi 0, %s367
      %s382 = sphi 0, %s368
      %s386 = sphi 0, %s386
      %s388 = sphi 0, %s386
      %s389 = sphi 0, %s388
      %s403 = sphi 0, %s389
      %s407 = sphi 0, %s407
      %s409 = sphi 0, %s407
      %s410 = sphi 0, %s409
      %s424 = sphi 0, %s410
      %s428 = sphi 0, %s428
      %s430 = sphi 0, %s428
      %s431 = sphi 0, %s430
      %s445 = sphi 0, %s431
      %s451 = sphi 0, %s453
      %s454 = sphi 0, %s451
      %s455 = sphi 0, %s454
      %s471 = sphi 0, %s455
    $region4: #{tpu_custom_call.1} parent=1 // loop_header_branch
      %36 = sbr.rel (%p34) target = $region8
    $region5: #{tpu_custom_call.1} parent=1 // loop_body
      %s38 = ssub.s32 %s33, 1
      %s39 = ssub.s32 %s33, 2
      %s46 = sadd.s32 1, %s41
      %p47 = scmp.ge.s32.totalorder %s46, 2
      %s48 = scalar_select %p47, 0, %s46
      %s49 = sadd.s32 1, %s40
      %s50 = scalar_select %p47, %s49, %s40
      %p51 = scmp.ge.s32.totalorder %s50, 1
      %s52 = scalar_select %p51, 0, %s50
      %s53 = ssub.s32 %s40, %s52
      %p54 = scmp.eq.s32.totalorder %s53, 0
      %s56 = sadd.s32 %s55, 1
      %s57 = scalar_select %p54, %s55, %s56
      %p60 = pneg %p54
      %p61 = scmp.eq.s32.totalorder %s33, 1
      %p62 = por %p60, %p61
      %p63 = scmp.ne.s32.totalorder %s55, %s58
      %p64 = scmp.eq.s32.totalorder %s33, 0
      %p65 = por %p63, %p64
      %p66 = scmp.ne.s32.totalorder %s55, %s58
      %p67 = scmp.eq.s32.totalorder %s38, 1
      %p68 = por %p66, %p67
      %p69 = scmp.ne.s32.totalorder %s58, %s59
      %p70 = scmp.eq.s32.totalorder %s38, 0
      %p71 = por %p69, %p70
      %p72 = scmp.ne.s32.totalorder %s58, %s59
      %p73 = scmp.eq.s32.totalorder %s39, 1
      %p74 = por %p72, %p73
      %p76 = scmp.ne.s32.totalorder %s59, %s75
      %p77 = scmp.eq.s32.totalorder %s39, 0
      %p78 = por %p76, %p77
      %s79 = ssub.s32 %s41, %s48
      %p80 = scmp.eq.s32.totalorder %s79, 0
      %s82 = sadd.s32 %s81, 1
      %s83 = scalar_select %p80, %s81, %s82
      %p86 = pneg %p80
      %p87 = scmp.eq.s32.totalorder %s33, 1
      %p88 = por %p86, %p87
      %p89 = scmp.ne.s32.totalorder %s81, %s84
      %p90 = scmp.eq.s32.totalorder %s33, 0
      %p91 = por %p89, %p90
      %p92 = scmp.ne.s32.totalorder %s81, %s84
      %p93 = scmp.eq.s32.totalorder %s38, 1
      %p94 = por %p92, %p93
      %p95 = scmp.ne.s32.totalorder %s84, %s85
      %p96 = scmp.eq.s32.totalorder %s38, 0
      %p97 = por %p95, %p96
      %p98 = scmp.ne.s32.totalorder %s84, %s85
      %p99 = scmp.eq.s32.totalorder %s39, 1
      %p100 = por %p98, %p99
      %p102 = scmp.ne.s32.totalorder %s85, %s101
      %p103 = scmp.eq.s32.totalorder %s39, 0
      %p104 = por %p102, %p103
      %s105 = ssub.s32 %s41, %s48
      %p106 = scmp.eq.s32.totalorder %s105, 0
      %s108 = sadd.s32 %s107, 1
      %s109 = scalar_select %p106, %s107, %s108
      %p112 = pneg %p106
      %p113 = scmp.eq.s32.totalorder %s33, 1
      %p114 = por %p112, %p113
      %p115 = scmp.ne.s32.totalorder %s107, %s110
      %p116 = scmp.eq.s32.totalorder %s33, 0
      %p117 = por %p115, %p116
      %p118 = scmp.ne.s32.totalorder %s107, %s110
      %p119 = scmp.eq.s32.totalorder %s38, 1
      %p120 = por %p118, %p119
      %p121 = scmp.ne.s32.totalorder %s110, %s111
      %p122 = scmp.eq.s32.totalorder %s38, 0
      %p123 = por %p121, %p122
      %p124 = scmp.ne.s32.totalorder %s110, %s111
      %p125 = scmp.eq.s32.totalorder %s39, 1
      %p126 = por %p124, %p125
      %p128 = scmp.ne.s32.totalorder %s111, %s127
      %p129 = scmp.eq.s32.totalorder %s39, 0
      %p130 = por %p128, %p129
      %s131 = ssub.s32 %s41, %s48
      %p132 = scmp.eq.s32.totalorder %s131, 0
      %s134 = sadd.s32 %s133, 1
      %s135 = scalar_select %p132, %s133, %s134
      %p138 = pneg %p132
      %p139 = scmp.eq.s32.totalorder %s33, 1
      %p140 = por %p138, %p139
      %p141 = scmp.ne.s32.totalorder %s133, %s136
      %p142 = scmp.eq.s32.totalorder %s33, 0
      %p143 = por %p141, %p142
      %p144 = scmp.ne.s32.totalorder %s133, %s136
      %p145 = scmp.eq.s32.totalorder %s38, 1
      %p146 = por %p144, %p145
      %p147 = scmp.ne.s32.totalorder %s136, %s137
      %p148 = scmp.eq.s32.totalorder %s38, 0
      %p149 = por %p147, %p148
      %p150 = scmp.ne.s32.totalorder %s136, %s137
      %p151 = scmp.eq.s32.totalorder %s39, 1
      %p152 = por %p150, %p151
      %p154 = scmp.ne.s32.totalorder %s137, %s153
      %p155 = scmp.eq.s32.totalorder %s39, 0
      %p156 = por %p154, %p155
      %s157 = ssub.s32 %s41, %s48
      %p158 = scmp.eq.s32.totalorder %s157, 0
      %s160 = sadd.s32 %s159, 1
      %s161 = scalar_select %p158, %s159, %s160
      %p164 = pneg %p158
      %p165 = scmp.eq.s32.totalorder %s33, 1
      %p166 = por %p164, %p165
      %p167 = scmp.ne.s32.totalorder %s159, %s162
      %p168 = scmp.eq.s32.totalorder %s33, 0
      %p169 = por %p167, %p168
      %p170 = scmp.ne.s32.totalorder %s159, %s162
      %p171 = scmp.eq.s32.totalorder %s38, 1
      %p172 = por %p170, %p171
      %p173 = scmp.ne.s32.totalorder %s162, %s163
      %p174 = scmp.eq.s32.totalorder %s38, 0
      %p175 = por %p173, %p174
      %p176 = scmp.ne.s32.totalorder %s162, %s163
      %p177 = scmp.eq.s32.totalorder %s39, 1
      %p178 = por %p176, %p177
      %p180 = scmp.ne.s32.totalorder %s163, %s179
      %p181 = scmp.eq.s32.totalorder %s39, 0
      %p182 = por %p180, %p181
      %s183 = ssub.s32 %s41, %s48
      %p184 = scmp.eq.s32.totalorder %s183, 0
      %s186 = sadd.s32 %s185, 1
      %s187 = scalar_select %p184, %s185, %s186
      %p190 = pneg %p184
      %p191 = scmp.eq.s32.totalorder %s33, 1
      %p192 = por %p190, %p191
      %p193 = scmp.ne.s32.totalorder %s185, %s188
      %p194 = scmp.eq.s32.totalorder %s33, 0
      %p195 = por %p193, %p194
      %p196 = scmp.ne.s32.totalorder %s185, %s188
      %p197 = scmp.eq.s32.totalorder %s38, 1
      %p198 = por %p196, %p197
      %p199 = scmp.ne.s32.totalorder %s188, %s189
      %p200 = scmp.eq.s32.totalorder %s38, 0
      %p201 = por %p199, %p200
      %p202 = scmp.ne.s32.totalorder %s188, %s189
      %p203 = scmp.eq.s32.totalorder %s39, 1
      %p204 = por %p202, %p203
      %p206 = scmp.ne.s32.totalorder %s189, %s205
      %p207 = scmp.eq.s32.totalorder %s39, 0
      %p208 = por %p206, %p207
      %s209 = ssub.s32 %s41, %s48
      %p210 = scmp.eq.s32.totalorder %s209, 0
      %s212 = sadd.s32 %s211, 1
      %s213 = scalar_select %p210, %s211, %s212
      %p216 = pneg %p210
      %p217 = scmp.eq.s32.totalorder %s33, 1
      %p218 = por %p216, %p217
      %p219 = scmp.ne.s32.totalorder %s211, %s214
      %p220 = scmp.eq.s32.totalorder %s33, 0
      %p221 = por %p219, %p220
      %p222 = scmp.ne.s32.totalorder %s211, %s214
      %p223 = scmp.eq.s32.totalorder %s38, 1
      %p224 = por %p222, %p223
      %p225 = scmp.ne.s32.totalorder %s214, %s215
      %p226 = scmp.eq.s32.totalorder %s38, 0
      %p227 = por %p225, %p226
      %p228 = scmp.ne.s32.totalorder %s214, %s215
      %p229 = scmp.eq.s32.totalorder %s39, 1
      %p230 = por %p228, %p229
      %p232 = scmp.ne.s32.totalorder %s215, %s231
      %p233 = scmp.eq.s32.totalorder %s39, 0
      %p234 = por %p232, %p233
      %s235 = ssub.s32 %s41, %s48
      %p236 = scmp.eq.s32.totalorder %s235, 0
      %s238 = sadd.s32 %s237, 1
      %s239 = scalar_select %p236, %s237, %s238
      %p242 = pneg %p236
      %p243 = scmp.eq.s32.totalorder %s33, 1
      %p244 = por %p242, %p243
      %p245 = scmp.ne.s32.totalorder %s237, %s240
      %p246 = scmp.eq.s32.totalorder %s33, 0
      %p247 = por %p245, %p246
      %p248 = scmp.ne.s32.totalorder %s237, %s240
      %p249 = scmp.eq.s32.totalorder %s38, 1
      %p250 = por %p248, %p249
      %p251 = scmp.ne.s32.totalorder %s240, %s241
      %p252 = scmp.eq.s32.totalorder %s38, 0
      %p253 = por %p251, %p252
      %p254 = scmp.ne.s32.totalorder %s240, %s241
      %p255 = scmp.eq.s32.totalorder %s39, 1
      %p256 = por %p254, %p255
      %p258 = scmp.ne.s32.totalorder %s241, %s257
      %p259 = scmp.eq.s32.totalorder %s39, 0
      %p260 = por %p258, %p259
      %s261 = ssub.s32 %s41, %s48
      %p262 = scmp.eq.s32.totalorder %s261, 0
      %s264 = sadd.s32 %s263, 1
      %s265 = scalar_select %p262, %s263, %s264
      %p268 = pneg %p262
      %p269 = scmp.eq.s32.totalorder %s33, 1
      %p270 = por %p268, %p269
      %p271 = scmp.ne.s32.totalorder %s263, %s266
      %p272 = scmp.eq.s32.totalorder %s33, 0
      %p273 = por %p271, %p272
      %p274 = scmp.ne.s32.totalorder %s263, %s266
      %p275 = scmp.eq.s32.totalorder %s38, 1
      %p276 = por %p274, %p275
      %p277 = scmp.ne.s32.totalorder %s266, %s267
      %p278 = scmp.eq.s32.totalorder %s38, 0
      %p279 = por %p277, %p278
      %p280 = scmp.ne.s32.totalorder %s266, %s267
      %p281 = scmp.eq.s32.totalorder %s39, 1
      %p282 = por %p280, %p281
      %p284 = scmp.ne.s32.totalorder %s267, %s283
      %p285 = scmp.eq.s32.totalorder %s39, 0
      %p286 = por %p284, %p285
      %s287 = ssub.s32 %s41, %s48
      %p288 = scmp.eq.s32.totalorder %s287, 0
      %s290 = sadd.s32 %s289, 1
      %s291 = scalar_select %p288, %s289, %s290
      %p294 = pneg %p288
      %p295 = scmp.eq.s32.totalorder %s33, 1
      %p296 = por %p294, %p295
      %p297 = scmp.ne.s32.totalorder %s289, %s292
      %p298 = scmp.eq.s32.totalorder %s33, 0
      %p299 = por %p297, %p298
      %p300 = scmp.ne.s32.totalorder %s289, %s292
      %p301 = scmp.eq.s32.totalorder %s38, 1
      %p302 = por %p300, %p301
      %p303 = scmp.ne.s32.totalorder %s292, %s293
      %p304 = scmp.eq.s32.totalorder %s38, 0
      %p305 = por %p303, %p304
      %p306 = scmp.ne.s32.totalorder %s292, %s293
      %p307 = scmp.eq.s32.totalorder %s39, 1
      %p308 = por %p306, %p307
      %p310 = scmp.ne.s32.totalorder %s293, %s309
      %p311 = scmp.eq.s32.totalorder %s39, 0
      %p312 = por %p310, %p311
      %s313 = ssub.s32 %s41, %s48
      %p314 = scmp.eq.s32.totalorder %s313, 0
      %s316 = sadd.s32 %s315, 1
      %s317 = scalar_select %p314, %s315, %s316
      %p320 = pneg %p314
      %p321 = scmp.eq.s32.totalorder %s33, 1
      %p322 = por %p320, %p321
      %p323 = scmp.ne.s32.totalorder %s315, %s318
      %p324 = scmp.eq.s32.totalorder %s33, 0
      %p325 = por %p323, %p324
      %p326 = scmp.ne.s32.totalorder %s315, %s318
      %p327 = scmp.eq.s32.totalorder %s38, 1
      %p328 = por %p326, %p327
      %p329 = scmp.ne.s32.totalorder %s318, %s319
      %p330 = scmp.eq.s32.totalorder %s38, 0
      %p331 = por %p329, %p330
      %p332 = scmp.ne.s32.totalorder %s318, %s319
      %p333 = scmp.eq.s32.totalorder %s39, 1
      %p334 = por %p332, %p333
      %p336 = scmp.ne.s32.totalorder %s319, %s335
      %p337 = scmp.eq.s32.totalorder %s39, 0
      %p338 = por %p336, %p337
      %s339 = ssub.s32 %s41, %s48
      %p340 = scmp.eq.s32.totalorder %s339, 0
      %s342 = sadd.s32 %s341, 1
      %s343 = scalar_select %p340, %s341, %s342
      %p346 = pneg %p340
      %p347 = scmp.eq.s32.totalorder %s33, 1
      %p348 = por %p346, %p347
      %p349 = scmp.ne.s32.totalorder %s341, %s344
      %p350 = scmp.eq.s32.totalorder %s33, 0
      %p351 = por %p349, %p350
      %p352 = scmp.ne.s32.totalorder %s341, %s344
      %p353 = scmp.eq.s32.totalorder %s38, 1
      %p354 = por %p352, %p353
      %p355 = scmp.ne.s32.totalorder %s344, %s345
      %p356 = scmp.eq.s32.totalorder %s38, 0
      %p357 = por %p355, %p356
      %p358 = scmp.ne.s32.totalorder %s344, %s345
      %p359 = scmp.eq.s32.totalorder %s39, 1
      %p360 = por %p358, %p359
      %p362 = scmp.ne.s32.totalorder %s345, %s361
      %p363 = scmp.eq.s32.totalorder %s39, 0
      %p364 = por %p362, %p363
      %s366 = sadd.s32 %s365, 1
      %p369 = scmp.eq.s32.totalorder %s33, 1
      %p370 = scmp.ne.s32.totalorder %s365, %s367
      %p371 = scmp.eq.s32.totalorder %s33, 0
      %p372 = por %p370, %p371
      %p373 = scmp.ne.s32.totalorder %s365, %s367
      %p374 = scmp.eq.s32.totalorder %s38, 1
      %p375 = por %p373, %p374
      %p376 = scmp.ne.s32.totalorder %s367, %s368
      %p377 = scmp.eq.s32.totalorder %s38, 0
      %p378 = por %p376, %p377
      %p379 = scmp.ne.s32.totalorder %s367, %s368
      %p380 = scmp.eq.s32.totalorder %s39, 1
      %p381 = por %p379, %p380
      %p383 = scmp.ne.s32.totalorder %s368, %s382
      %p384 = scmp.eq.s32.totalorder %s39, 0
      %p385 = por %p383, %p384
      %s387 = sadd.s32 %s386, 1
      %p390 = scmp.eq.s32.totalorder %s33, 1
      %p391 = scmp.ne.s32.totalorder %s386, %s388
      %p392 = scmp.eq.s32.totalorder %s33, 0
      %p393 = por %p391, %p392
      %p394 = scmp.ne.s32.totalorder %s386, %s388
      %p395 = scmp.eq.s32.totalorder %s38, 1
      %p396 = por %p394, %p395
      %p397 = scmp.ne.s32.totalorder %s388, %s389
      %p398 = scmp.eq.s32.totalorder %s38, 0
      %p399 = por %p397, %p398
      %p400 = scmp.ne.s32.totalorder %s388, %s389
      %p401 = scmp.eq.s32.totalorder %s39, 1
      %p402 = por %p400, %p401
      %p404 = scmp.ne.s32.totalorder %s389, %s403
      %p405 = scmp.eq.s32.totalorder %s39, 0
      %p406 = por %p404, %p405
      %s408 = sadd.s32 %s407, 1
      %p411 = scmp.eq.s32.totalorder %s33, 1
      %p412 = scmp.ne.s32.totalorder %s407, %s409
      %p413 = scmp.eq.s32.totalorder %s33, 0
      %p414 = por %p412, %p413
      %p415 = scmp.ne.s32.totalorder %s407, %s409
      %p416 = scmp.eq.s32.totalorder %s38, 1
      %p417 = por %p415, %p416
      %p418 = scmp.ne.s32.totalorder %s409, %s410
      %p419 = scmp.eq.s32.totalorder %s38, 0
      %p420 = por %p418, %p419
      %p421 = scmp.ne.s32.totalorder %s409, %s410
      %p422 = scmp.eq.s32.totalorder %s39, 1
      %p423 = por %p421, %p422
      %p425 = scmp.ne.s32.totalorder %s410, %s424
      %p426 = scmp.eq.s32.totalorder %s39, 0
      %p427 = por %p425, %p426
      %s429 = sadd.s32 %s428, 1
      %p432 = scmp.eq.s32.totalorder %s33, 1
      %p433 = scmp.ne.s32.totalorder %s428, %s430
      %p434 = scmp.eq.s32.totalorder %s33, 0
      %p435 = por %p433, %p434
      %p436 = scmp.ne.s32.totalorder %s428, %s430
      %p437 = scmp.eq.s32.totalorder %s38, 1
      %p438 = por %p436, %p437
      %p439 = scmp.ne.s32.totalorder %s430, %s431
      %p440 = scmp.eq.s32.totalorder %s38, 0
      %p441 = por %p439, %p440
      %p442 = scmp.ne.s32.totalorder %s430, %s431
      %p443 = scmp.eq.s32.totalorder %s39, 1
      %p444 = por %p442, %p443
      %p446 = scmp.ne.s32.totalorder %s431, %s445
      %p447 = scmp.eq.s32.totalorder %s39, 0
      %p448 = por %p446, %p447
      %s449 = ssub.s32 %s40, %s52
      %p450 = scmp.eq.s32.totalorder %s449, 0
      %s452 = sadd.s32 %s451, 1
      %s453 = scalar_select %p450, %s451, %s452
      %p456 = pneg %p450
      %p457 = scmp.eq.s32.totalorder %s33, 1
      %p458 = por %p456, %p457
      %p459 = scmp.ne.s32.totalorder %s451, %s454
      %p460 = scmp.eq.s32.totalorder %s33, 0
      %p461 = por %p459, %p460
      %p462 = scmp.ne.s32.totalorder %s451, %s454
      %p463 = scmp.eq.s32.totalorder %s38, 1
      %p464 = por %p462, %p463
      %p465 = scmp.ne.s32.totalorder %s454, %s455
      %p466 = scmp.eq.s32.totalorder %s38, 0
      %p467 = por %p465, %p466
      %p468 = scmp.ne.s32.totalorder %s454, %s455
      %p469 = scmp.eq.s32.totalorder %s39, 1
      %p470 = por %p468, %p469
      %p472 = scmp.ne.s32.totalorder %s455, %s471
      %p473 = scmp.eq.s32.totalorder %s39, 0
      %p474 = por %p472, %p473
      %p475 = scmp.le.s32.totalorder 1, %s33
      %p476 = scmp.lt.s32.totalorder %s33, 3
      %p477 = pnand %p475, %p476
      %p478 = pneg %p477
      // Predicated region
      $region9: #{tpu_custom_call.1} parent=5 // pred_check
        _
      $region10: #{tpu_custom_call.1} parent=5 // pred_check_branch
        %480 = sbr.rel (%p477) target = $region12
      $region11: #{tpu_custom_call.1} parent=5 // pred_region
        %s481 = ssub.s32 %s33, 1
        // Predicated region
        $region13: #{tpu_custom_call.1} parent=11 // pred_check
          %p482 = pneg %p71
        $region14: #{tpu_custom_call.1} parent=11 // pred_check_branch
          %484 = sbr.rel (%p482) target = $region16
        $region15: #{tpu_custom_call.1} parent=11 // pred_region
          %s485 = smul.u32 2, %s42
          %s487 = ssub.s32 512, 512
          %488 = vsyncadd [#allocation4], %s487
          %s489 = smul.addr %s485, 2
          %s490 = smul.addr %s489, 128
          %s491 = scalar_lea.hbm %s0, %s490
          %s492 = sshll.u32 [#allocation3], 4
          %s493 = int_to_ptr.vmem [resolvable:$true] %s492
          %498 = dma.hbm_to_vmem [thread:$0]  %s491, 512, %s493, [#allocation4], 128, 128, 8
        $region16: #{tpu_custom_call.1} parent=11 // pred_fallthru
          _
        // Predicated region
        $region17: #{tpu_custom_call.1} parent=11 // pred_check
          %p499 = pneg %p378
        $region18: #{tpu_custom_call.1} parent=11 // pred_check_branch
          %501 = sbr.rel (%p499) target = $region20
        $region19: #{tpu_custom_call.1} parent=11 // pred_region
          _
        $region20: #{tpu_custom_call.1} parent=11 // pred_fallthru
          _
        // Predicated region
        $region21: #{tpu_custom_call.1} parent=11 // pred_check
          %p502 = pneg %p399
        $region22: #{tpu_custom_call.1} parent=11 // pred_check_branch
          %504 = sbr.rel (%p502) target = $region24
        $region23: #{tpu_custom_call.1} parent=11 // pred_region
          _
        $region24: #{tpu_custom_call.1} parent=11 // pred_fallthru
          _
        // Predicated region
        $region25: #{tpu_custom_call.1} parent=11 // pred_check
          %p505 = pneg %p420
        $region26: #{tpu_custom_call.1} parent=11 // pred_check_branch
          %507 = sbr.rel (%p505) target = $region28
        $region27: #{tpu_custom_call.1} parent=11 // pred_region
          %s509 = ssub.s32 1024, 1024
          %510 = vsyncadd [#allocation13], %s509
          %s511 = sshll.u32 [#allocation14], 4
          %s512 = int_to_ptr.vmem [resolvable:$true] %s511
          %517 = dma.hbm_to_vmem [thread:$0]  %s14, 1024, %s512, [#allocation13], 64, 64, 4
        $region28: #{tpu_custom_call.1} parent=11 // pred_fallthru
          _
        // Predicated region
        $region29: #{tpu_custom_call.1} parent=11 // pred_check
          %p518 = pneg %p441
        $region30: #{tpu_custom_call.1} parent=11 // pred_check_branch
          %520 = sbr.rel (%p518) target = $region32
        $region31: #{tpu_custom_call.1} parent=11 // pred_region
          _
        $region32: #{tpu_custom_call.1} parent=11 // pred_fallthru
          _
      $region12: #{tpu_custom_call.1} parent=5 // pred_fallthru
        _
      %p521 = scmp.lt.s32.totalorder %s33, 2
      // Predicated region
      $region33: #{tpu_custom_call.1} parent=5 // pred_check
        %p522 = pneg %p521
      $region34: #{tpu_custom_call.1} parent=5 // pred_check_branch
        %524 = sbr.rel (%p522) target = $region36
      $region35: #{tpu_custom_call.1} parent=5 // pred_region
        // Predicated region
        $region37: #{tpu_custom_call.1} parent=35 // pred_check
          %p525 = pneg %p91
        $region38: #{tpu_custom_call.1} parent=35 // pred_check_branch
          %527 = sbr.rel (%p525) target = $region40
        $region39: #{tpu_custom_call.1} parent=35 // pred_region
          %s528 = sand.u32 %s33, 1
          %s529 = scalar_lea.sflag [#allocation7], %s528
          %s530 = sand.u32 %s81, 1
          %s531 = scalar_lea.vmem [#allocation6], %s530
          %s533 = ssub.s32 16, 16
          %534 = vsyncadd %s529, %s533
          %s535 = smul.addr %s41, 16
          %s536 = scalar_lea.hbm %s1, %s535
          %s538 = sshll.u32 %s531, 4
          %s539 = int_to_ptr.vmem [resolvable:$true] %s538
          %541 = dma.hbm_to_vmem [thread:$0]  %s536, 16, %s539, %s529
        $region40: #{tpu_custom_call.1} parent=35 // pred_fallthru
          _
        // Predicated region
        $region41: #{tpu_custom_call.1} parent=35 // pred_check
          %p542 = pneg %p117
        $region42: #{tpu_custom_call.1} parent=35 // pred_check_branch
          %544 = sbr.rel (%p542) target = $region44
        $region43: #{tpu_custom_call.1} parent=35 // pred_region
          %p545 = scmp.lt.s32.totalorder %s41, 1
          %s546 = scalar_select %p545, %s41, 1
          %s547 = scalar_lea.vmem %s2, %s546
        $region44: #{tpu_custom_call.1} parent=35 // pred_fallthru
          _
        // Predicated region
        $region45: #{tpu_custom_call.1} parent=35 // pred_check
          %p548 = pneg %p143
        $region46: #{tpu_custom_call.1} parent=35 // pred_check_branch
          %550 = sbr.rel (%p548) target = $region48
        $region47: #{tpu_custom_call.1} parent=35 // pred_region
          %s551 = sand.u32 %s33, 1
          %s552 = scalar_lea.sflag [#allocation7], %s551
          %s553 = sand.u32 %s133, 1
          %s554 = smul.addr %s553, 192
          %s555 = scalar_lea.vmem [#allocation8], %s554
          %s557 = ssub.s32 3072, 3072
          %558 = vsyncadd %s552, %s557
          %s559 = smul.addr %s41, 48
          %s560 = smul.addr %s559, 64
          %s561 = scalar_lea.hbm %s3, %s560
          %s562 = sshll.u32 %s555, 4
          %s563 = int_to_ptr.vmem [resolvable:$true] %s562
          %568 = dma.hbm_to_vmem [thread:$0]  %s561, 3072, %s563, %s552, 192, 192, 12
        $region48: #{tpu_custom_call.1} parent=35 // pred_fallthru
          _
        // Predicated region
        $region49: #{tpu_custom_call.1} parent=35 // pred_check
          %p569 = pneg %p169
        $region50: #{tpu_custom_call.1} parent=35 // pred_check_branch
          %571 = sbr.rel (%p569) target = $region52
        $region51: #{tpu_custom_call.1} parent=35 // pred_region
          %s572 = sand.u32 %s33, 1
          %s573 = scalar_lea.sflag [#allocation10], %s572
          %s574 = sand.u32 %s159, 1
          %s575 = smul.addr %s574, 64
          %s576 = scalar_lea.vmem [#allocation9], %s575
          %s578 = ssub.s32 1024, 1024
          %579 = vsyncadd %s573, %s578
          %s580 = smul.addr %s41, 16
          %s581 = smul.addr %s580, 64
          %s582 = scalar_lea.hbm %s4, %s581
          %s583 = sshll.u32 %s576, 4
          %s584 = int_to_ptr.vmem [resolvable:$true] %s583
          %589 = dma.hbm_to_vmem [thread:$0]  %s582, 1024, %s584, %s573, 64, 64, 4
        $region52: #{tpu_custom_call.1} parent=35 // pred_fallthru
          _
        // Predicated region
        $region53: #{tpu_custom_call.1} parent=35 // pred_check
          %p590 = pneg %p195
        $region54: #{tpu_custom_call.1} parent=35 // pred_check_branch
          %592 = sbr.rel (%p590) target = $region56
        $region55: #{tpu_custom_call.1} parent=35 // pred_region
          %p593 = scmp.lt.s32.totalorder %s41, 1
          %s594 = scalar_select %p593, %s41, 1
          %s595 = scalar_lea.vmem %s5, %s594
        $region56: #{tpu_custom_call.1} parent=35 // pred_fallthru
          _
        // Predicated region
        $region57: #{tpu_custom_call.1} parent=35 // pred_check
          %p596 = pneg %p221
        $region58: #{tpu_custom_call.1} parent=35 // pred_check_branch
          %598 = sbr.rel (%p596) target = $region60
        $region59: #{tpu_custom_call.1} parent=35 // pred_region
          %p599 = scmp.lt.s32.totalorder %s41, 1
          %s600 = scalar_select %p599, %s41, 1
          %s601 = scalar_lea.vmem %s6, %s600
        $region60: #{tpu_custom_call.1} parent=35 // pred_fallthru
          _
        // Predicated region
        $region61: #{tpu_custom_call.1} parent=35 // pred_check
          %p602 = pneg %p247
        $region62: #{tpu_custom_call.1} parent=35 // pred_check_branch
          %604 = sbr.rel (%p602) target = $region64
        $region63: #{tpu_custom_call.1} parent=35 // pred_region
          %p605 = scmp.lt.s32.totalorder %s41, 1
          %s606 = scalar_select %p605, %s41, 1
          %s607 = scalar_lea.vmem %s7, %s606
        $region64: #{tpu_custom_call.1} parent=35 // pred_fallthru
          _
        // Predicated region
        $region65: #{tpu_custom_call.1} parent=35 // pred_check
          %p608 = pneg %p273
        $region66: #{tpu_custom_call.1} parent=35 // pred_check_branch
          %610 = sbr.rel (%p608) target = $region68
        $region67: #{tpu_custom_call.1} parent=35 // pred_region
          %s611 = sand.u32 %s33, 1
          %s612 = scalar_lea.sflag [#allocation10], %s611
          %s613 = sand.u32 %s263, 1
          %s614 = smul.addr %s613, 128
          %s615 = scalar_lea.vmem [#allocation11], %s614
          %s617 = ssub.s32 2048, 2048
          %618 = vsyncadd %s612, %s617
          %s619 = smul.addr %s41, 32
          %s620 = smul.addr %s619, 64
          %s621 = scalar_lea.hbm %s8, %s620
          %s622 = sshll.u32 %s615, 4
          %s623 = int_to_ptr.vmem [resolvable:$true] %s622
          %628 = dma.hbm_to_vmem [thread:$0]  %s621, 2048, %s623, %s612, 128, 128, 8
        $region68: #{tpu_custom_call.1} parent=35 // pred_fallthru
          _
        // Predicated region
        $region69: #{tpu_custom_call.1} parent=35 // pred_check
          %p629 = pneg %p299
        $region70: #{tpu_custom_call.1} parent=35 // pred_check_branch
          %631 = sbr.rel (%p629) target = $region72
        $region71: #{tpu_custom_call.1} parent=35 // pred_region
          %p632 = scmp.lt.s32.totalorder %s41, 1
          %s633 = scalar_select %p632, %s41, 1
          %s634 = smul.addr %s633, 2
          %s635 = scalar_lea.vmem %s9, %s634
        $region72: #{tpu_custom_call.1} parent=35 // pred_fallthru
          _
        // Predicated region
        $region73: #{tpu_custom_call.1} parent=35 // pred_check
          %p636 = pneg %p325
        $region74: #{tpu_custom_call.1} parent=35 // pred_check_branch
          %638 = sbr.rel (%p636) target = $region76
        $region75: #{tpu_custom_call.1} parent=35 // pred_region
          %s639 = sand.u32 %s33, 1
          %s640 = scalar_lea.sflag [#allocation13], %s639
          %s641 = sand.u32 %s315, 1
          %s642 = smul.addr %s641, 128
          %s643 = scalar_lea.vmem [#allocation12], %s642
          %s645 = ssub.s32 2048, 2048
          %646 = vsyncadd %s640, %s645
          %s647 = smul.addr %s41, 32
          %s648 = smul.addr %s647, 64
          %s649 = scalar_lea.hbm %s10, %s648
          %s650 = sshll.u32 %s643, 4
          %s651 = int_to_ptr.vmem [resolvable:$true] %s650
          %656 = dma.hbm_to_vmem [thread:$0]  %s649, 2048, %s651, %s640, 64, 64, 4
        $region76: #{tpu_custom_call.1} parent=35 // pred_fallthru
          _
        // Predicated region
        $region77: #{tpu_custom_call.1} parent=35 // pred_check
          %p657 = pneg %p351
        $region78: #{tpu_custom_call.1} parent=35 // pred_check_branch
          %659 = sbr.rel (%p657) target = $region80
        $region79: #{tpu_custom_call.1} parent=35 // pred_region
          %p660 = scmp.lt.s32.totalorder %s41, 1
          %s661 = scalar_select %p660, %s41, 1
          %s662 = scalar_lea.vmem %s11, %s661
        $region80: #{tpu_custom_call.1} parent=35 // pred_fallthru
          _
      $region36: #{tpu_custom_call.1} parent=5 // pred_fallthru
        _
      %p663 = scmp.le.s32.totalorder 1, %s33
      %p664 = scmp.lt.s32.totalorder %s33, 3
      %p665 = pnand %p663, %p664
      %p666 = pneg %p665
      // Predicated region
      $region81: #{tpu_custom_call.1} parent=5 // pred_check
        _
      $region82: #{tpu_custom_call.1} parent=5 // pred_check_branch
        %668 = sbr.rel (%p665) target = $region84
      $region83: #{tpu_custom_call.1} parent=5 // pred_region
        %s669 = ssub.s32 %s33, 1
        // Predicated region
        $region85: #{tpu_custom_call.1} parent=83 // pred_check
          %p670 = pneg %p71
        $region86: #{tpu_custom_call.1} parent=83 // pred_check_branch
          %672 = sbr.rel (%p670) target = $region88
        $region87: #{tpu_custom_call.1} parent=83 // pred_region
          %673 = dma.done [#allocation4], 512
        $region88: #{tpu_custom_call.1} parent=83 // pred_fallthru
          _
        %s674 = sand.u32 %s38, 1
        %s675 = scalar_lea.sflag [#allocation7], %s674
        %s676 = sand.u32 %s84, 1
        %s677 = scalar_lea.vmem [#allocation6], %s676
        // Predicated region
        $region89: #{tpu_custom_call.1} parent=83 // pred_check
          %p678 = pneg %p97
        $region90: #{tpu_custom_call.1} parent=83 // pred_check_branch
          %680 = sbr.rel (%p678) target = $region92
        $region91: #{tpu_custom_call.1} parent=83 // pred_region
          %681 = dma.done %s675, 16
        $region92: #{tpu_custom_call.1} parent=83 // pred_fallthru
          _
        %s682 = sand.u32 %s38, 1
        %s683 = scalar_lea.sflag [#allocation7], %s682
        %s684 = sand.u32 %s136, 1
        %s685 = smul.addr %s684, 192
        %s686 = scalar_lea.vmem [#allocation8], %s685
        // Predicated region
        $region93: #{tpu_custom_call.1} parent=83 // pred_check
          %p687 = pneg %p149
        $region94: #{tpu_custom_call.1} parent=83 // pred_check_branch
          %689 = sbr.rel (%p687) target = $region96
        $region95: #{tpu_custom_call.1} parent=83 // pred_region
          %690 = dma.done %s683, 3072
        $region96: #{tpu_custom_call.1} parent=83 // pred_fallthru
          _
        %s691 = sand.u32 %s38, 1
        %s692 = scalar_lea.sflag [#allocation10], %s691
        %s693 = sand.u32 %s162, 1
        %s694 = smul.addr %s693, 64
        %s695 = scalar_lea.vmem [#allocation9], %s694
        // Predicated region
        $region97: #{tpu_custom_call.1} parent=83 // pred_check
          %p696 = pneg %p175
        $region98: #{tpu_custom_call.1} parent=83 // pred_check_branch
          %698 = sbr.rel (%p696) target = $region100
        $region99: #{tpu_custom_call.1} parent=83 // pred_region
          %699 = dma.done %s692, 1024
        $region100: #{tpu_custom_call.1} parent=83 // pred_fallthru
          _
        %s700 = sand.u32 %s38, 1
        %s701 = scalar_lea.sflag [#allocation10], %s700
        %s702 = sand.u32 %s266, 1
        %s703 = smul.addr %s702, 128
        %s704 = scalar_lea.vmem [#allocation11], %s703
        // Predicated region
        $region101: #{tpu_custom_call.1} parent=83 // pred_check
          %p705 = pneg %p279
        $region102: #{tpu_custom_call.1} parent=83 // pred_check_branch
          %707 = sbr.rel (%p705) target = $region104
        $region103: #{tpu_custom_call.1} parent=83 // pred_region
          %708 = dma.done %s701, 2048
        $region104: #{tpu_custom_call.1} parent=83 // pred_fallthru
          _
        %s709 = sand.u32 %s38, 1
        %s710 = scalar_lea.sflag [#allocation13], %s709
        %s711 = sand.u32 %s318, 1
        %s712 = smul.addr %s711, 128
        %s713 = scalar_lea.vmem [#allocation12], %s712
        // Predicated region
        $region105: #{tpu_custom_call.1} parent=83 // pred_check
          %p714 = pneg %p331
        $region106: #{tpu_custom_call.1} parent=83 // pred_check_branch
          %716 = sbr.rel (%p714) target = $region108
        $region107: #{tpu_custom_call.1} parent=83 // pred_region
          %717 = dma.done %s710, 2048
        $region108: #{tpu_custom_call.1} parent=83 // pred_fallthru
          _
        // Predicated region
        $region109: #{tpu_custom_call.1} parent=83 // pred_check
          %p718 = pneg %p420
        $region110: #{tpu_custom_call.1} parent=83 // pred_check_branch
          %720 = sbr.rel (%p718) target = $region112
        $region111: #{tpu_custom_call.1} parent=83 // pred_region
          %721 = dma.done [#allocation13], 1024
        $region112: #{tpu_custom_call.1} parent=83 // pred_fallthru
          _
        %p722 = pneg %p71
        %p723 = pneg %p68
        %s724 = sand.u32 %s38, 1
        %s725 = scalar_lea.sflag [#allocation7], %s724
        %s726 = sand.u32 %s84, 1
        %s727 = scalar_lea.vmem [#allocation6], %s726
        %p728 = pneg %p97
        %p729 = pneg %p94
        %p730 = scmp.lt.s32.totalorder %s43, 1
        %s731 = scalar_select %p730, %s43, 1
        %s732 = scalar_lea.vmem %s2, %s731
        %p733 = pneg %p123
        %p734 = pneg %p120
        %s735 = sand.u32 %s38, 1
        %s736 = scalar_lea.sflag [#allocation7], %s735
        %s737 = sand.u32 %s136, 1
        %s738 = smul.addr %s737, 192
        %s739 = scalar_lea.vmem [#allocation8], %s738
        %p740 = pneg %p149
        %p741 = pneg %p146
        %s742 = sand.u32 %s38, 1
        %s743 = scalar_lea.sflag [#allocation10], %s742
        %s744 = sand.u32 %s162, 1
        %s745 = smul.addr %s744, 64
        %s746 = scalar_lea.vmem [#allocation9], %s745
        %p747 = pneg %p175
        %p748 = pneg %p172
        %p749 = scmp.lt.s32.totalorder %s43, 1
        %s750 = scalar_select %p749, %s43, 1
        %s751 = scalar_lea.vmem %s5, %s750
        %p752 = pneg %p201
        %p753 = pneg %p198
        %p754 = scmp.lt.s32.totalorder %s43, 1
        %s755 = scalar_select %p754, %s43, 1
        %s756 = scalar_lea.vmem %s6, %s755
        %p757 = pneg %p227
        %p758 = pneg %p224
        %p759 = scmp.lt.s32.totalorder %s43, 1
        %s760 = scalar_select %p759, %s43, 1
        %s761 = scalar_lea.vmem %s7, %s760
        %p762 = pneg %p253
        %p763 = pneg %p250
        %s764 = sand.u32 %s38, 1
        %s765 = scalar_lea.sflag [#allocation10], %s764
        %s766 = sand.u32 %s266, 1
        %s767 = smul.addr %s766, 128
        %s768 = scalar_lea.vmem [#allocation11], %s767
        %p769 = pneg %p279
        %p770 = pneg %p276
        %p771 = scmp.lt.s32.totalorder %s43, 1
        %s772 = scalar_select %p771, %s43, 1
        %s773 = smul.addr %s772, 2
        %s774 = scalar_lea.vmem %s9, %s773
        %p775 = pneg %p305
        %p776 = pneg %p302
        %s777 = sand.u32 %s38, 1
        %s778 = scalar_lea.sflag [#allocation13], %s777
        %s779 = sand.u32 %s318, 1
        %s780 = smul.addr %s779, 128
        %s781 = scalar_lea.vmem [#allocation12], %s780
        %p782 = pneg %p331
        %p783 = pneg %p328
        %p784 = scmp.lt.s32.totalorder %s43, 1
        %s785 = scalar_select %p784, %s43, 1
        %s786 = scalar_lea.vmem %s11, %s785
        %p787 = pneg %p357
        %p788 = pneg %p354
        %p789 = pneg %p378
        %p790 = pneg %p375
        %p791 = pneg %p399
        %p792 = pneg %p396
        %p793 = pneg %p420
        %p794 = pneg %p417
        %p795 = pneg %p441
        %p796 = pneg %p438
        %p797 = pneg %p467
        %p798 = pneg %p464
        %s799 = smul.u32 2, %s42
        %p800 = scmp.lt.s32.totalorder %s43, 1
        %s801 = scalar_select %p800, %s43, 1
        %s802 = scalar_lea.vmem %s2, %s801
        %p803 = scmp.lt.s32.totalorder %s43, 1
        %s804 = scalar_select %p803, %s43, 1
        %s805 = scalar_lea.vmem %s5, %s804
        %p806 = scmp.lt.s32.totalorder %s43, 1
        %s807 = scalar_select %p806, %s43, 1
        %s808 = scalar_lea.vmem %s6, %s807
        %p809 = scmp.lt.s32.totalorder %s43, 1
        %s810 = scalar_select %p809, %s43, 1
        %s811 = scalar_lea.vmem %s7, %s810
        %p812 = scmp.lt.s32.totalorder %s43, 1
        %s813 = scalar_select %p812, %s43, 1
        %s814 = smul.addr %s813, 2
        %s815 = scalar_lea.vmem %s9, %s814
        %p816 = scmp.lt.s32.totalorder %s43, 1
        %s817 = scalar_select %p816, %s43, 1
        %s818 = scalar_lea.vmem %s11, %s817
        %s819 = smul.u32 2, %s42
        %p821 = scmp.eq.s32.totalorder %s43, 0
        // Predicated region
        $region113: #{tpu_custom_call.1} parent=83 // pred_check
          %p822 = pneg %p821
        $region114: #{tpu_custom_call.1} parent=83 // pred_check_branch
          %824 = sbr.rel (%p822) target = $region116
        $region115: #{tpu_custom_call.1} parent=83 // pred_region
          %v825 = vld [vmem:[#allocation3] sm:$0xff]
          %v826 = vld [vmem:[#allocation3 + $0x8] sm:$0xff]
          %v827 = vld [vmem:[#allocation3 + $0x10] sm:$0xff]
          %v828 = vld [vmem:[#allocation3 + $0x18] sm:$0xff]
          %829 = vst [vmem:[#allocation2] sm:$0xff] %v825
          %830 = vst [vmem:[#allocation2 + $0x8] sm:$0xff] %v826
          %831 = vst [vmem:[#allocation2 + $0x10] sm:$0xff] %v827
          %832 = vst [vmem:[#allocation2 + $0x18] sm:$0xff] %v828
        $region116: #{tpu_custom_call.1} parent=83 // pred_fallthru
          _
        %v833 = vld [vmem:[#allocation2] sm:$0xff]
        %v834 = vld [vmem:[#allocation2 + $0x8] sm:$0xff]
        %v835 = vld [vmem:[#allocation2 + $0x10] sm:$0xff]
        %v836 = vld [vmem:[#allocation2 + $0x18] sm:$0xff]
        %v837 = vld [vmem:[%s677] sm:$0x1]
        %v838 = vld [vmem:[%s802] sm:$0x1]
        %839 = vadd.xlane.f32.xlu0 %v833
        %v840 = vpop.xlane.xlu0 %839
        %841 = vadd.xlane.f32.xlu0 %v834
        %v842 = vpop.xlane.xlu0 %841
        %843 = vadd.xlane.f32.xlu0 %v835
        %v844 = vpop.xlane.xlu0 %843
        %845 = vadd.xlane.f32.xlu0 %v836
        %v846 = vpop.xlane.xlu0 %845
        %v847 = vrcp.pop 128.0
        %v848 = vmul.f32 %v840, %v847
        %v849 = vmul.f32 %v842, %v847
        %v850 = vmul.f32 %v844, %v847
        %v851 = vmul.f32 %v846, %v847
        %v852 = vsub.f32 %v833, %v848
        %v853 = vsub.f32 %v834, %v849
        %v854 = vsub.f32 %v835, %v850
        %v855 = vsub.f32 %v836, %v851
        %v856 = vmul.f32 %v852, %v852
        %v857 = vmul.f32 %v853, %v853
        %v858 = vmul.f32 %v854, %v854
        %v859 = vmul.f32 %v855, %v855
        %860 = vadd.xlane.f32.xlu0 %v856
        %v861 = vpop.xlane.xlu0 %860
        %862 = vadd.xlane.f32.xlu0 %v857
        %v863 = vpop.xlane.xlu0 %862
        %864 = vadd.xlane.f32.xlu0 %v858
        %v865 = vpop.xlane.xlu0 %864
        %866 = vadd.xlane.f32.xlu0 %v859
        %v867 = vpop.xlane.xlu0 %866
        %v868 = vmul.f32 %v861, %v847
        %v869 = vmul.f32 %v863, %v847
        %v870 = vmul.f32 %v865, %v847
        %v871 = vmul.f32 %v867, %v847
        %v872 = vadd.f32 %v868, 1e-05
        %v873 = vadd.f32 %v869, 1e-05
        %v874 = vadd.f32 %v870, 1e-05
        %v875 = vadd.f32 %v871, 1e-05
        %v876 = vrsqrt.pop %v872
        %v877 = vrsqrt.pop %v873
        %v878 = vrsqrt.pop %v874
        %v879 = vrsqrt.pop %v875
        %v880 = vmul.f32 %v852, %v876
        %v881 = vmul.f32 %v853, %v877
        %v882 = vmul.f32 %v854, %v878
        %v883 = vmul.f32 %v855, %v879
        %v885 = vlaneseq
        %v886 = vshrl.u32 %v885, 7
        %v887 = vsub.s32 0, %v886
        %v888 = vrot.slane %v837, %v887
        %v890 = vmul.f32 %v880, %v888
        %v891 = vmul.f32 %v881, %v888
        %v892 = vmul.f32 %v882, %v888
        %v893 = vmul.f32 %v883, %v888
        %v895 = vlaneseq
        %v896 = vshrl.u32 %v895, 7
        %v897 = vsub.s32 0, %v896
        %v898 = vrot.slane %v838, %v897
        %v900 = vadd.f32 %v890, %v898
        %v901 = vadd.f32 %v891, %v898
        %v902 = vadd.f32 %v892, %v898
        %v903 = vadd.f32 %v893, %v898
        %v904 = vpack.c.bf16 %v901, %v900
        %v905 = vpack.c.bf16 %v903, %v902
        %v906 = vld [vmem:[%s686] sm:$0xff]
        %v907 = vld [vmem:[%s686 + $0x8] sm:$0xf]
        %v908 = vld [vmem:[%s686 + $0xc] sm:$0xff]
        %v909 = vld [vmem:[%s686 + $0x14] sm:$0xf]
        %v910 = vld [vmem:[%s686 + $0x18] sm:$0xff]
        %v911 = vld [vmem:[%s686 + $0x20] sm:$0xf]
        %v912 = vld [vmem:[%s686 + $0x24] sm:$0xff]
        %v913 = vld [vmem:[%s686 + $0x2c] sm:$0xf]
        %v914 = vld [vmem:[%s686 + $0x30] sm:$0xff]
        %v915 = vld [vmem:[%s686 + $0x38] sm:$0xf]
        %v916 = vld [vmem:[%s686 + $0x3c] sm:$0xff]
        %v917 = vld [vmem:[%s686 + $0x44] sm:$0xf]
        %v918 = vld [vmem:[%s686 + $0x48] sm:$0xff]
        %v919 = vld [vmem:[%s686 + $0x50] sm:$0xf]
        %v920 = vld [vmem:[%s686 + $0x54] sm:$0xff]
        %v921 = vld [vmem:[%s686 + $0x5c] sm:$0xf]
        %v922 = vld [vmem:[%s686 + $0x60] sm:$0xff]
        %v923 = vld [vmem:[%s686 + $0x68] sm:$0xf]
        %v924 = vld [vmem:[%s686 + $0x6c] sm:$0xff]
        %v925 = vld [vmem:[%s686 + $0x74] sm:$0xf]
        %v926 = vld [vmem:[%s686 + $0x78] sm:$0xff]
        %v927 = vld [vmem:[%s686 + $0x80] sm:$0xf]
        %v928 = vld [vmem:[%s686 + $0x84] sm:$0xff]
        %v929 = vld [vmem:[%s686 + $0x8c] sm:$0xf]
        %v930 = vld [vmem:[%s686 + $0x90] sm:$0xff]
        %v931 = vld [vmem:[%s686 + $0x98] sm:$0xf]
        %v932 = vld [vmem:[%s686 + $0x9c] sm:$0xff]
        %v933 = vld [vmem:[%s686 + $0xa4] sm:$0xf]
        %v934 = vld [vmem:[%s686 + $0xa8] sm:$0xff]
        %v935 = vld [vmem:[%s686 + $0xb0] sm:$0xf]
        %v936 = vld [vmem:[%s686 + $0xb4] sm:$0xff]
        %v937 = vld [vmem:[%s686 + $0xbc] sm:$0xf]
        %v970 = vunpack.c.l.b16 %v906
        %v971 = vunpack.c.h.b16 %v906
        %v972 = vunpack.c.l.b16 %v907
        %v973 = vunpack.c.l.b16 %v908
        %v974 = vunpack.c.h.b16 %v908
        %v975 = vunpack.c.l.b16 %v909
        %v976 = vunpack.c.l.b16 %v910
        %v977 = vunpack.c.h.b16 %v910
        %v978 = vunpack.c.l.b16 %v911
        %v979 = vunpack.c.l.b16 %v912
        %v980 = vunpack.c.h.b16 %v912
        %v981 = vunpack.c.l.b16 %v913
        %v982 = vunpack.c.l.b16 %v914
        %v983 = vunpack.c.h.b16 %v914
        %v984 = vunpack.c.l.b16 %v915
        %v985 = vunpack.c.l.b16 %v916
        %v986 = vunpack.c.h.b16 %v916
        %v987 = vunpack.c.l.b16 %v917
        %v988 = vunpack.c.l.b16 %v918
        %v989 = vunpack.c.h.b16 %v918
        %v990 = vunpack.c.l.b16 %v919
        %v991 = vunpack.c.l.b16 %v920
        %v992 = vunpack.c.h.b16 %v920
        %v993 = vunpack.c.l.b16 %v921
        %v994 = vunpack.c.l.b16 %v922
        %v995 = vunpack.c.h.b16 %v922
        %v996 = vunpack.c.l.b16 %v923
        %v997 = vunpack.c.l.b16 %v924
        %v998 = vunpack.c.h.b16 %v924
        %v999 = vunpack.c.l.b16 %v925
        %v1000 = vunpack.c.l.b16 %v926
        %v1001 = vunpack.c.h.b16 %v926
        %v1002 = vunpack.c.l.b16 %v927
        %v1003 = vunpack.c.l.b16 %v928
        %v1004 = vunpack.c.h.b16 %v928
        %v1005 = vunpack.c.l.b16 %v929
        %v1006 = vunpack.c.l.b16 %v930
        %v1007 = vunpack.c.h.b16 %v930
        %v1008 = vunpack.c.l.b16 %v931
        %v1009 = vunpack.c.l.b16 %v932
        %v1010 = vunpack.c.h.b16 %v932
        %v1011 = vunpack.c.l.b16 %v933
        %v1012 = vunpack.c.l.b16 %v934
        %v1013 = vunpack.c.h.b16 %v934
        %v1014 = vunpack.c.l.b16 %v935
        %v1015 = vunpack.c.l.b16 %v936
        %v1016 = vunpack.c.h.b16 %v936
        %v1017 = vunpack.c.l.b16 %v937
        %v1018 = vpack.c.b16 %v973, %v970
        %v1019 = vpack.c.b16 %v974, %v971
        %v1020 = vpack.c.b16 %v975, %v972
        %v1021 = vpack.c.b16 %v979, %v976
        %v1022 = vpack.c.b16 %v980, %v977
        %v1023 = vpack.c.b16 %v981, %v978
        %v1024 = vpack.c.b16 %v985, %v982
        %v1025 = vpack.c.b16 %v986, %v983
        %v1026 = vpack.c.b16 %v987, %v984
        %v1027 = vpack.c.b16 %v991, %v988
        %v1028 = vpack.c.b16 %v992, %v989
        %v1029 = vpack.c.b16 %v993, %v990
        %v1030 = vpack.c.b16 %v997, %v994
        %v1031 = vpack.c.b16 %v998, %v995
        %v1032 = vpack.c.b16 %v999, %v996
        %v1033 = vpack.c.b16 %v1003, %v1000
        %v1034 = vpack.c.b16 %v1004, %v1001
        %v1035 = vpack.c.b16 %v1005, %v1002
        %v1036 = vpack.c.b16 %v1009, %v1006
        %v1037 = vpack.c.b16 %v1010, %v1007
        %v1038 = vpack.c.b16 %v1011, %v1008
        %v1039 = vpack.c.b16 %v1015, %v1012
        %v1040 = vpack.c.b16 %v1016, %v1013
        %v1041 = vpack.c.b16 %v1017, %v1014
        %1066 = vmatprep.subr.bf16.mxu0 %v1040
        %1067 = vmatpush1.bf16.msra.mxu0 %v1039
        %1068 = vmatprep.subr.bf16.mxu0 %v1037
        %1069 = vmatpush1.bf16.msra.mxu0 %v1036
        %1070 = vmatprep.subr.bf16.mxu0 %v1034
        %1071 = vmatpush1.bf16.msra.mxu0 %v1033
        %1072 = vmatprep.subr.bf16.mxu0 %v1031
        %1073 = vmatpush1.bf16.msra.mxu0 %v1030
        %1074 = vmatprep.subr.bf16.mxu0 %v1028
        %1075 = vmatpush1.bf16.msra.mxu0 %v1027
        %1076 = vmatprep.subr.bf16.mxu0 %v1025
        %1077 = vmatpush1.bf16.msra.mxu0 %v1024
        %1078 = vmatprep.subr.bf16.mxu0 %v1022
        %1079 = vmatpush1.bf16.msra.mxu0 %v1021
        %1080 = vmatprep.subr.bf16.mxu0 %v1019
        %1081 = vmatpush1.bf16.msra.mxu0 %v1018
        %1082 = vmatprep.subr.bf16.mxu0 0
        %1083 = vmatpush2.bf16.msra.mxu0 0
        %1084 = vmatprep.subr.bf16.mxu0 0
        %1085 = vmatpush2.bf16.msra.mxu0 0
        %1086 = vmatprep.subr.bf16.mxu0 0
        %1087 = vmatpush2.bf16.msra.mxu0 0
        %1088 = vmatprep.subr.bf16.mxu0 0
        %1089 = vmatpush2.bf16.msra.mxu0 0
        %1090 = vmatprep.subr.bf16.mxu0 0
        %1091 = vmatpush2.bf16.msra.mxu0 0
        %1092 = vmatprep.subr.bf16.mxu0 0
        %1093 = vmatpush2.bf16.msra.mxu0 0
        %1094 = vmatprep.subr.bf16.mxu0 0
        %1095 = vmatpush2.bf16.msra.mxu0 0
        %1096 = vmatprep.subr.bf16.mxu0 0
        %1097 = vmatpush2.bf16.msra.mxu0 0
        %1098 = vmatprep.mubr.bf16.mxu0 0
        %1099 = vmatmul.mubr.bf16.gmra.mxu0 %v904
        %v1100 = vpop.f32.mrf.mxu0
        %v1101 = vadd.f32 0.0, %v1100
        %v1102 = vpop.f32.mrf.mxu0
        %v1103 = vadd.f32 0.0, %v1102
        %v1104 = vpop.f32.mrf.mxu0
        %v1105 = vadd.f32 0.0, %v1104
        %v1106 = vpop.f32.mrf.mxu0
        %v1107 = vadd.f32 0.0, %v1106
        %1108 = vmatprep.mubr.bf16.mxu0 0
        %1109 = vmatmul.mubr.bf16.gmra.mxu0 %v905
        %v1110 = vpop.f32.mrf.mxu0
        %v1111 = vadd.f32 0.0, %v1110
        %v1112 = vpop.f32.mrf.mxu0
        %v1113 = vadd.f32 0.0, %v1112
        %v1114 = vpop.f32.mrf.mxu0
        %v1115 = vadd.f32 0.0, %v1114
        %v1116 = vpop.f32.mrf.mxu0
        %v1117 = vadd.f32 0.0, %v1116
        %1118 = vdwg.mxu0
        %1119 = vmatprep.subr.bf16.mxu0 0
        %1120 = vmatpush1.bf16.msra.mxu0 %v1041
        %1121 = vmatprep.subr.bf16.mxu0 0
        %1122 = vmatpush1.bf16.msra.mxu0 %v1038
        %1123 = vmatprep.subr.bf16.mxu0 0
        %1124 = vmatpush1.bf16.msra.mxu0 %v1035
        %1125 = vmatprep.subr.bf16.mxu0 0
        %1126 = vmatpush1.bf16.msra.mxu0 %v1032
        %1127 = vmatprep.subr.bf16.mxu0 0
        %1128 = vmatpush1.bf16.msra.mxu0 %v1029
        %1129 = vmatprep.subr.bf16.mxu0 0
        %1130 = vmatpush1.bf16.msra.mxu0 %v1026
        %1131 = vmatprep.subr.bf16.mxu0 0
        %1132 = vmatpush1.bf16.msra.mxu0 %v1023
        %1133 = vmatprep.subr.bf16.mxu0 0
        %1134 = vmatpush1.bf16.msra.mxu0 %v1020
        %1135 = vmatprep.subr.bf16.mxu0 0
        %1136 = vmatpush2.bf16.msra.mxu0 0
        %1137 = vmatprep.subr.bf16.mxu0 0
        %1138 = vmatpush2.bf16.msra.mxu0 0
        %1139 = vmatprep.subr.bf16.mxu0 0
        %1140 = vmatpush2.bf16.msra.mxu0 0
        %1141 = vmatprep.subr.bf16.mxu0 0
        %1142 = vmatpush2.bf16.msra.mxu0 0
        %1143 = vmatprep.subr.bf16.mxu0 0
        %1144 = vmatpush2.bf16.msra.mxu0 0
        %1145 = vmatprep.subr.bf16.mxu0 0
        %1146 = vmatpush2.bf16.msra.mxu0 0
        %1147 = vmatprep.subr.bf16.mxu0 0
        %1148 = vmatpush2.bf16.msra.mxu0 0
        %1149 = vmatprep.subr.bf16.mxu0 0
        %1150 = vmatpush2.bf16.msra.mxu0 0
        %1151 = vmatprep.mubr.bf16.mxu0 0
        %1152 = vmatmul.mubr.bf16.gmra.mxu0 %v904
        %v1153 = vpop.f32.mrf.mxu0
        %v1154 = vadd.f32 0.0, %v1153
        %v1155 = vpop.f32.mrf.mxu0
        %v1156 = vpop.f32.mrf.mxu0
        %v1157 = vadd.f32 0.0, %v1156
        %v1158 = vpop.f32.mrf.mxu0
        %1159 = vmatprep.mubr.bf16.mxu0 0
        %1160 = vmatmul.mubr.bf16.gmra.mxu0 %v905
        %v1161 = vpop.f32.mrf.mxu0
        %v1162 = vadd.f32 0.0, %v1161
        %v1163 = vpop.f32.mrf.mxu0
        %v1164 = vpop.f32.mrf.mxu0
        %v1165 = vadd.f32 0.0, %v1164
        %v1166 = vpop.f32.mrf.mxu0
        %1167 = vdwg.mxu0
        %v1168 = vpack.c.bf16 %v1105, %v1101
        %v1169 = vpack.c.bf16 %v1115, %v1111
        %v1170 = vpack.c.bf16 %v1107, %v1103
        %v1171 = vpack.c.bf16 %v1117, %v1113
        %vm1172 = vcmask 261120
        %v1174 = vsel %vm1172, %v1168, 0
        %v1177 = vsel %vm1172, %v1170, 0
        %1179 = vmatprep.subr.bf16.mxu0 0
        %1180 = vmatpush1.bf16.xpose.msra.mxu0 0
        %1181 = vmatprep.subr.bf16.mxu0 0
        %1182 = vmatpush1.bf16.xpose.msra.mxu0 0
        %1183 = vmatprep.subr.bf16.mxu0 0
        %1184 = vmatpush1.bf16.xpose.msra.mxu0 0
        %1185 = vmatprep.subr.bf16.mxu0 0
        %1186 = vmatpush1.bf16.xpose.msra.mxu0 0
        %1187 = vmatprep.subr.bf16.mxu0 0
        %1188 = vmatpush1.bf16.xpose.msra.mxu0 0
        %1189 = vmatprep.subr.bf16.mxu0 0
        %1190 = vmatpush1.bf16.xpose.msra.mxu0 0
        %1191 = vmatprep.subr.bf16.mxu0 0
        %1192 = vmatpush1.bf16.xpose.msra.mxu0 0
        %1193 = vmatprep.subr.bf16.mxu0 0
        %1194 = vmatpush1.bf16.xpose.msra.mxu0 %v1177
        %1195 = vmatprep.subr.bf16.mxu0 0
        %1196 = vmatpush2.bf16.xpose.msra.mxu0 0
        %1197 = vmatprep.subr.bf16.mxu0 0
        %1198 = vmatpush2.bf16.xpose.msra.mxu0 0
        %1199 = vmatprep.subr.bf16.mxu0 0
        %1200 = vmatpush2.bf16.xpose.msra.mxu0 0
        %1201 = vmatprep.subr.bf16.mxu0 0
        %1202 = vmatpush2.bf16.xpose.msra.mxu0 0
        %1203 = vmatprep.subr.bf16.mxu0 0
        %1204 = vmatpush2.bf16.xpose.msra.mxu0 0
        %1205 = vmatprep.subr.bf16.mxu0 0
        %1206 = vmatpush2.bf16.xpose.msra.mxu0 0
        %1207 = vmatprep.subr.bf16.mxu0 0
        %1208 = vmatpush2.bf16.xpose.msra.mxu0 0
        %1209 = vmatprep.subr.bf16.mxu0 0
        %1210 = vmatpush2.bf16.xpose.msra.mxu0 0
        %1211 = vmatprep.mubr.bf16.mxu0 0
        %1212 = vmatmul.mubr.bf16.gmra.mxu0 %v1174
        %v1213 = vpop.f32.mrf.mxu0
        %v1214 = vadd.f32 0.0, %v1213
        %v1215 = vpop.f32.mrf.mxu0
        %v1216 = vpop.f32.mrf.mxu0
        %v1217 = vadd.f32 0.0, %v1216
        %v1218 = vpop.f32.mrf.mxu0
        %1219 = vdwg.mxu0
        %v1221 = vsel %vm1172, %v1169, 0
        %v1224 = vsel %vm1172, %v1171, 0
        %1226 = vmatprep.subr.bf16.mxu0 0
        %1227 = vmatpush1.bf16.xpose.msra.mxu0 0
        %1228 = vmatprep.subr.bf16.mxu0 0
        %1229 = vmatpush1.bf16.xpose.msra.mxu0 0
        %1230 = vmatprep.subr.bf16.mxu0 0
        %1231 = vmatpush1.bf16.xpose.msra.mxu0 0
        %1232 = vmatprep.subr.bf16.mxu0 0
        %1233 = vmatpush1.bf16.xpose.msra.mxu0 0
        %1234 = vmatprep.subr.bf16.mxu0 0
        %1235 = vmatpush1.bf16.xpose.msra.mxu0 0
        %1236 = vmatprep.subr.bf16.mxu0 0
        %1237 = vmatpush1.bf16.xpose.msra.mxu0 0
        %1238 = vmatprep.subr.bf16.mxu0 0
        %1239 = vmatpush1.bf16.xpose.msra.mxu0 0
        %1240 = vmatprep.subr.bf16.mxu0 0
        %1241 = vmatpush1.bf16.xpose.msra.mxu0 %v1224
        %1242 = vmatprep.subr.bf16.mxu0 0
        %1243 = vmatpush2.bf16.xpose.msra.mxu0 0
        %1244 = vmatprep.subr.bf16.mxu0 0
        %1245 = vmatpush2.bf16.xpose.msra.mxu0 0
        %1246 = vmatprep.subr.bf16.mxu0 0
        %1247 = vmatpush2.bf16.xpose.msra.mxu0 0
        %1248 = vmatprep.subr.bf16.mxu0 0
        %1249 = vmatpush2.bf16.xpose.msra.mxu0 0
        %1250 = vmatprep.subr.bf16.mxu0 0
        %1251 = vmatpush2.bf16.xpose.msra.mxu0 0
        %1252 = vmatprep.subr.bf16.mxu0 0
        %1253 = vmatpush2.bf16.xpose.msra.mxu0 0
        %1254 = vmatprep.subr.bf16.mxu0 0
        %1255 = vmatpush2.bf16.xpose.msra.mxu0 0
        %1256 = vmatprep.subr.bf16.mxu0 0
        %1257 = vmatpush2.bf16.xpose.msra.mxu0 0
        %1258 = vmatprep.mubr.bf16.mxu0 0
        %1259 = vmatmul.mubr.bf16.gmra.mxu0 %v1221
        %v1260 = vpop.f32.mrf.mxu0
        %v1261 = vadd.f32 0.0, %v1260
        %v1262 = vpop.f32.mrf.mxu0
        %v1263 = vpop.f32.mrf.mxu0
        %v1264 = vadd.f32 0.0, %v1263
        %v1265 = vpop.f32.mrf.mxu0
        %1266 = vdwg.mxu0
        %vm1267 = vcmask 130048
        %v1268 = vsel %vm1267, %v1214, -inf
        %1269 = vmax.xlane.f32.xlu0 %v1268
        %v1270 = vpop.xlane.xlu0 %1269
        %v1271 = vsel %vm1267, %v1217, -inf
        %1272 = vmax.xlane.f32.xlu0 %v1271
        %v1273 = vpop.xlane.xlu0 %1272
        %v1274 = vsel %vm1267, %v1261, -inf
        %1275 = vmax.xlane.f32.xlu0 %v1274
        %v1276 = vpop.xlane.xlu0 %1275
        %v1277 = vsel %vm1267, %v1264, -inf
        %1278 = vmax.xlane.f32.xlu0 %v1277
        %v1279 = vpop.xlane.xlu0 %1278
        %v1280 = vsub.f32 %v1214, %v1270
        %v1281 = vsub.f32 %v1217, %v1273
        %v1282 = vsub.f32 %v1261, %v1276
        %v1283 = vsub.f32 %v1264, %v1279
        %v1284 = vmul.f32 %v1280, 1.442695
        %v1285 = vpow.pop %v1284
        %v1286 = vmul.f32 %v1281, 1.442695
        %v1287 = vpow.pop %v1286
        %v1288 = vmul.f32 %v1282, 1.442695
        %v1289 = vpow.pop %v1288
        %v1290 = vmul.f32 %v1283, 1.442695
        %v1291 = vpow.pop %v1290
        %v1292 = vsel %vm1267, %v1285, 0.0
        %1293 = vadd.xlane.f32.xlu0 %v1292
        %v1294 = vpop.xlane.xlu0 %1293
        %v1295 = vsel %vm1267, %v1287, 0.0
        %1296 = vadd.xlane.f32.xlu0 %v1295
        %v1297 = vpop.xlane.xlu0 %1296
        %v1298 = vsel %vm1267, %v1289, 0.0
        %1299 = vadd.xlane.f32.xlu0 %v1298
        %v1300 = vpop.xlane.xlu0 %1299
        %v1301 = vsel %vm1267, %v1291, 0.0
        %1302 = vadd.xlane.f32.xlu0 %v1301
        %v1303 = vpop.xlane.xlu0 %1302
        %v1304 = vrcp.pop %v1294
        %v1305 = vrcp.pop %v1297
        %v1306 = vrcp.pop %v1300
        %v1307 = vrcp.pop %v1303
        %v1308 = vmul.f32 %v1285, %v1304
        %v1309 = vmul.f32 %v1287, %v1305
        %v1310 = vmul.f32 %v1289, %v1306
        %v1311 = vmul.f32 %v1291, %v1307
        %v1312 = vpack.c.bf16 %v1309, %v1308
        %v1313 = vpack.c.bf16 %v1311, %v1310
        %v1314 = vpack.c.bf16 %v1157, %v1154
        %v1315 = vpack.c.bf16 %v1165, %v1162
        %v1317 = vsel %vm1267, %v1312, 0
        %1319 = vmatprep.subr.bf16.mxu0 0
        %1320 = vmatpush1.bf16.msra.mxu0 0
        %1321 = vmatprep.subr.bf16.mxu0 0
        %1322 = vmatpush1.bf16.msra.mxu0 0
        %1323 = vmatprep.subr.bf16.mxu0 0
        %1324 = vmatpush1.bf16.msra.mxu0 0
        %1325 = vmatprep.subr.bf16.mxu0 0
        %1326 = vmatpush1.bf16.msra.mxu0 0
        %1327 = vmatprep.subr.bf16.mxu0 0
        %1328 = vmatpush1.bf16.msra.mxu0 0
        %1329 = vmatprep.subr.bf16.mxu0 0
        %1330 = vmatpush1.bf16.msra.mxu0 0
        %1331 = vmatprep.subr.bf16.mxu0 0
        %1332 = vmatpush1.bf16.msra.mxu0 0
        %1333 = vmatprep.subr.bf16.mxu0 0
        %1334 = vmatpush1.bf16.msra.mxu0 %v1314
        %1335 = vmatprep.subr.bf16.mxu0 0
        %1336 = vmatpush2.bf16.msra.mxu0 0
        %1337 = vmatprep.subr.bf16.mxu0 0
        %1338 = vmatpush2.bf16.msra.mxu0 0
        %1339 = vmatprep.subr.bf16.mxu0 0
        %1340 = vmatpush2.bf16.msra.mxu0 0
        %1341 = vmatprep.subr.bf16.mxu0 0
        %1342 = vmatpush2.bf16.msra.mxu0 0
        %1343 = vmatprep.subr.bf16.mxu0 0
        %1344 = vmatpush2.bf16.msra.mxu0 0
        %1345 = vmatprep.subr.bf16.mxu0 0
        %1346 = vmatpush2.bf16.msra.mxu0 0
        %1347 = vmatprep.subr.bf16.mxu0 0
        %1348 = vmatpush2.bf16.msra.mxu0 0
        %1349 = vmatprep.subr.bf16.mxu0 0
        %1350 = vmatpush2.bf16.msra.mxu0 0
        %1351 = vmatprep.mubr.bf16.mxu0 0
        %1352 = vmatmul.mubr.bf16.gmra.mxu0 %v1317
        %v1353 = vpop.f32.mrf.mxu0
        %v1354 = vadd.f32 0.0, %v1353
        %v1355 = vpop.f32.mrf.mxu0
        %v1356 = vpop.f32.mrf.mxu0
        %v1357 = vadd.f32 0.0, %v1356
        %v1358 = vpop.f32.mrf.mxu0
        %1359 = vdwg.mxu0
        %v1361 = vsel %vm1267, %v1313, 0
        %1363 = vmatprep.subr.bf16.mxu0 0
        %1364 = vmatpush1.bf16.msra.mxu0 0
        %1365 = vmatprep.subr.bf16.mxu0 0
        %1366 = vmatpush1.bf16.msra.mxu0 0
        %1367 = vmatprep.subr.bf16.mxu0 0
        %1368 = vmatpush1.bf16.msra.mxu0 0
        %1369 = vmatprep.subr.bf16.mxu0 0
        %1370 = vmatpush1.bf16.msra.mxu0 0
        %1371 = vmatprep.subr.bf16.mxu0 0
        %1372 = vmatpush1.bf16.msra.mxu0 0
        %1373 = vmatprep.subr.bf16.mxu0 0
        %1374 = vmatpush1.bf16.msra.mxu0 0
        %1375 = vmatprep.subr.bf16.mxu0 0
        %1376 = vmatpush1.bf16.msra.mxu0 0
        %1377 = vmatprep.subr.bf16.mxu0 0
        %1378 = vmatpush1.bf16.msra.mxu0 %v1315
        %1379 = vmatprep.subr.bf16.mxu0 0
        %1380 = vmatpush2.bf16.msra.mxu0 0
        %1381 = vmatprep.subr.bf16.mxu0 0
        %1382 = vmatpush2.bf16.msra.mxu0 0
        %1383 = vmatprep.subr.bf16.mxu0 0
        %1384 = vmatpush2.bf16.msra.mxu0 0
        %1385 = vmatprep.subr.bf16.mxu0 0
        %1386 = vmatpush2.bf16.msra.mxu0 0
        %1387 = vmatprep.subr.bf16.mxu0 0
        %1388 = vmatpush2.bf16.msra.mxu0 0
        %1389 = vmatprep.subr.bf16.mxu0 0
        %1390 = vmatpush2.bf16.msra.mxu0 0
        %1391 = vmatprep.subr.bf16.mxu0 0
        %1392 = vmatpush2.bf16.msra.mxu0 0
        %1393 = vmatprep.subr.bf16.mxu0 0
        %1394 = vmatpush2.bf16.msra.mxu0 0
        %1395 = vmatprep.mubr.bf16.mxu0 0
        %1396 = vmatmul.mubr.bf16.gmra.mxu0 %v1361
        %v1397 = vpop.f32.mrf.mxu0
        %v1398 = vadd.f32 0.0, %v1397
        %v1399 = vpop.f32.mrf.mxu0
        %v1400 = vpop.f32.mrf.mxu0
        %v1401 = vadd.f32 0.0, %v1400
        %v1402 = vpop.f32.mrf.mxu0
        %1403 = vdwg.mxu0
        %1405 = vrot.lane.b32.xlu0 %v1168, 96
        %v1406 = vpop.permute.xlu0 %1405
        %1408 = vrot.lane.b32.xlu0 %v1170, 96
        %v1409 = vpop.permute.xlu0 %1408
        %v1411 = vsel %vm1172, %v1406, 0
        %v1414 = vsel %vm1172, %v1409, 0
        %1416 = vmatprep.subr.bf16.mxu0 0
        %1417 = vmatpush1.bf16.xpose.msra.mxu0 0
        %1418 = vmatprep.subr.bf16.mxu0 0
        %1419 = vmatpush1.bf16.xpose.msra.mxu0 0
        %1420 = vmatprep.subr.bf16.mxu0 0
        %1421 = vmatpush1.bf16.xpose.msra.mxu0 0
        %1422 = vmatprep.subr.bf16.mxu0 0
        %1423 = vmatpush1.bf16.xpose.msra.mxu0 0
        %1424 = vmatprep.subr.bf16.mxu0 0
        %1425 = vmatpush1.bf16.xpose.msra.mxu0 0
        %1426 = vmatprep.subr.bf16.mxu0 0
        %1427 = vmatpush1.bf16.xpose.msra.mxu0 0
        %1428 = vmatprep.subr.bf16.mxu0 0
        %1429 = vmatpush1.bf16.xpose.msra.mxu0 0
        %1430 = vmatprep.subr.bf16.mxu0 0
        %1431 = vmatpush1.bf16.xpose.msra.mxu0 %v1414
        %1432 = vmatprep.subr.bf16.mxu0 0
        %1433 = vmatpush2.bf16.xpose.msra.mxu0 0
        %1434 = vmatprep.subr.bf16.mxu0 0
        %1435 = vmatpush2.bf16.xpose.msra.mxu0 0
        %1436 = vmatprep.subr.bf16.mxu0 0
        %1437 = vmatpush2.bf16.xpose.msra.mxu0 0
        %1438 = vmatprep.subr.bf16.mxu0 0
        %1439 = vmatpush2.bf16.xpose.msra.mxu0 0
        %1440 = vmatprep.subr.bf16.mxu0 0
        %1441 = vmatpush2.bf16.xpose.msra.mxu0 0
        %1442 = vmatprep.subr.bf16.mxu0 0
        %1443 = vmatpush2.bf16.xpose.msra.mxu0 0
        %1444 = vmatprep.subr.bf16.mxu0 0
        %1445 = vmatpush2.bf16.xpose.msra.mxu0 0
        %1446 = vmatprep.subr.bf16.mxu0 0
        %1447 = vmatpush2.bf16.xpose.msra.mxu0 0
        %1448 = vmatprep.mubr.bf16.mxu0 0
        %1449 = vmatmul.mubr.bf16.gmra.mxu0 %v1411
        %v1450 = vpop.f32.mrf.mxu0
        %v1451 = vadd.f32 0.0, %v1450
        %v1452 = vpop.f32.mrf.mxu0
        %v1453 = vpop.f32.mrf.mxu0
        %v1454 = vadd.f32 0.0, %v1453
        %v1455 = vpop.f32.mrf.mxu0
        %1456 = vdwg.mxu0
        %1458 = vrot.lane.b32.xlu0 %v1169, 96
        %v1459 = vpop.permute.xlu0 %1458
        %1461 = vrot.lane.b32.xlu0 %v1171, 96
        %v1462 = vpop.permute.xlu0 %1461
        %v1464 = vsel %vm1172, %v1459, 0
        %v1467 = vsel %vm1172, %v1462, 0
        %1469 = vmatprep.subr.bf16.mxu0 0
        %1470 = vmatpush1.bf16.xpose.msra.mxu0 0
        %1471 = vmatprep.subr.bf16.mxu0 0
        %1472 = vmatpush1.bf16.xpose.msra.mxu0 0
        %1473 = vmatprep.subr.bf16.mxu0 0
        %1474 = vmatpush1.bf16.xpose.msra.mxu0 0
        %1475 = vmatprep.subr.bf16.mxu0 0
        %1476 = vmatpush1.bf16.xpose.msra.mxu0 0
        %1477 = vmatprep.subr.bf16.mxu0 0
        %1478 = vmatpush1.bf16.xpose.msra.mxu0 0
        %1479 = vmatprep.subr.bf16.mxu0 0
        %1480 = vmatpush1.bf16.xpose.msra.mxu0 0
        %1481 = vmatprep.subr.bf16.mxu0 0
        %1482 = vmatpush1.bf16.xpose.msra.mxu0 0
        %1483 = vmatprep.subr.bf16.mxu0 0
        %1484 = vmatpush1.bf16.xpose.msra.mxu0 %v1467
        %1485 = vmatprep.subr.bf16.mxu0 0
        %1486 = vmatpush2.bf16.xpose.msra.mxu0 0
        %1487 = vmatprep.subr.bf16.mxu0 0
        %1488 = vmatpush2.bf16.xpose.msra.mxu0 0
        %1489 = vmatprep.subr.bf16.mxu0 0
        %1490 = vmatpush2.bf16.xpose.msra.mxu0 0
        %1491 = vmatprep.subr.bf16.mxu0 0
        %1492 = vmatpush2.bf16.xpose.msra.mxu0 0
        %1493 = vmatprep.subr.bf16.mxu0 0
        %1494 = vmatpush2.bf16.xpose.msra.mxu0 0
        %1495 = vmatprep.subr.bf16.mxu0 0
        %1496 = vmatpush2.bf16.xpose.msra.mxu0 0
        %1497 = vmatprep.subr.bf16.mxu0 0
        %1498 = vmatpush2.bf16.xpose.msra.mxu0 0
        %1499 = vmatprep.subr.bf16.mxu0 0
        %1500 = vmatpush2.bf16.xpose.msra.mxu0 0
        %1501 = vmatprep.mubr.bf16.mxu0 0
        %1502 = vmatmul.mubr.bf16.gmra.mxu0 %v1464
        %v1503 = vpop.f32.mrf.mxu0
        %v1504 = vadd.f32 0.0, %v1503
        %v1505 = vpop.f32.mrf.mxu0
        %v1506 = vpop.f32.mrf.mxu0
        %v1507 = vadd.f32 0.0, %v1506
        %v1508 = vpop.f32.mrf.mxu0
        %1509 = vdwg.mxu0
        %v1510 = vsel %vm1267, %v1451, -inf
        %1511 = vmax.xlane.f32.xlu0 %v1510
        %v1512 = vpop.xlane.xlu0 %1511
        %v1513 = vsel %vm1267, %v1454, -inf
        %1514 = vmax.xlane.f32.xlu0 %v1513
        %v1515 = vpop.xlane.xlu0 %1514
        %v1516 = vsel %vm1267, %v1504, -inf
        %1517 = vmax.xlane.f32.xlu0 %v1516
        %v1518 = vpop.xlane.xlu0 %1517
        %v1519 = vsel %vm1267, %v1507, -inf
        %1520 = vmax.xlane.f32.xlu0 %v1519
        %v1521 = vpop.xlane.xlu0 %1520
        %v1522 = vsub.f32 %v1451, %v1512
        %v1523 = vsub.f32 %v1454, %v1515
        %v1524 = vsub.f32 %v1504, %v1518
        %v1525 = vsub.f32 %v1507, %v1521
        %v1526 = vmul.f32 %v1522, 1.442695
        %v1527 = vpow.pop %v1526
        %v1528 = vmul.f32 %v1523, 1.442695
        %v1529 = vpow.pop %v1528
        %v1530 = vmul.f32 %v1524, 1.442695
        %v1531 = vpow.pop %v1530
        %v1532 = vmul.f32 %v1525, 1.442695
        %v1533 = vpow.pop %v1532
        %v1534 = vsel %vm1267, %v1527, 0.0
        %1535 = vadd.xlane.f32.xlu0 %v1534
        %v1536 = vpop.xlane.xlu0 %1535
        %v1537 = vsel %vm1267, %v1529, 0.0
        %1538 = vadd.xlane.f32.xlu0 %v1537
        %v1539 = vpop.xlane.xlu0 %1538
        %v1540 = vsel %vm1267, %v1531, 0.0
        %1541 = vadd.xlane.f32.xlu0 %v1540
        %v1542 = vpop.xlane.xlu0 %1541
        %v1543 = vsel %vm1267, %v1533, 0.0
        %1544 = vadd.xlane.f32.xlu0 %v1543
        %v1545 = vpop.xlane.xlu0 %1544
        %v1546 = vrcp.pop %v1536
        %v1547 = vrcp.pop %v1539
        %v1548 = vrcp.pop %v1542
        %v1549 = vrcp.pop %v1545
        %v1550 = vmul.f32 %v1527, %v1546
        %v1551 = vmul.f32 %v1529, %v1547
        %v1552 = vmul.f32 %v1531, %v1548
        %v1553 = vmul.f32 %v1533, %v1549
        %v1554 = vpack.c.bf16 %v1551, %v1550
        %v1555 = vpack.c.bf16 %v1553, %v1552
        %1557 = vrot.lane.b32.xlu0 %v1314, 96
        %v1558 = vpop.permute.xlu0 %1557
        %v1561 = vsel %vm1267, %v1554, 0
        %1563 = vmatprep.subr.bf16.mxu0 0
        %1564 = vmatpush1.bf16.msra.mxu0 0
        %1565 = vmatprep.subr.bf16.mxu0 0
        %1566 = vmatpush1.bf16.msra.mxu0 0
        %1567 = vmatprep.subr.bf16.mxu0 0
        %1568 = vmatpush1.bf16.msra.mxu0 0
        %1569 = vmatprep.subr.bf16.mxu0 0
        %1570 = vmatpush1.bf16.msra.mxu0 0
        %1571 = vmatprep.subr.bf16.mxu0 0
        %1572 = vmatpush1.bf16.msra.mxu0 0
        %1573 = vmatprep.subr.bf16.mxu0 0
        %1574 = vmatpush1.bf16.msra.mxu0 0
        %1575 = vmatprep.subr.bf16.mxu0 0
        %1576 = vmatpush1.bf16.msra.mxu0 0
        %1577 = vmatprep.subr.bf16.mxu0 0
        %1578 = vmatpush1.bf16.msra.mxu0 %v1558
        %1579 = vmatprep.subr.bf16.mxu0 0
        %1580 = vmatpush2.bf16.msra.mxu0 0
        %1581 = vmatprep.subr.bf16.mxu0 0
        %1582 = vmatpush2.bf16.msra.mxu0 0
        %1583 = vmatprep.subr.bf16.mxu0 0
        %1584 = vmatpush2.bf16.msra.mxu0 0
        %1585 = vmatprep.subr.bf16.mxu0 0
        %1586 = vmatpush2.bf16.msra.mxu0 0
        %1587 = vmatprep.subr.bf16.mxu0 0
        %1588 = vmatpush2.bf16.msra.mxu0 0
        %1589 = vmatprep.subr.bf16.mxu0 0
        %1590 = vmatpush2.bf16.msra.mxu0 0
        %1591 = vmatprep.subr.bf16.mxu0 0
        %1592 = vmatpush2.bf16.msra.mxu0 0
        %1593 = vmatprep.subr.bf16.mxu0 0
        %1594 = vmatpush2.bf16.msra.mxu0 0
        %1595 = vmatprep.mubr.bf16.mxu0 0
        %1596 = vmatmul.mubr.bf16.gmra.mxu0 %v1561
        %v1597 = vpop.f32.mrf.mxu0
        %v1598 = vadd.f32 0.0, %v1597
        %v1599 = vpop.f32.mrf.mxu0
        %v1600 = vpop.f32.mrf.mxu0
        %v1601 = vadd.f32 0.0, %v1600
        %v1602 = vpop.f32.mrf.mxu0
        %1603 = vdwg.mxu0
        %1605 = vrot.lane.b32.xlu0 %v1315, 96
        %v1606 = vpop.permute.xlu0 %1605
        %v1609 = vsel %vm1267, %v1555, 0
        %1611 = vmatprep.subr.bf16.mxu0 0
        %1612 = vmatpush1.bf16.msra.mxu0 0
        %1613 = vmatprep.subr.bf16.mxu0 0
        %1614 = vmatpush1.bf16.msra.mxu0 0
        %1615 = vmatprep.subr.bf16.mxu0 0
        %1616 = vmatpush1.bf16.msra.mxu0 0
        %1617 = vmatprep.subr.bf16.mxu0 0
        %1618 = vmatpush1.bf16.msra.mxu0 0
        %1619 = vmatprep.subr.bf16.mxu0 0
        %1620 = vmatpush1.bf16.msra.mxu0 0
        %1621 = vmatprep.subr.bf16.mxu0 0
        %1622 = vmatpush1.bf16.msra.mxu0 0
        %1623 = vmatprep.subr.bf16.mxu0 0
        %1624 = vmatpush1.bf16.msra.mxu0 0
        %1625 = vmatprep.subr.bf16.mxu0 0
        %1626 = vmatpush1.bf16.msra.mxu0 %v1606
        %1627 = vmatprep.subr.bf16.mxu0 0
        %1628 = vmatpush2.bf16.msra.mxu0 0
        %1629 = vmatprep.subr.bf16.mxu0 0
        %1630 = vmatpush2.bf16.msra.mxu0 0
        %1631 = vmatprep.subr.bf16.mxu0 0
        %1632 = vmatpush2.bf16.msra.mxu0 0
        %1633 = vmatprep.subr.bf16.mxu0 0
        %1634 = vmatpush2.bf16.msra.mxu0 0
        %1635 = vmatprep.subr.bf16.mxu0 0
        %1636 = vmatpush2.bf16.msra.mxu0 0
        %1637 = vmatprep.subr.bf16.mxu0 0
        %1638 = vmatpush2.bf16.msra.mxu0 0
        %1639 = vmatprep.subr.bf16.mxu0 0
        %1640 = vmatpush2.bf16.msra.mxu0 0
        %1641 = vmatprep.subr.bf16.mxu0 0
        %1642 = vmatpush2.bf16.msra.mxu0 0
        %1643 = vmatprep.mubr.bf16.mxu0 0
        %1644 = vmatmul.mubr.bf16.gmra.mxu0 %v1609
        %v1645 = vpop.f32.mrf.mxu0
        %v1646 = vadd.f32 0.0, %v1645
        %v1647 = vpop.f32.mrf.mxu0
        %v1648 = vpop.f32.mrf.mxu0
        %v1649 = vadd.f32 0.0, %v1648
        %v1650 = vpop.f32.mrf.mxu0
        %1651 = vdwg.mxu0
        %1652 = vrot.lane.b32.xlu0 %v1168, 64
        %v1653 = vpop.permute.xlu0 %1652
        %1654 = vrot.lane.b32.xlu0 %v1170, 64
        %v1655 = vpop.permute.xlu0 %1654
        %v1657 = vsel %vm1172, %v1653, 0
        %v1660 = vsel %vm1172, %v1655, 0
        %1662 = vmatprep.subr.bf16.mxu0 0
        %1663 = vmatpush1.bf16.xpose.msra.mxu0 0
        %1664 = vmatprep.subr.bf16.mxu0 0
        %1665 = vmatpush1.bf16.xpose.msra.mxu0 0
        %1666 = vmatprep.subr.bf16.mxu0 0
        %1667 = vmatpush1.bf16.xpose.msra.mxu0 0
        %1668 = vmatprep.subr.bf16.mxu0 0
        %1669 = vmatpush1.bf16.xpose.msra.mxu0 0
        %1670 = vmatprep.subr.bf16.mxu0 0
        %1671 = vmatpush1.bf16.xpose.msra.mxu0 0
        %1672 = vmatprep.subr.bf16.mxu0 0
        %1673 = vmatpush1.bf16.xpose.msra.mxu0 0
        %1674 = vmatprep.subr.bf16.mxu0 0
        %1675 = vmatpush1.bf16.xpose.msra.mxu0 0
        %1676 = vmatprep.subr.bf16.mxu0 0
        %1677 = vmatpush1.bf16.xpose.msra.mxu0 %v1660
        %1678 = vmatprep.subr.bf16.mxu0 0
        %1679 = vmatpush2.bf16.xpose.msra.mxu0 0
        %1680 = vmatprep.subr.bf16.mxu0 0
        %1681 = vmatpush2.bf16.xpose.msra.mxu0 0
        %1682 = vmatprep.subr.bf16.mxu0 0
        %1683 = vmatpush2.bf16.xpose.msra.mxu0 0
        %1684 = vmatprep.subr.bf16.mxu0 0
        %1685 = vmatpush2.bf16.xpose.msra.mxu0 0
        %1686 = vmatprep.subr.bf16.mxu0 0
        %1687 = vmatpush2.bf16.xpose.msra.mxu0 0
        %1688 = vmatprep.subr.bf16.mxu0 0
        %1689 = vmatpush2.bf16.xpose.msra.mxu0 0
        %1690 = vmatprep.subr.bf16.mxu0 0
        %1691 = vmatpush2.bf16.xpose.msra.mxu0 0
        %1692 = vmatprep.subr.bf16.mxu0 0
        %1693 = vmatpush2.bf16.xpose.msra.mxu0 0
        %1694 = vmatprep.mubr.bf16.mxu0 0
        %1695 = vmatmul.mubr.bf16.gmra.mxu0 %v1657
        %v1696 = vpop.f32.mrf.mxu0
        %v1697 = vadd.f32 0.0, %v1696
        %v1698 = vpop.f32.mrf.mxu0
        %v1699 = vpop.f32.mrf.mxu0
        %v1700 = vadd.f32 0.0, %v1699
        %v1701 = vpop.f32.mrf.mxu0
        %1702 = vdwg.mxu0
        %1703 = vrot.lane.b32.xlu0 %v1169, 64
        %v1704 = vpop.permute.xlu0 %1703
        %1705 = vrot.lane.b32.xlu0 %v1171, 64
        %v1706 = vpop.permute.xlu0 %1705
        %v1708 = vsel %vm1172, %v1704, 0
        %v1711 = vsel %vm1172, %v1706, 0
        %1713 = vmatprep.subr.bf16.mxu0 0
        %1714 = vmatpush1.bf16.xpose.msra.mxu0 0
        %1715 = vmatprep.subr.bf16.mxu0 0
        %1716 = vmatpush1.bf16.xpose.msra.mxu0 0
        %1717 = vmatprep.subr.bf16.mxu0 0
        %1718 = vmatpush1.bf16.xpose.msra.mxu0 0
        %1719 = vmatprep.subr.bf16.mxu0 0
        %1720 = vmatpush1.bf16.xpose.msra.mxu0 0
        %1721 = vmatprep.subr.bf16.mxu0 0
        %1722 = vmatpush1.bf16.xpose.msra.mxu0 0
        %1723 = vmatprep.subr.bf16.mxu0 0
        %1724 = vmatpush1.bf16.xpose.msra.mxu0 0
        %1725 = vmatprep.subr.bf16.mxu0 0
        %1726 = vmatpush1.bf16.xpose.msra.mxu0 0
        %1727 = vmatprep.subr.bf16.mxu0 0
        %1728 = vmatpush1.bf16.xpose.msra.mxu0 %v1711
        %1729 = vmatprep.subr.bf16.mxu0 0
        %1730 = vmatpush2.bf16.xpose.msra.mxu0 0
        %1731 = vmatprep.subr.bf16.mxu0 0
        %1732 = vmatpush2.bf16.xpose.msra.mxu0 0
        %1733 = vmatprep.subr.bf16.mxu0 0
        %1734 = vmatpush2.bf16.xpose.msra.mxu0 0
        %1735 = vmatprep.subr.bf16.mxu0 0
        %1736 = vmatpush2.bf16.xpose.msra.mxu0 0
        %1737 = vmatprep.subr.bf16.mxu0 0
        %1738 = vmatpush2.bf16.xpose.msra.mxu0 0
        %1739 = vmatprep.subr.bf16.mxu0 0
        %1740 = vmatpush2.bf16.xpose.msra.mxu0 0
        %1741 = vmatprep.subr.bf16.mxu0 0
        %1742 = vmatpush2.bf16.xpose.msra.mxu0 0
        %1743 = vmatprep.subr.bf16.mxu0 0
        %1744 = vmatpush2.bf16.xpose.msra.mxu0 0
        %1745 = vmatprep.mubr.bf16.mxu0 0
        %1746 = vmatmul.mubr.bf16.gmra.mxu0 %v1708
        %v1747 = vpop.f32.mrf.mxu0
        %v1748 = vadd.f32 0.0, %v1747
        %v1749 = vpop.f32.mrf.mxu0
        %v1750 = vpop.f32.mrf.mxu0
        %v1751 = vadd.f32 0.0, %v1750
        %v1752 = vpop.f32.mrf.mxu0
        %1753 = vdwg.mxu0
        %v1754 = vsel %vm1267, %v1697, -inf
        %1755 = vmax.xlane.f32.xlu0 %v1754
        %v1756 = vpop.xlane.xlu0 %1755
        %v1757 = vsel %vm1267, %v1700, -inf
        %1758 = vmax.xlane.f32.xlu0 %v1757
        %v1759 = vpop.xlane.xlu0 %1758
        %v1760 = vsel %vm1267, %v1748, -inf
        %1761 = vmax.xlane.f32.xlu0 %v1760
        %v1762 = vpop.xlane.xlu0 %1761
        %v1763 = vsel %vm1267, %v1751, -inf
        %1764 = vmax.xlane.f32.xlu0 %v1763
        %v1765 = vpop.xlane.xlu0 %1764
        %v1766 = vsub.f32 %v1697, %v1756
        %v1767 = vsub.f32 %v1700, %v1759
        %v1768 = vsub.f32 %v1748, %v1762
        %v1769 = vsub.f32 %v1751, %v1765
        %v1770 = vmul.f32 %v1766, 1.442695
        %v1771 = vpow.pop %v1770
        %v1772 = vmul.f32 %v1767, 1.442695
        %v1773 = vpow.pop %v1772
        %v1774 = vmul.f32 %v1768, 1.442695
        %v1775 = vpow.pop %v1774
        %v1776 = vmul.f32 %v1769, 1.442695
        %v1777 = vpow.pop %v1776
        %v1778 = vsel %vm1267, %v1771, 0.0
        %1779 = vadd.xlane.f32.xlu0 %v1778
        %v1780 = vpop.xlane.xlu0 %1779
        %v1781 = vsel %vm1267, %v1773, 0.0
        %1782 = vadd.xlane.f32.xlu0 %v1781
        %v1783 = vpop.xlane.xlu0 %1782
        %v1784 = vsel %vm1267, %v1775, 0.0
        %1785 = vadd.xlane.f32.xlu0 %v1784
        %v1786 = vpop.xlane.xlu0 %1785
        %v1787 = vsel %vm1267, %v1777, 0.0
        %1788 = vadd.xlane.f32.xlu0 %v1787
        %v1789 = vpop.xlane.xlu0 %1788
        %v1790 = vrcp.pop %v1780
        %v1791 = vrcp.pop %v1783
        %v1792 = vrcp.pop %v1786
        %v1793 = vrcp.pop %v1789
        %v1794 = vmul.f32 %v1771, %v1790
        %v1795 = vmul.f32 %v1773, %v1791
        %v1796 = vmul.f32 %v1775, %v1792
        %v1797 = vmul.f32 %v1777, %v1793
        %v1798 = vpack.c.bf16 %v1795, %v1794
        %v1799 = vpack.c.bf16 %v1797, %v1796
        %1800 = vrot.lane.b32.xlu0 %v1314, 64
        %v1801 = vpop.permute.xlu0 %1800
        %v1804 = vsel %vm1267, %v1798, 0
        %1806 = vmatprep.subr.bf16.mxu0 0
        %1807 = vmatpush1.bf16.msra.mxu0 0
        %1808 = vmatprep.subr.bf16.mxu0 0
        %1809 = vmatpush1.bf16.msra.mxu0 0
        %1810 = vmatprep.subr.bf16.mxu0 0
        %1811 = vmatpush1.bf16.msra.mxu0 0
        %1812 = vmatprep.subr.bf16.mxu0 0
        %1813 = vmatpush1.bf16.msra.mxu0 0
        %1814 = vmatprep.subr.bf16.mxu0 0
        %1815 = vmatpush1.bf16.msra.mxu0 0
        %1816 = vmatprep.subr.bf16.mxu0 0
        %1817 = vmatpush1.bf16.msra.mxu0 0
        %1818 = vmatprep.subr.bf16.mxu0 0
        %1819 = vmatpush1.bf16.msra.mxu0 0
        %1820 = vmatprep.subr.bf16.mxu0 0
        %1821 = vmatpush1.bf16.msra.mxu0 %v1801
        %1822 = vmatprep.subr.bf16.mxu0 0
        %1823 = vmatpush2.bf16.msra.mxu0 0
        %1824 = vmatprep.subr.bf16.mxu0 0
        %1825 = vmatpush2.bf16.msra.mxu0 0
        %1826 = vmatprep.subr.bf16.mxu0 0
        %1827 = vmatpush2.bf16.msra.mxu0 0
        %1828 = vmatprep.subr.bf16.mxu0 0
        %1829 = vmatpush2.bf16.msra.mxu0 0
        %1830 = vmatprep.subr.bf16.mxu0 0
        %1831 = vmatpush2.bf16.msra.mxu0 0
        %1832 = vmatprep.subr.bf16.mxu0 0
        %1833 = vmatpush2.bf16.msra.mxu0 0
        %1834 = vmatprep.subr.bf16.mxu0 0
        %1835 = vmatpush2.bf16.msra.mxu0 0
        %1836 = vmatprep.subr.bf16.mxu0 0
        %1837 = vmatpush2.bf16.msra.mxu0 0
        %1838 = vmatprep.mubr.bf16.mxu0 0
        %1839 = vmatmul.mubr.bf16.gmra.mxu0 %v1804
        %v1840 = vpop.f32.mrf.mxu0
        %v1841 = vadd.f32 0.0, %v1840
        %v1842 = vpop.f32.mrf.mxu0
        %v1843 = vpop.f32.mrf.mxu0
        %v1844 = vadd.f32 0.0, %v1843
        %v1845 = vpop.f32.mrf.mxu0
        %1846 = vdwg.mxu0
        %1847 = vrot.lane.b32.xlu0 %v1315, 64
        %v1848 = vpop.permute.xlu0 %1847
        %v1851 = vsel %vm1267, %v1799, 0
        %1853 = vmatprep.subr.bf16.mxu0 0
        %1854 = vmatpush1.bf16.msra.mxu0 0
        %1855 = vmatprep.subr.bf16.mxu0 0
        %1856 = vmatpush1.bf16.msra.mxu0 0
        %1857 = vmatprep.subr.bf16.mxu0 0
        %1858 = vmatpush1.bf16.msra.mxu0 0
        %1859 = vmatprep.subr.bf16.mxu0 0
        %1860 = vmatpush1.bf16.msra.mxu0 0
        %1861 = vmatprep.subr.bf16.mxu0 0
        %1862 = vmatpush1.bf16.msra.mxu0 0
        %1863 = vmatprep.subr.bf16.mxu0 0
        %1864 = vmatpush1.bf16.msra.mxu0 0
        %1865 = vmatprep.subr.bf16.mxu0 0
        %1866 = vmatpush1.bf16.msra.mxu0 0
        %1867 = vmatprep.subr.bf16.mxu0 0
        %1868 = vmatpush1.bf16.msra.mxu0 %v1848
        %1869 = vmatprep.subr.bf16.mxu0 0
        %1870 = vmatpush2.bf16.msra.mxu0 0
        %1871 = vmatprep.subr.bf16.mxu0 0
        %1872 = vmatpush2.bf16.msra.mxu0 0
        %1873 = vmatprep.subr.bf16.mxu0 0
        %1874 = vmatpush2.bf16.msra.mxu0 0
        %1875 = vmatprep.subr.bf16.mxu0 0
        %1876 = vmatpush2.bf16.msra.mxu0 0
        %1877 = vmatprep.subr.bf16.mxu0 0
        %1878 = vmatpush2.bf16.msra.mxu0 0
        %1879 = vmatprep.subr.bf16.mxu0 0
        %1880 = vmatpush2.bf16.msra.mxu0 0
        %1881 = vmatprep.subr.bf16.mxu0 0
        %1882 = vmatpush2.bf16.msra.mxu0 0
        %1883 = vmatprep.subr.bf16.mxu0 0
        %1884 = vmatpush2.bf16.msra.mxu0 0
        %1885 = vmatprep.mubr.bf16.mxu0 0
        %1886 = vmatmul.mubr.bf16.gmra.mxu0 %v1851
        %v1887 = vpop.f32.mrf.mxu0
        %v1888 = vadd.f32 0.0, %v1887
        %v1889 = vpop.f32.mrf.mxu0
        %v1890 = vpop.f32.mrf.mxu0
        %v1891 = vadd.f32 0.0, %v1890
        %v1892 = vpop.f32.mrf.mxu0
        %1893 = vdwg.mxu0
        %1894 = vrot.lane.b32.xlu0 %v1168, 32
        %v1895 = vpop.permute.xlu0 %1894
        %1896 = vrot.lane.b32.xlu0 %v1170, 32
        %v1897 = vpop.permute.xlu0 %1896
        %v1899 = vsel %vm1172, %v1895, 0
        %v1902 = vsel %vm1172, %v1897, 0
        %1904 = vmatprep.subr.bf16.mxu0 0
        %1905 = vmatpush1.bf16.xpose.msra.mxu0 0
        %1906 = vmatprep.subr.bf16.mxu0 0
        %1907 = vmatpush1.bf16.xpose.msra.mxu0 0
        %1908 = vmatprep.subr.bf16.mxu0 0
        %1909 = vmatpush1.bf16.xpose.msra.mxu0 0
        %1910 = vmatprep.subr.bf16.mxu0 0
        %1911 = vmatpush1.bf16.xpose.msra.mxu0 0
        %1912 = vmatprep.subr.bf16.mxu0 0
        %1913 = vmatpush1.bf16.xpose.msra.mxu0 0
        %1914 = vmatprep.subr.bf16.mxu0 0
        %1915 = vmatpush1.bf16.xpose.msra.mxu0 0
        %1916 = vmatprep.subr.bf16.mxu0 0
        %1917 = vmatpush1.bf16.xpose.msra.mxu0 0
        %1918 = vmatprep.subr.bf16.mxu0 0
        %1919 = vmatpush1.bf16.xpose.msra.mxu0 %v1902
        %1920 = vmatprep.subr.bf16.mxu0 0
        %1921 = vmatpush2.bf16.xpose.msra.mxu0 0
        %1922 = vmatprep.subr.bf16.mxu0 0
        %1923 = vmatpush2.bf16.xpose.msra.mxu0 0
        %1924 = vmatprep.subr.bf16.mxu0 0
        %1925 = vmatpush2.bf16.xpose.msra.mxu0 0
        %1926 = vmatprep.subr.bf16.mxu0 0
        %1927 = vmatpush2.bf16.xpose.msra.mxu0 0
        %1928 = vmatprep.subr.bf16.mxu0 0
        %1929 = vmatpush2.bf16.xpose.msra.mxu0 0
        %1930 = vmatprep.subr.bf16.mxu0 0
        %1931 = vmatpush2.bf16.xpose.msra.mxu0 0
        %1932 = vmatprep.subr.bf16.mxu0 0
        %1933 = vmatpush2.bf16.xpose.msra.mxu0 0
        %1934 = vmatprep.subr.bf16.mxu0 0
        %1935 = vmatpush2.bf16.xpose.msra.mxu0 0
        %1936 = vmatprep.mubr.bf16.mxu0 0
        %1937 = vmatmul.mubr.bf16.gmra.mxu0 %v1899
        %v1938 = vpop.f32.mrf.mxu0
        %v1939 = vadd.f32 0.0, %v1938
        %v1940 = vpop.f32.mrf.mxu0
        %v1941 = vpop.f32.mrf.mxu0
        %v1942 = vadd.f32 0.0, %v1941
        %v1943 = vpop.f32.mrf.mxu0
        %1944 = vdwg.mxu0
        %1945 = vrot.lane.b32.xlu0 %v1169, 32
        %v1946 = vpop.permute.xlu0 %1945
        %1947 = vrot.lane.b32.xlu0 %v1171, 32
        %v1948 = vpop.permute.xlu0 %1947
        %v1950 = vsel %vm1172, %v1946, 0
        %v1953 = vsel %vm1172, %v1948, 0
        %1955 = vmatprep.subr.bf16.mxu0 0
        %1956 = vmatpush1.bf16.xpose.msra.mxu0 0
        %1957 = vmatprep.subr.bf16.mxu0 0
        %1958 = vmatpush1.bf16.xpose.msra.mxu0 0
        %1959 = vmatprep.subr.bf16.mxu0 0
        %1960 = vmatpush1.bf16.xpose.msra.mxu0 0
        %1961 = vmatprep.subr.bf16.mxu0 0
        %1962 = vmatpush1.bf16.xpose.msra.mxu0 0
        %1963 = vmatprep.subr.bf16.mxu0 0
        %1964 = vmatpush1.bf16.xpose.msra.mxu0 0
        %1965 = vmatprep.subr.bf16.mxu0 0
        %1966 = vmatpush1.bf16.xpose.msra.mxu0 0
        %1967 = vmatprep.subr.bf16.mxu0 0
        %1968 = vmatpush1.bf16.xpose.msra.mxu0 0
        %1969 = vmatprep.subr.bf16.mxu0 0
        %1970 = vmatpush1.bf16.xpose.msra.mxu0 %v1953
        %1971 = vmatprep.subr.bf16.mxu0 0
        %1972 = vmatpush2.bf16.xpose.msra.mxu0 0
        %1973 = vmatprep.subr.bf16.mxu0 0
        %1974 = vmatpush2.bf16.xpose.msra.mxu0 0
        %1975 = vmatprep.subr.bf16.mxu0 0
        %1976 = vmatpush2.bf16.xpose.msra.mxu0 0
        %1977 = vmatprep.subr.bf16.mxu0 0
        %1978 = vmatpush2.bf16.xpose.msra.mxu0 0
        %1979 = vmatprep.subr.bf16.mxu0 0
        %1980 = vmatpush2.bf16.xpose.msra.mxu0 0
        %1981 = vmatprep.subr.bf16.mxu0 0
        %1982 = vmatpush2.bf16.xpose.msra.mxu0 0
        %1983 = vmatprep.subr.bf16.mxu0 0
        %1984 = vmatpush2.bf16.xpose.msra.mxu0 0
        %1985 = vmatprep.subr.bf16.mxu0 0
        %1986 = vmatpush2.bf16.xpose.msra.mxu0 0
        %1987 = vmatprep.mubr.bf16.mxu0 0
        %1988 = vmatmul.mubr.bf16.gmra.mxu0 %v1950
        %v1989 = vpop.f32.mrf.mxu0
        %v1990 = vadd.f32 0.0, %v1989
        %v1991 = vpop.f32.mrf.mxu0
        %v1992 = vpop.f32.mrf.mxu0
        %v1993 = vadd.f32 0.0, %v1992
        %v1994 = vpop.f32.mrf.mxu0
        %1995 = vdwg.mxu0
        %v1996 = vsel %vm1267, %v1939, -inf
        %1997 = vmax.xlane.f32.xlu0 %v1996
        %v1998 = vpop.xlane.xlu0 %1997
        %v1999 = vsel %vm1267, %v1942, -inf
        %2000 = vmax.xlane.f32.xlu0 %v1999
        %v2001 = vpop.xlane.xlu0 %2000
        %v2002 = vsel %vm1267, %v1990, -inf
        %2003 = vmax.xlane.f32.xlu0 %v2002
        %v2004 = vpop.xlane.xlu0 %2003
        %v2005 = vsel %vm1267, %v1993, -inf
        %2006 = vmax.xlane.f32.xlu0 %v2005
        %v2007 = vpop.xlane.xlu0 %2006
        %v2008 = vsub.f32 %v1939, %v1998
        %v2009 = vsub.f32 %v1942, %v2001
        %v2010 = vsub.f32 %v1990, %v2004
        %v2011 = vsub.f32 %v1993, %v2007
        %v2012 = vmul.f32 %v2008, 1.442695
        %v2013 = vpow.pop %v2012
        %v2014 = vmul.f32 %v2009, 1.442695
        %v2015 = vpow.pop %v2014
        %v2016 = vmul.f32 %v2010, 1.442695
        %v2017 = vpow.pop %v2016
        %v2018 = vmul.f32 %v2011, 1.442695
        %v2019 = vpow.pop %v2018
        %v2020 = vsel %vm1267, %v2013, 0.0
        %2021 = vadd.xlane.f32.xlu0 %v2020
        %v2022 = vpop.xlane.xlu0 %2021
        %v2023 = vsel %vm1267, %v2015, 0.0
        %2024 = vadd.xlane.f32.xlu0 %v2023
        %v2025 = vpop.xlane.xlu0 %2024
        %v2026 = vsel %vm1267, %v2017, 0.0
        %2027 = vadd.xlane.f32.xlu0 %v2026
        %v2028 = vpop.xlane.xlu0 %2027
        %v2029 = vsel %vm1267, %v2019, 0.0
        %2030 = vadd.xlane.f32.xlu0 %v2029
        %v2031 = vpop.xlane.xlu0 %2030
        %v2032 = vrcp.pop %v2022
        %v2033 = vrcp.pop %v2025
        %v2034 = vrcp.pop %v2028
        %v2035 = vrcp.pop %v2031
        %v2036 = vmul.f32 %v2013, %v2032
        %v2037 = vmul.f32 %v2015, %v2033
        %v2038 = vmul.f32 %v2017, %v2034
        %v2039 = vmul.f32 %v2019, %v2035
        %v2040 = vpack.c.bf16 %v2037, %v2036
        %v2041 = vpack.c.bf16 %v2039, %v2038
        %2042 = vrot.lane.b32.xlu0 %v1314, 32
        %v2043 = vpop.permute.xlu0 %2042
        %v2046 = vsel %vm1267, %v2040, 0
        %2048 = vmatprep.subr.bf16.mxu0 0
        %2049 = vmatpush1.bf16.msra.mxu0 0
        %2050 = vmatprep.subr.bf16.mxu0 0
        %2051 = vmatpush1.bf16.msra.mxu0 0
        %2052 = vmatprep.subr.bf16.mxu0 0
        %2053 = vmatpush1.bf16.msra.mxu0 0
        %2054 = vmatprep.subr.bf16.mxu0 0
        %2055 = vmatpush1.bf16.msra.mxu0 0
        %2056 = vmatprep.subr.bf16.mxu0 0
        %2057 = vmatpush1.bf16.msra.mxu0 0
        %2058 = vmatprep.subr.bf16.mxu0 0
        %2059 = vmatpush1.bf16.msra.mxu0 0
        %2060 = vmatprep.subr.bf16.mxu0 0
        %2061 = vmatpush1.bf16.msra.mxu0 0
        %2062 = vmatprep.subr.bf16.mxu0 0
        %2063 = vmatpush1.bf16.msra.mxu0 %v2043
        %2064 = vmatprep.subr.bf16.mxu0 0
        %2065 = vmatpush2.bf16.msra.mxu0 0
        %2066 = vmatprep.subr.bf16.mxu0 0
        %2067 = vmatpush2.bf16.msra.mxu0 0
        %2068 = vmatprep.subr.bf16.mxu0 0
        %2069 = vmatpush2.bf16.msra.mxu0 0
        %2070 = vmatprep.subr.bf16.mxu0 0
        %2071 = vmatpush2.bf16.msra.mxu0 0
        %2072 = vmatprep.subr.bf16.mxu0 0
        %2073 = vmatpush2.bf16.msra.mxu0 0
        %2074 = vmatprep.subr.bf16.mxu0 0
        %2075 = vmatpush2.bf16.msra.mxu0 0
        %2076 = vmatprep.subr.bf16.mxu0 0
        %2077 = vmatpush2.bf16.msra.mxu0 0
        %2078 = vmatprep.subr.bf16.mxu0 0
        %2079 = vmatpush2.bf16.msra.mxu0 0
        %2080 = vmatprep.mubr.bf16.mxu0 0
        %2081 = vmatmul.mubr.bf16.gmra.mxu0 %v2046
        %v2082 = vpop.f32.mrf.mxu0
        %v2083 = vadd.f32 0.0, %v2082
        %v2084 = vpop.f32.mrf.mxu0
        %v2085 = vpop.f32.mrf.mxu0
        %v2086 = vadd.f32 0.0, %v2085
        %v2087 = vpop.f32.mrf.mxu0
        %2088 = vdwg.mxu0
        %2089 = vrot.lane.b32.xlu0 %v1315, 32
        %v2090 = vpop.permute.xlu0 %2089
        %v2093 = vsel %vm1267, %v2041, 0
        %2095 = vmatprep.subr.bf16.mxu0 0
        %2096 = vmatpush1.bf16.msra.mxu0 0
        %2097 = vmatprep.subr.bf16.mxu0 0
        %2098 = vmatpush1.bf16.msra.mxu0 0
        %2099 = vmatprep.subr.bf16.mxu0 0
        %2100 = vmatpush1.bf16.msra.mxu0 0
        %2101 = vmatprep.subr.bf16.mxu0 0
        %2102 = vmatpush1.bf16.msra.mxu0 0
        %2103 = vmatprep.subr.bf16.mxu0 0
        %2104 = vmatpush1.bf16.msra.mxu0 0
        %2105 = vmatprep.subr.bf16.mxu0 0
        %2106 = vmatpush1.bf16.msra.mxu0 0
        %2107 = vmatprep.subr.bf16.mxu0 0
        %2108 = vmatpush1.bf16.msra.mxu0 0
        %2109 = vmatprep.subr.bf16.mxu0 0
        %2110 = vmatpush1.bf16.msra.mxu0 %v2090
        %2111 = vmatprep.subr.bf16.mxu0 0
        %2112 = vmatpush2.bf16.msra.mxu0 0
        %2113 = vmatprep.subr.bf16.mxu0 0
        %2114 = vmatpush2.bf16.msra.mxu0 0
        %2115 = vmatprep.subr.bf16.mxu0 0
        %2116 = vmatpush2.bf16.msra.mxu0 0
        %2117 = vmatprep.subr.bf16.mxu0 0
        %2118 = vmatpush2.bf16.msra.mxu0 0
        %2119 = vmatprep.subr.bf16.mxu0 0
        %2120 = vmatpush2.bf16.msra.mxu0 0
        %2121 = vmatprep.subr.bf16.mxu0 0
        %2122 = vmatpush2.bf16.msra.mxu0 0
        %2123 = vmatprep.subr.bf16.mxu0 0
        %2124 = vmatpush2.bf16.msra.mxu0 0
        %2125 = vmatprep.subr.bf16.mxu0 0
        %2126 = vmatpush2.bf16.msra.mxu0 0
        %2127 = vmatprep.mubr.bf16.mxu0 0
        %2128 = vmatmul.mubr.bf16.gmra.mxu0 %v2093
        %v2129 = vpop.f32.mrf.mxu0
        %v2130 = vadd.f32 0.0, %v2129
        %v2131 = vpop.f32.mrf.mxu0
        %v2132 = vpop.f32.mrf.mxu0
        %v2133 = vadd.f32 0.0, %v2132
        %v2134 = vpop.f32.mrf.mxu0
        %2135 = vdwg.mxu0
        %2140 = vrot.lane.b32.xlu0 %v1598, 32
        %v2141 = vpop.permute.xlu0 %2140
        %2142 = vrot.lane.b32.xlu0 %v1601, 32
        %v2143 = vpop.permute.xlu0 %2142
        %2144 = vrot.lane.b32.xlu0 %v1646, 32
        %v2145 = vpop.permute.xlu0 %2144
        %2146 = vrot.lane.b32.xlu0 %v1649, 32
        %v2147 = vpop.permute.xlu0 %2146
        %2156 = vrot.lane.b32.xlu0 %v1841, 64
        %v2157 = vpop.permute.xlu0 %2156
        %2158 = vrot.lane.b32.xlu0 %v1844, 64
        %v2159 = vpop.permute.xlu0 %2158
        %2160 = vrot.lane.b32.xlu0 %v1888, 64
        %v2161 = vpop.permute.xlu0 %2160
        %2162 = vrot.lane.b32.xlu0 %v1891, 64
        %v2163 = vpop.permute.xlu0 %2162
        %2172 = vrot.lane.b32.xlu0 %v2083, 96
        %v2173 = vpop.permute.xlu0 %2172
        %2174 = vrot.lane.b32.xlu0 %v2086, 96
        %v2175 = vpop.permute.xlu0 %2174
        %2176 = vrot.lane.b32.xlu0 %v2130, 96
        %v2177 = vpop.permute.xlu0 %2176
        %2178 = vrot.lane.b32.xlu0 %v2133, 96
        %v2179 = vpop.permute.xlu0 %2178
        %v2184 = vsel %vm1172, %v1354, %v2141
        %v2185 = vsel %vm1172, %v1357, %v2143
        %v2186 = vsel %vm1172, %v1398, %v2145
        %v2187 = vsel %vm1172, %v1401, %v2147
        %vm2188 = vcmask 523264
        %v2189 = vsel %vm2188, %v2184, %v2157
        %v2190 = vsel %vm2188, %v2185, %v2159
        %v2191 = vsel %vm2188, %v2186, %v2161
        %v2192 = vsel %vm2188, %v2187, %v2163
        %vm2193 = vcmask 785408
        %v2194 = vsel %vm2193, %v2189, %v2173
        %v2195 = vsel %vm2193, %v2190, %v2175
        %v2196 = vsel %vm2193, %v2191, %v2177
        %v2197 = vsel %vm2193, %v2192, %v2179
        %v2198 = vpack.c.bf16 %v2195, %v2194
        %v2199 = vpack.c.bf16 %v2197, %v2196
        %v2200 = vld [vmem:[%s695] sm:$0xf]
        %v2201 = vld [vmem:[%s695 + $0x4] sm:$0xf]
        %v2202 = vld [vmem:[%s695 + $0x8] sm:$0xf]
        %v2203 = vld [vmem:[%s695 + $0xc] sm:$0xf]
        %v2204 = vld [vmem:[%s695 + $0x10] sm:$0xf]
        %v2205 = vld [vmem:[%s695 + $0x14] sm:$0xf]
        %v2206 = vld [vmem:[%s695 + $0x18] sm:$0xf]
        %v2207 = vld [vmem:[%s695 + $0x1c] sm:$0xf]
        %v2208 = vld [vmem:[%s695 + $0x20] sm:$0xf]
        %v2209 = vld [vmem:[%s695 + $0x24] sm:$0xf]
        %v2210 = vld [vmem:[%s695 + $0x28] sm:$0xf]
        %v2211 = vld [vmem:[%s695 + $0x2c] sm:$0xf]
        %v2212 = vld [vmem:[%s695 + $0x30] sm:$0xf]
        %v2213 = vld [vmem:[%s695 + $0x34] sm:$0xf]
        %v2214 = vld [vmem:[%s695 + $0x38] sm:$0xf]
        %v2215 = vld [vmem:[%s695 + $0x3c] sm:$0xf]
        %v2216 = vld [vmem:[%s805] sm:$0x1]
        %v2218 = vlaneseq
        %v2219 = vshrl.u32 %v2218, 7
        %v2220 = vsub.s32 0, %v2219
        %v2221 = vrot.slane %v2216, %v2220
        %v2239 = vunpack.c.l.b16 %v2200
        %v2240 = vunpack.c.l.b16 %v2201
        %v2241 = vunpack.c.l.b16 %v2202
        %v2242 = vunpack.c.l.b16 %v2203
        %v2243 = vunpack.c.l.b16 %v2204
        %v2244 = vunpack.c.l.b16 %v2205
        %v2245 = vunpack.c.l.b16 %v2206
        %v2246 = vunpack.c.l.b16 %v2207
        %v2247 = vunpack.c.l.b16 %v2208
        %v2248 = vunpack.c.l.b16 %v2209
        %v2249 = vunpack.c.l.b16 %v2210
        %v2250 = vunpack.c.l.b16 %v2211
        %v2251 = vunpack.c.l.b16 %v2212
        %v2252 = vunpack.c.l.b16 %v2213
        %v2253 = vunpack.c.l.b16 %v2214
        %v2254 = vunpack.c.l.b16 %v2215
        %v2255 = vpack.c.b16 %v2240, %v2239
        %v2256 = vpack.c.b16 %v2242, %v2241
        %v2257 = vpack.c.b16 %v2244, %v2243
        %v2258 = vpack.c.b16 %v2246, %v2245
        %v2259 = vpack.c.b16 %v2248, %v2247
        %v2260 = vpack.c.b16 %v2250, %v2249
        %v2261 = vpack.c.b16 %v2252, %v2251
        %v2262 = vpack.c.b16 %v2254, %v2253
        %2271 = vmatprep.subr.bf16.mxu0 0
        %2272 = vmatpush1.bf16.msra.mxu0 %v2262
        %2273 = vmatprep.subr.bf16.mxu0 0
        %2274 = vmatpush1.bf16.msra.mxu0 %v2261
        %2275 = vmatprep.subr.bf16.mxu0 0
        %2276 = vmatpush1.bf16.msra.mxu0 %v2260
        %2277 = vmatprep.subr.bf16.mxu0 0
        %2278 = vmatpush1.bf16.msra.mxu0 %v2259
        %2279 = vmatprep.subr.bf16.mxu0 0
        %2280 = vmatpush1.bf16.msra.mxu0 %v2258
        %2281 = vmatprep.subr.bf16.mxu0 0
        %2282 = vmatpush1.bf16.msra.mxu0 %v2257
        %2283 = vmatprep.subr.bf16.mxu0 0
        %2284 = vmatpush1.bf16.msra.mxu0 %v2256
        %2285 = vmatprep.subr.bf16.mxu0 0
        %2286 = vmatpush1.bf16.msra.mxu0 %v2255
        %2287 = vmatprep.subr.bf16.mxu0 0
        %2288 = vmatpush2.bf16.msra.mxu0 0
        %2289 = vmatprep.subr.bf16.mxu0 0
        %2290 = vmatpush2.bf16.msra.mxu0 0
        %2291 = vmatprep.subr.bf16.mxu0 0
        %2292 = vmatpush2.bf16.msra.mxu0 0
        %2293 = vmatprep.subr.bf16.mxu0 0
        %2294 = vmatpush2.bf16.msra.mxu0 0
        %2295 = vmatprep.subr.bf16.mxu0 0
        %2296 = vmatpush2.bf16.msra.mxu0 0
        %2297 = vmatprep.subr.bf16.mxu0 0
        %2298 = vmatpush2.bf16.msra.mxu0 0
        %2299 = vmatprep.subr.bf16.mxu0 0
        %2300 = vmatpush2.bf16.msra.mxu0 0
        %2301 = vmatprep.subr.bf16.mxu0 0
        %2302 = vmatpush2.bf16.msra.mxu0 0
        %2303 = vmatprep.mubr.bf16.mxu0 0
        %2304 = vmatmul.mubr.bf16.gmra.mxu0 %v2198
        %v2305 = vpop.f32.mrf.mxu0
        %v2306 = vadd.f32 %v2221, %v2305
        %v2307 = vpop.f32.mrf.mxu0
        %v2308 = vpop.f32.mrf.mxu0
        %v2309 = vadd.f32 %v2221, %v2308
        %v2310 = vpop.f32.mrf.mxu0
        %2311 = vmatprep.mubr.bf16.mxu0 0
        %2312 = vmatmul.mubr.bf16.gmra.mxu0 %v2199
        %v2313 = vpop.f32.mrf.mxu0
        %v2314 = vadd.f32 %v2221, %v2313
        %v2315 = vpop.f32.mrf.mxu0
        %v2316 = vpop.f32.mrf.mxu0
        %v2317 = vadd.f32 %v2221, %v2316
        %v2318 = vpop.f32.mrf.mxu0
        %2319 = vdwg.mxu0
        %v2320 = vadd.f32 %v833, %v2306
        %v2321 = vadd.f32 %v834, %v2309
        %v2322 = vadd.f32 %v835, %v2314
        %v2323 = vadd.f32 %v836, %v2317
        %v2324 = vld [vmem:[%s808] sm:$0x1]
        %v2325 = vld [vmem:[%s811] sm:$0x1]
        %2326 = vadd.xlane.f32.xlu0 %v2320
        %v2327 = vpop.xlane.xlu0 %2326
        %2328 = vadd.xlane.f32.xlu0 %v2321
        %v2329 = vpop.xlane.xlu0 %2328
        %2330 = vadd.xlane.f32.xlu0 %v2322
        %v2331 = vpop.xlane.xlu0 %2330
        %2332 = vadd.xlane.f32.xlu0 %v2323
        %v2333 = vpop.xlane.xlu0 %2332
        %v2334 = vmul.f32 %v2327, %v847
        %v2335 = vmul.f32 %v2329, %v847
        %v2336 = vmul.f32 %v2331, %v847
        %v2337 = vmul.f32 %v2333, %v847
        %v2338 = vsub.f32 %v2320, %v2334
        %v2339 = vsub.f32 %v2321, %v2335
        %v2340 = vsub.f32 %v2322, %v2336
        %v2341 = vsub.f32 %v2323, %v2337
        %v2342 = vmul.f32 %v2338, %v2338
        %v2343 = vmul.f32 %v2339, %v2339
        %v2344 = vmul.f32 %v2340, %v2340
        %v2345 = vmul.f32 %v2341, %v2341
        %2346 = vadd.xlane.f32.xlu0 %v2342
        %v2347 = vpop.xlane.xlu0 %2346
        %2348 = vadd.xlane.f32.xlu0 %v2343
        %v2349 = vpop.xlane.xlu0 %2348
        %2350 = vadd.xlane.f32.xlu0 %v2344
        %v2351 = vpop.xlane.xlu0 %2350
        %2352 = vadd.xlane.f32.xlu0 %v2345
        %v2353 = vpop.xlane.xlu0 %2352
        %v2354 = vmul.f32 %v2347, %v847
        %v2355 = vmul.f32 %v2349, %v847
        %v2356 = vmul.f32 %v2351, %v847
        %v2357 = vmul.f32 %v2353, %v847
        %v2358 = vadd.f32 %v2354, 1e-05
        %v2359 = vadd.f32 %v2355, 1e-05
        %v2360 = vadd.f32 %v2356, 1e-05
        %v2361 = vadd.f32 %v2357, 1e-05
        %v2362 = vrsqrt.pop %v2358
        %v2363 = vrsqrt.pop %v2359
        %v2364 = vrsqrt.pop %v2360
        %v2365 = vrsqrt.pop %v2361
        %v2366 = vmul.f32 %v2338, %v2362
        %v2367 = vmul.f32 %v2339, %v2363
        %v2368 = vmul.f32 %v2340, %v2364
        %v2369 = vmul.f32 %v2341, %v2365
        %v2371 = vlaneseq
        %v2372 = vshrl.u32 %v2371, 7
        %v2373 = vsub.s32 0, %v2372
        %v2374 = vrot.slane %v2324, %v2373
        %v2376 = vmul.f32 %v2366, %v2374
        %v2377 = vmul.f32 %v2367, %v2374
        %v2378 = vmul.f32 %v2368, %v2374
        %v2379 = vmul.f32 %v2369, %v2374
        %v2381 = vlaneseq
        %v2382 = vshrl.u32 %v2381, 7
        %v2383 = vsub.s32 0, %v2382
        %v2384 = vrot.slane %v2325, %v2383
        %v2386 = vadd.f32 %v2376, %v2384
        %v2387 = vadd.f32 %v2377, %v2384
        %v2388 = vadd.f32 %v2378, %v2384
        %v2389 = vadd.f32 %v2379, %v2384
        %v2390 = vpack.c.bf16 %v2387, %v2386
        %v2391 = vpack.c.bf16 %v2389, %v2388
        %v2392 = vld [vmem:[%s704] sm:$0xff]
        %v2393 = vld [vmem:[%s704 + $0x8] sm:$0xff]
        %v2394 = vld [vmem:[%s704 + $0x10] sm:$0xff]
        %v2395 = vld [vmem:[%s704 + $0x18] sm:$0xff]
        %v2396 = vld [vmem:[%s704 + $0x20] sm:$0xff]
        %v2397 = vld [vmem:[%s704 + $0x28] sm:$0xff]
        %v2398 = vld [vmem:[%s704 + $0x30] sm:$0xff]
        %v2399 = vld [vmem:[%s704 + $0x38] sm:$0xff]
        %v2400 = vld [vmem:[%s704 + $0x40] sm:$0xff]
        %v2401 = vld [vmem:[%s704 + $0x48] sm:$0xff]
        %v2402 = vld [vmem:[%s704 + $0x50] sm:$0xff]
        %v2403 = vld [vmem:[%s704 + $0x58] sm:$0xff]
        %v2404 = vld [vmem:[%s704 + $0x60] sm:$0xff]
        %v2405 = vld [vmem:[%s704 + $0x68] sm:$0xff]
        %v2406 = vld [vmem:[%s704 + $0x70] sm:$0xff]
        %v2407 = vld [vmem:[%s704 + $0x78] sm:$0xff]
        %v2408 = vld [vmem:[%s815] sm:$0x3]
        %v2410 = vlaneseq
        %v2411 = vshrl.u32 %v2410, 7
        %v2412 = vsub.s32 0, %v2411
        %v2413 = vrot.slane %v2408, %v2412
        %v2414 = vlaneseq
        %v2415 = vshrl.u32 %v2414, 7
        %v2416 = vsub.s32 1, %v2415
        %v2417 = vrot.slane %v2408, %v2416
        %v2436 = vunpack.c.l.b16 %v2392
        %v2437 = vunpack.c.h.b16 %v2392
        %v2438 = vunpack.c.l.b16 %v2393
        %v2439 = vunpack.c.h.b16 %v2393
        %v2440 = vunpack.c.l.b16 %v2394
        %v2441 = vunpack.c.h.b16 %v2394
        %v2442 = vunpack.c.l.b16 %v2395
        %v2443 = vunpack.c.h.b16 %v2395
        %v2444 = vunpack.c.l.b16 %v2396
        %v2445 = vunpack.c.h.b16 %v2396
        %v2446 = vunpack.c.l.b16 %v2397
        %v2447 = vunpack.c.h.b16 %v2397
        %v2448 = vunpack.c.l.b16 %v2398
        %v2449 = vunpack.c.h.b16 %v2398
        %v2450 = vunpack.c.l.b16 %v2399
        %v2451 = vunpack.c.h.b16 %v2399
        %v2452 = vunpack.c.l.b16 %v2400
        %v2453 = vunpack.c.h.b16 %v2400
        %v2454 = vunpack.c.l.b16 %v2401
        %v2455 = vunpack.c.h.b16 %v2401
        %v2456 = vunpack.c.l.b16 %v2402
        %v2457 = vunpack.c.h.b16 %v2402
        %v2458 = vunpack.c.l.b16 %v2403
        %v2459 = vunpack.c.h.b16 %v2403
        %v2460 = vunpack.c.l.b16 %v2404
        %v2461 = vunpack.c.h.b16 %v2404
        %v2462 = vunpack.c.l.b16 %v2405
        %v2463 = vunpack.c.h.b16 %v2405
        %v2464 = vunpack.c.l.b16 %v2406
        %v2465 = vunpack.c.h.b16 %v2406
        %v2466 = vunpack.c.l.b16 %v2407
        %v2467 = vunpack.c.h.b16 %v2407
        %v2468 = vpack.c.b16 %v2438, %v2436
        %v2469 = vpack.c.b16 %v2439, %v2437
        %v2470 = vpack.c.b16 %v2442, %v2440
        %v2471 = vpack.c.b16 %v2443, %v2441
        %v2472 = vpack.c.b16 %v2446, %v2444
        %v2473 = vpack.c.b16 %v2447, %v2445
        %v2474 = vpack.c.b16 %v2450, %v2448
        %v2475 = vpack.c.b16 %v2451, %v2449
        %v2476 = vpack.c.b16 %v2454, %v2452
        %v2477 = vpack.c.b16 %v2455, %v2453
        %v2478 = vpack.c.b16 %v2458, %v2456
        %v2479 = vpack.c.b16 %v2459, %v2457
        %v2480 = vpack.c.b16 %v2462, %v2460
        %v2481 = vpack.c.b16 %v2463, %v2461
        %v2482 = vpack.c.b16 %v2466, %v2464
        %v2483 = vpack.c.b16 %v2467, %v2465
        %2500 = vmatprep.subr.bf16.mxu0 %v2483
        %2501 = vmatpush1.bf16.msra.mxu0 %v2482
        %2502 = vmatprep.subr.bf16.mxu0 %v2481
        %2503 = vmatpush1.bf16.msra.mxu0 %v2480
        %2504 = vmatprep.subr.bf16.mxu0 %v2479
        %2505 = vmatpush1.bf16.msra.mxu0 %v2478
        %2506 = vmatprep.subr.bf16.mxu0 %v2477
        %2507 = vmatpush1.bf16.msra.mxu0 %v2476
        %2508 = vmatprep.subr.bf16.mxu0 %v2475
        %2509 = vmatpush1.bf16.msra.mxu0 %v2474
        %2510 = vmatprep.subr.bf16.mxu0 %v2473
        %2511 = vmatpush1.bf16.msra.mxu0 %v2472
        %2512 = vmatprep.subr.bf16.mxu0 %v2471
        %2513 = vmatpush1.bf16.msra.mxu0 %v2470
        %2514 = vmatprep.subr.bf16.mxu0 %v2469
        %2515 = vmatpush1.bf16.msra.mxu0 %v2468
        %2516 = vmatprep.subr.bf16.mxu0 0
        %2517 = vmatpush2.bf16.msra.mxu0 0
        %2518 = vmatprep.subr.bf16.mxu0 0
        %2519 = vmatpush2.bf16.msra.mxu0 0
        %2520 = vmatprep.subr.bf16.mxu0 0
        %2521 = vmatpush2.bf16.msra.mxu0 0
        %2522 = vmatprep.subr.bf16.mxu0 0
        %2523 = vmatpush2.bf16.msra.mxu0 0
        %2524 = vmatprep.subr.bf16.mxu0 0
        %2525 = vmatpush2.bf16.msra.mxu0 0
        %2526 = vmatprep.subr.bf16.mxu0 0
        %2527 = vmatpush2.bf16.msra.mxu0 0
        %2528 = vmatprep.subr.bf16.mxu0 0
        %2529 = vmatpush2.bf16.msra.mxu0 0
        %2530 = vmatprep.subr.bf16.mxu0 0
        %2531 = vmatpush2.bf16.msra.mxu0 0
        %2532 = vmatprep.mubr.bf16.mxu0 0
        %2533 = vmatmul.mubr.bf16.gmra.mxu0 %v2390
        %v2534 = vpop.f32.mrf.mxu0
        %v2535 = vadd.f32 %v2413, %v2534
        %v2536 = vpop.f32.mrf.mxu0
        %v2537 = vadd.f32 %v2417, %v2536
        %v2538 = vpop.f32.mrf.mxu0
        %v2539 = vadd.f32 %v2413, %v2538
        %v2540 = vpop.f32.mrf.mxu0
        %v2541 = vadd.f32 %v2417, %v2540
        %2542 = vmatprep.mubr.bf16.mxu0 0
        %2543 = vmatmul.mubr.bf16.gmra.mxu0 %v2391
        %v2544 = vpop.f32.mrf.mxu0
        %v2545 = vadd.f32 %v2413, %v2544
        %v2546 = vpop.f32.mrf.mxu0
        %v2547 = vadd.f32 %v2417, %v2546
        %v2548 = vpop.f32.mrf.mxu0
        %v2549 = vadd.f32 %v2413, %v2548
        %v2550 = vpop.f32.mrf.mxu0
        %v2551 = vadd.f32 %v2417, %v2550
        %2552 = vdwg.mxu0
        %v2553 = vtanh.pop %v2535
        %v2554 = vtanh.pop %v2537
        %v2555 = vtanh.pop %v2539
        %v2556 = vtanh.pop %v2541
        %v2557 = vtanh.pop %v2545
        %v2558 = vtanh.pop %v2547
        %v2559 = vtanh.pop %v2549
        %v2560 = vtanh.pop %v2551
        %v2561 = vpack.c.bf16 %v2555, %v2553
        %v2562 = vpack.c.bf16 %v2556, %v2554
        %v2563 = vpack.c.bf16 %v2559, %v2557
        %v2564 = vpack.c.bf16 %v2560, %v2558
        %v2565 = vld [vmem:[%s713] sm:$0xf]
        %v2566 = vld [vmem:[%s713 + $0x4] sm:$0xf]
        %v2567 = vld [vmem:[%s713 + $0x8] sm:$0xf]
        %v2568 = vld [vmem:[%s713 + $0xc] sm:$0xf]
        %v2569 = vld [vmem:[%s713 + $0x10] sm:$0xf]
        %v2570 = vld [vmem:[%s713 + $0x14] sm:$0xf]
        %v2571 = vld [vmem:[%s713 + $0x18] sm:$0xf]
        %v2572 = vld [vmem:[%s713 + $0x1c] sm:$0xf]
        %v2573 = vld [vmem:[%s713 + $0x20] sm:$0xf]
        %v2574 = vld [vmem:[%s713 + $0x24] sm:$0xf]
        %v2575 = vld [vmem:[%s713 + $0x28] sm:$0xf]
        %v2576 = vld [vmem:[%s713 + $0x2c] sm:$0xf]
        %v2577 = vld [vmem:[%s713 + $0x30] sm:$0xf]
        %v2578 = vld [vmem:[%s713 + $0x34] sm:$0xf]
        %v2579 = vld [vmem:[%s713 + $0x38] sm:$0xf]
        %v2580 = vld [vmem:[%s713 + $0x3c] sm:$0xf]
        %v2581 = vld [vmem:[%s713 + $0x40] sm:$0xf]
        %v2582 = vld [vmem:[%s713 + $0x44] sm:$0xf]
        %v2583 = vld [vmem:[%s713 + $0x48] sm:$0xf]
        %v2584 = vld [vmem:[%s713 + $0x4c] sm:$0xf]
        %v2585 = vld [vmem:[%s713 + $0x50] sm:$0xf]
        %v2586 = vld [vmem:[%s713 + $0x54] sm:$0xf]
        %v2587 = vld [vmem:[%s713 + $0x58] sm:$0xf]
        %v2588 = vld [vmem:[%s713 + $0x5c] sm:$0xf]
        %v2589 = vld [vmem:[%s713 + $0x60] sm:$0xf]
        %v2590 = vld [vmem:[%s713 + $0x64] sm:$0xf]
        %v2591 = vld [vmem:[%s713 + $0x68] sm:$0xf]
        %v2592 = vld [vmem:[%s713 + $0x6c] sm:$0xf]
        %v2593 = vld [vmem:[%s713 + $0x70] sm:$0xf]
        %v2594 = vld [vmem:[%s713 + $0x74] sm:$0xf]
        %v2595 = vld [vmem:[%s713 + $0x78] sm:$0xf]
        %v2596 = vld [vmem:[%s713 + $0x7c] sm:$0xf]
        %v2597 = vld [vmem:[%s818] sm:$0x1]
        %v2599 = vlaneseq
        %v2600 = vshrl.u32 %v2599, 7
        %v2601 = vsub.s32 0, %v2600
        %v2602 = vrot.slane %v2597, %v2601
        %v2636 = vunpack.c.l.b16 %v2565
        %v2637 = vunpack.c.l.b16 %v2566
        %v2638 = vunpack.c.l.b16 %v2567
        %v2639 = vunpack.c.l.b16 %v2568
        %v2640 = vunpack.c.l.b16 %v2569
        %v2641 = vunpack.c.l.b16 %v2570
        %v2642 = vunpack.c.l.b16 %v2571
        %v2643 = vunpack.c.l.b16 %v2572
        %v2644 = vunpack.c.l.b16 %v2573
        %v2645 = vunpack.c.l.b16 %v2574
        %v2646 = vunpack.c.l.b16 %v2575
        %v2647 = vunpack.c.l.b16 %v2576
        %v2648 = vunpack.c.l.b16 %v2577
        %v2649 = vunpack.c.l.b16 %v2578
        %v2650 = vunpack.c.l.b16 %v2579
        %v2651 = vunpack.c.l.b16 %v2580
        %v2652 = vunpack.c.l.b16 %v2581
        %v2653 = vunpack.c.l.b16 %v2582
        %v2654 = vunpack.c.l.b16 %v2583
        %v2655 = vunpack.c.l.b16 %v2584
        %v2656 = vunpack.c.l.b16 %v2585
        %v2657 = vunpack.c.l.b16 %v2586
        %v2658 = vunpack.c.l.b16 %v2587
        %v2659 = vunpack.c.l.b16 %v2588
        %v2660 = vunpack.c.l.b16 %v2589
        %v2661 = vunpack.c.l.b16 %v2590
        %v2662 = vunpack.c.l.b16 %v2591
        %v2663 = vunpack.c.l.b16 %v2592
        %v2664 = vunpack.c.l.b16 %v2593
        %v2665 = vunpack.c.l.b16 %v2594
        %v2666 = vunpack.c.l.b16 %v2595
        %v2667 = vunpack.c.l.b16 %v2596
        %v2668 = vpack.c.b16 %v2637, %v2636
        %v2669 = vpack.c.b16 %v2639, %v2638
        %v2670 = vpack.c.b16 %v2641, %v2640
        %v2671 = vpack.c.b16 %v2643, %v2642
        %v2672 = vpack.c.b16 %v2645, %v2644
        %v2673 = vpack.c.b16 %v2647, %v2646
        %v2674 = vpack.c.b16 %v2649, %v2648
        %v2675 = vpack.c.b16 %v2651, %v2650
        %v2676 = vpack.c.b16 %v2653, %v2652
        %v2677 = vpack.c.b16 %v2655, %v2654
        %v2678 = vpack.c.b16 %v2657, %v2656
        %v2679 = vpack.c.b16 %v2659, %v2658
        %v2680 = vpack.c.b16 %v2661, %v2660
        %v2681 = vpack.c.b16 %v2663, %v2662
        %v2682 = vpack.c.b16 %v2665, %v2664
        %v2683 = vpack.c.b16 %v2667, %v2666
        %2700 = vmatprep.subr.bf16.mxu0 0
        %2701 = vmatpush1.bf16.msra.mxu0 %v2675
        %2702 = vmatprep.subr.bf16.mxu0 0
        %2703 = vmatpush1.bf16.msra.mxu0 %v2674
        %2704 = vmatprep.subr.bf16.mxu0 0
        %2705 = vmatpush1.bf16.msra.mxu0 %v2673
        %2706 = vmatprep.subr.bf16.mxu0 0
        %2707 = vmatpush1.bf16.msra.mxu0 %v2672
        %2708 = vmatprep.subr.bf16.mxu0 0
        %2709 = vmatpush1.bf16.msra.mxu0 %v2671
        %2710 = vmatprep.subr.bf16.mxu0 0
        %2711 = vmatpush1.bf16.msra.mxu0 %v2670
        %2712 = vmatprep.subr.bf16.mxu0 0
        %2713 = vmatpush1.bf16.msra.mxu0 %v2669
        %2714 = vmatprep.subr.bf16.mxu0 0
        %2715 = vmatpush1.bf16.msra.mxu0 %v2668
        %2716 = vmatprep.subr.bf16.mxu0 0
        %2717 = vmatpush2.bf16.msra.mxu0 %v2683
        %2718 = vmatprep.subr.bf16.mxu0 0
        %2719 = vmatpush2.bf16.msra.mxu0 %v2682
        %2720 = vmatprep.subr.bf16.mxu0 0
        %2721 = vmatpush2.bf16.msra.mxu0 %v2681
        %2722 = vmatprep.subr.bf16.mxu0 0
        %2723 = vmatpush2.bf16.msra.mxu0 %v2680
        %2724 = vmatprep.subr.bf16.mxu0 0
        %2725 = vmatpush2.bf16.msra.mxu0 %v2679
        %2726 = vmatprep.subr.bf16.mxu0 0
        %2727 = vmatpush2.bf16.msra.mxu0 %v2678
        %2728 = vmatprep.subr.bf16.mxu0 0
        %2729 = vmatpush2.bf16.msra.mxu0 %v2677
        %2730 = vmatprep.subr.bf16.mxu0 0
        %2731 = vmatpush2.bf16.msra.mxu0 %v2676
        %2732 = vmatprep.mubr.bf16.mxu0 %v2562
        %2733 = vmatmul.mubr.bf16.gmra.mxu0 %v2561
        %v2734 = vpop.f32.mrf.mxu0
        %v2735 = vadd.f32 %v2602, %v2734
        %v2736 = vpop.f32.mrf.mxu0
        %v2737 = vpop.f32.mrf.mxu0
        %v2738 = vadd.f32 %v2602, %v2737
        %v2739 = vpop.f32.mrf.mxu0
        %2740 = vmatprep.mubr.bf16.mxu0 %v2564
        %2741 = vmatmul.mubr.bf16.gmra.mxu0 %v2563
        %v2742 = vpop.f32.mrf.mxu0
        %v2743 = vadd.f32 %v2602, %v2742
        %v2744 = vpop.f32.mrf.mxu0
        %v2745 = vpop.f32.mrf.mxu0
        %v2746 = vadd.f32 %v2602, %v2745
        %v2747 = vpop.f32.mrf.mxu0
        %2748 = vdwg.mxu0
        %v2749 = vadd.f32 %v2320, %v2735
        %v2750 = vadd.f32 %v2321, %v2738
        %v2751 = vadd.f32 %v2322, %v2743
        %v2752 = vadd.f32 %v2323, %v2746
        %2753 = vst [vmem:[#allocation2] sm:$0xff] %v2749
        %2754 = vst [vmem:[#allocation2 + $0x8] sm:$0xff] %v2750
        %2755 = vst [vmem:[#allocation2 + $0x10] sm:$0xff] %v2751
        %2756 = vst [vmem:[#allocation2 + $0x18] sm:$0xff] %v2752
        %p2757 = scmp.eq.s32.totalorder %s43, 1
        // Predicated region
        $region117: #{tpu_custom_call.1} parent=83 // pred_check
          %p2758 = pneg %p2757
        $region118: #{tpu_custom_call.1} parent=83 // pred_check_branch
          %2760 = sbr.rel (%p2758) target = $region120
        $region119: #{tpu_custom_call.1} parent=83 // pred_region
          %v2761 = vld [vmem:[%s12] sm:$0x1]
          %v2762 = vld [vmem:[%s13] sm:$0x1]
          %2763 = vadd.xlane.f32.xlu0 %v2749
          %v2764 = vpop.xlane.xlu0 %2763
          %2765 = vadd.xlane.f32.xlu0 %v2750
          %v2766 = vpop.xlane.xlu0 %2765
          %2767 = vadd.xlane.f32.xlu0 %v2751
          %v2768 = vpop.xlane.xlu0 %2767
          %2769 = vadd.xlane.f32.xlu0 %v2752
          %v2770 = vpop.xlane.xlu0 %2769
          %v2771 = vmul.f32 %v2764, %v847
          %v2772 = vmul.f32 %v2766, %v847
          %v2773 = vmul.f32 %v2768, %v847
          %v2774 = vmul.f32 %v2770, %v847
          %v2775 = vsub.f32 %v2749, %v2771
          %v2776 = vsub.f32 %v2750, %v2772
          %v2777 = vsub.f32 %v2751, %v2773
          %v2778 = vsub.f32 %v2752, %v2774
          %v2779 = vmul.f32 %v2775, %v2775
          %v2780 = vmul.f32 %v2776, %v2776
          %v2781 = vmul.f32 %v2777, %v2777
          %v2782 = vmul.f32 %v2778, %v2778
          %2783 = vadd.xlane.f32.xlu0 %v2779
          %v2784 = vpop.xlane.xlu0 %2783
          %2785 = vadd.xlane.f32.xlu0 %v2780
          %v2786 = vpop.xlane.xlu0 %2785
          %2787 = vadd.xlane.f32.xlu0 %v2781
          %v2788 = vpop.xlane.xlu0 %2787
          %2789 = vadd.xlane.f32.xlu0 %v2782
          %v2790 = vpop.xlane.xlu0 %2789
          %v2791 = vmul.f32 %v2784, %v847
          %v2792 = vmul.f32 %v2786, %v847
          %v2793 = vmul.f32 %v2788, %v847
          %v2794 = vmul.f32 %v2790, %v847
          %v2795 = vadd.f32 %v2791, 1e-05
          %v2796 = vadd.f32 %v2792, 1e-05
          %v2797 = vadd.f32 %v2793, 1e-05
          %v2798 = vadd.f32 %v2794, 1e-05
          %v2799 = vrsqrt.pop %v2795
          %v2800 = vrsqrt.pop %v2796
          %v2801 = vrsqrt.pop %v2797
          %v2802 = vrsqrt.pop %v2798
          %v2803 = vmul.f32 %v2775, %v2799
          %v2804 = vmul.f32 %v2776, %v2800
          %v2805 = vmul.f32 %v2777, %v2801
          %v2806 = vmul.f32 %v2778, %v2802
          %v2808 = vlaneseq
          %v2809 = vshrl.u32 %v2808, 7
          %v2810 = vsub.s32 0, %v2809
          %v2811 = vrot.slane %v2761, %v2810
          %v2813 = vmul.f32 %v2803, %v2811
          %v2814 = vmul.f32 %v2804, %v2811
          %v2815 = vmul.f32 %v2805, %v2811
          %v2816 = vmul.f32 %v2806, %v2811
          %v2818 = vlaneseq
          %v2819 = vshrl.u32 %v2818, 7
          %v2820 = vsub.s32 0, %v2819
          %v2821 = vrot.slane %v2762, %v2820
          %v2823 = vadd.f32 %v2813, %v2821
          %v2824 = vadd.f32 %v2814, %v2821
          %v2825 = vadd.f32 %v2815, %v2821
          %v2826 = vadd.f32 %v2816, %v2821
          %v2827 = vpack.c.bf16 %v2824, %v2823
          %v2828 = vpack.c.bf16 %v2826, %v2825
          %v2829 = vld [vmem:[#allocation14] sm:$0xf]
          %v2830 = vld [vmem:[#allocation14 + $0x4] sm:$0xf]
          %v2831 = vld [vmem:[#allocation14 + $0x8] sm:$0xf]
          %v2832 = vld [vmem:[#allocation14 + $0xc] sm:$0xf]
          %v2833 = vld [vmem:[#allocation14 + $0x10] sm:$0xf]
          %v2834 = vld [vmem:[#allocation14 + $0x14] sm:$0xf]
          %v2835 = vld [vmem:[#allocation14 + $0x18] sm:$0xf]
          %v2836 = vld [vmem:[#allocation14 + $0x1c] sm:$0xf]
          %v2837 = vld [vmem:[#allocation14 + $0x20] sm:$0xf]
          %v2838 = vld [vmem:[#allocation14 + $0x24] sm:$0xf]
          %v2839 = vld [vmem:[#allocation14 + $0x28] sm:$0xf]
          %v2840 = vld [vmem:[#allocation14 + $0x2c] sm:$0xf]
          %v2841 = vld [vmem:[#allocation14 + $0x30] sm:$0xf]
          %v2842 = vld [vmem:[#allocation14 + $0x34] sm:$0xf]
          %v2843 = vld [vmem:[#allocation14 + $0x38] sm:$0xf]
          %v2844 = vld [vmem:[#allocation14 + $0x3c] sm:$0xf]
          %v2845 = vld [vmem:[%s15] sm:$0x1]
          %v2847 = vlaneseq
          %v2848 = vshrl.u32 %v2847, 7
          %v2849 = vsub.s32 0, %v2848
          %v2850 = vrot.slane %v2845, %v2849
          %v2868 = vunpack.c.l.b16 %v2829
          %v2869 = vunpack.c.l.b16 %v2830
          %v2870 = vunpack.c.l.b16 %v2831
          %v2871 = vunpack.c.l.b16 %v2832
          %v2872 = vunpack.c.l.b16 %v2833
          %v2873 = vunpack.c.l.b16 %v2834
          %v2874 = vunpack.c.l.b16 %v2835
          %v2875 = vunpack.c.l.b16 %v2836
          %v2876 = vunpack.c.l.b16 %v2837
          %v2877 = vunpack.c.l.b16 %v2838
          %v2878 = vunpack.c.l.b16 %v2839
          %v2879 = vunpack.c.l.b16 %v2840
          %v2880 = vunpack.c.l.b16 %v2841
          %v2881 = vunpack.c.l.b16 %v2842
          %v2882 = vunpack.c.l.b16 %v2843
          %v2883 = vunpack.c.l.b16 %v2844
          %v2884 = vpack.c.b16 %v2869, %v2868
          %v2885 = vpack.c.b16 %v2871, %v2870
          %v2886 = vpack.c.b16 %v2873, %v2872
          %v2887 = vpack.c.b16 %v2875, %v2874
          %v2888 = vpack.c.b16 %v2877, %v2876
          %v2889 = vpack.c.b16 %v2879, %v2878
          %v2890 = vpack.c.b16 %v2881, %v2880
          %v2891 = vpack.c.b16 %v2883, %v2882
          %2900 = vmatprep.subr.bf16.mxu0 0
          %2901 = vmatpush1.bf16.msra.mxu0 %v2891
          %2902 = vmatprep.subr.bf16.mxu0 0
          %2903 = vmatpush1.bf16.msra.mxu0 %v2890
          %2904 = vmatprep.subr.bf16.mxu0 0
          %2905 = vmatpush1.bf16.msra.mxu0 %v2889
          %2906 = vmatprep.subr.bf16.mxu0 0
          %2907 = vmatpush1.bf16.msra.mxu0 %v2888
          %2908 = vmatprep.subr.bf16.mxu0 0
          %2909 = vmatpush1.bf16.msra.mxu0 %v2887
          %2910 = vmatprep.subr.bf16.mxu0 0
          %2911 = vmatpush1.bf16.msra.mxu0 %v2886
          %2912 = vmatprep.subr.bf16.mxu0 0
          %2913 = vmatpush1.bf16.msra.mxu0 %v2885
          %2914 = vmatprep.subr.bf16.mxu0 0
          %2915 = vmatpush1.bf16.msra.mxu0 %v2884
          %2916 = vmatprep.subr.bf16.mxu0 0
          %2917 = vmatpush2.bf16.msra.mxu0 0
          %2918 = vmatprep.subr.bf16.mxu0 0
          %2919 = vmatpush2.bf16.msra.mxu0 0
          %2920 = vmatprep.subr.bf16.mxu0 0
          %2921 = vmatpush2.bf16.msra.mxu0 0
          %2922 = vmatprep.subr.bf16.mxu0 0
          %2923 = vmatpush2.bf16.msra.mxu0 0
          %2924 = vmatprep.subr.bf16.mxu0 0
          %2925 = vmatpush2.bf16.msra.mxu0 0
          %2926 = vmatprep.subr.bf16.mxu0 0
          %2927 = vmatpush2.bf16.msra.mxu0 0
          %2928 = vmatprep.subr.bf16.mxu0 0
          %2929 = vmatpush2.bf16.msra.mxu0 0
          %2930 = vmatprep.subr.bf16.mxu0 0
          %2931 = vmatpush2.bf16.msra.mxu0 0
          %2932 = vmatprep.mubr.bf16.mxu0 0
          %2933 = vmatmul.mubr.bf16.gmra.mxu0 %v2827
          %v2934 = vpop.f32.mrf.mxu0
          %v2935 = vadd.f32 %v2850, %v2934
          %v2936 = vpop.f32.mrf.mxu0
          %v2937 = vpop.f32.mrf.mxu0
          %v2938 = vadd.f32 %v2850, %v2937
          %v2939 = vpop.f32.mrf.mxu0
          %2940 = vmatprep.mubr.bf16.mxu0 0
          %2941 = vmatmul.mubr.bf16.gmra.mxu0 %v2828
          %v2942 = vpop.f32.mrf.mxu0
          %v2943 = vadd.f32 %v2850, %v2942
          %v2944 = vpop.f32.mrf.mxu0
          %v2945 = vpop.f32.mrf.mxu0
          %v2946 = vadd.f32 %v2850, %v2945
          %v2947 = vpop.f32.mrf.mxu0
          %2948 = vdwg.mxu0
          %2949 = vst [vmem:[#allocation15] sm:$0xff] %v2935
          %2950 = vst [vmem:[#allocation15 + $0x8] sm:$0xff] %v2938
          %2951 = vst [vmem:[#allocation15 + $0x10] sm:$0xff] %v2943
          %2952 = vst [vmem:[#allocation15 + $0x18] sm:$0xff] %v2946
        $region120: #{tpu_custom_call.1} parent=83 // pred_fallthru
          _
        // Predicated region
        $region121: #{tpu_custom_call.1} parent=83 // pred_check
          %p2953 = pneg %p464
        $region122: #{tpu_custom_call.1} parent=83 // pred_check_branch
          %2955 = sbr.rel (%p2953) target = $region124
        $region123: #{tpu_custom_call.1} parent=83 // pred_region
          %s2956 = smul.u32 2, %s42
          %s2958 = ssub.s32 512, 512
          %2959 = vsyncadd [#allocation5], %s2958
          %s2960 = smul.addr %s2956, 2
          %s2961 = smul.addr %s2960, 128
          %s2962 = scalar_lea.hbm %s16, %s2961
          %s2963 = sshll.u32 [#allocation15], 4
          %s2964 = int_to_ptr.vmem [resolvable:$true] %s2963
          %2969 = dma.vmem_to_hbm [thread:$0]  %s2964, 512, %s2962, [#allocation5], 128, 128, 8
        $region124: #{tpu_custom_call.1} parent=83 // pred_fallthru
          _
        // Predicated region
        $region125: #{tpu_custom_call.1} parent=83 // pred_check
          %p2970 = pneg %p464
        $region126: #{tpu_custom_call.1} parent=83 // pred_check_branch
          %2972 = sbr.rel (%p2970) target = $region128
        $region127: #{tpu_custom_call.1} parent=83 // pred_region
          %2973 = dma.done [#allocation5], 512
        $region128: #{tpu_custom_call.1} parent=83 // pred_fallthru
          _
      $region84: #{tpu_custom_call.1} parent=5 // pred_fallthru
        _
      %p2974 = scmp.le.s32.totalorder 2, %s33
      // Predicated region
      $region129: #{tpu_custom_call.1} parent=5 // pred_check
        %p2975 = pneg %p2974
      $region130: #{tpu_custom_call.1} parent=5 // pred_check_branch
        %2977 = sbr.rel (%p2975) target = $region132
      $region131: #{tpu_custom_call.1} parent=5 // pred_region
        %s2978 = ssub.s32 %s33, 2
      $region132: #{tpu_custom_call.1} parent=5 // pred_fallthru
        _
    $region6: #{tpu_custom_call.1} parent=1 // loop_footer
      %s37 = sadd.s32 1, %s33
    $region7: #{tpu_custom_call.1} parent=1 // loop_footer_branch
      %32 = sbr.rel target = $region3
    $region8: #{tpu_custom_call.1} parent=1 // loop_exit
      _
    %2979 = vsyncpa [#allocation4], 1
    %s2980 = scalar_lea.sflag [#allocation4], 1
    %2981 = vsyncpa %s2980, 1
    %2982 = vsyncpa [#allocation7], 1
    %s2983 = scalar_lea.sflag [#allocation7], 1
    %2984 = vsyncpa %s2983, 1
    %2985 = vsyncpa [#allocation10], 1
    %s2986 = scalar_lea.sflag [#allocation10], 1
    %2987 = vsyncpa %s2986, 1
    %2988 = vsyncpa [#allocation13], 1
    %s2989 = scalar_lea.sflag [#allocation13], 1
    %2990 = vsyncpa %s2989, 1
    %2991 = vsyncpa [#allocation5], 1
    %s2992 = scalar_lea.sflag [#allocation5], 1
    %2993 = vsyncpa %s2992, 1

</llo_original>
